<compile_context>
chip_gen: v7x
topology: tpu7x:2x2x1
jax: 0.10.0
libtpu: 0.0.40
codegen_flags: <defaults>
</compile_context>

<pallas_src>
import jax
import jax.numpy as jnp
from jax.experimental import pallas as pl
from jax.experimental.pallas import tpu as pltpu


def _round_up(x, m):
    return ((x + m - 1) // m) * m


# ----------------------------------------------------------------------------
# Fused Pallas kernel: full 4-layer InvoiceGCN forward.
# ----------------------------------------------------------------------------
def invoice_gcn_kernel(x0_ref, eattr_ref, g_ref, s_ref, invdeg_ref,
                       w1_ref, b1_ref, r1_ref, c1_ref,
                       w2_ref, b2_ref, r2_ref, c2_ref,
                       w3_ref, b3_ref, r3_ref, c3_ref,
                       w4_ref, b4_ref, r4_ref, c4_ref,
                       out_ref):
    f32 = jnp.float32
    bf16 = jnp.bfloat16

    eattr = eattr_ref[...]            # [E, EF]  f32 (VPU side)
    g = g_ref[...]                    # [E, NP]  bf16 one-hot gather (exact)
    s = s_ref[...]                    # [NP, E]  bf16 one-hot scatter (exact)
    inv_deg = invdeg_ref[...]         # [NP, 1]  f32
    num_ef = eattr.shape[1]

    def nnconv(x, w_ref, b_ref, r_ref, c_ref, relu):
        x_b = x.astype(bf16)                                        # [NP, in_p]
        # Gather of source-node features as an MXU matmul with one-hot G.
        x_src = jnp.dot(g, x_b, preferred_element_type=f32)         # [E, in_p] f32
        x_src_b = x_src.astype(bf16)
        # z[e, f*in_p + i] = eattr[e, f] * x_src[e, i]
        # Built via lane-axis concat (no 3-D intermediate, no reshape);
        # multiply in f32, cast to bf16 only for the MXU operand.
        z = jnp.concatenate(
            [(x_src * eattr[:, f:f + 1]).astype(bf16) for f in range(num_ef)],
            axis=-1)                                                 # [E, EF*in_p]
        # Edge-conditioned message folded into two MXU matmuls.
        msg = (jnp.dot(z, w_ref[...], preferred_element_type=f32)
               + jnp.dot(x_src_b, b_ref[...], preferred_element_type=f32))
        # Mean aggregation: one-hot scatter on the MXU, 1/deg scaling in f32.
        agg = jnp.dot(s, msg.astype(bf16),
                      preferred_element_type=f32) * inv_deg          # [NP, out_p]
        out = (agg
               + jnp.dot(x_b, r_ref[...], preferred_element_type=f32)
               + c_ref[...])
        if relu:
            out = jnp.maximum(out, 0.0)
        return out

    h = nnconv(x0_ref[...], w1_ref, b1_ref, r1_ref, c1_ref, True)
    # Dropout(p=0.2): identity at inference.
    h = nnconv(h, w2_ref, b2_ref, r2_ref, c2_ref, True)
    h = nnconv(h, w3_ref, b3_ref, r3_ref, c3_ref, True)
    out_ref[...] = nnconv(h, w4_ref, b4_ref, r4_ref, c4_ref, False)


# ----------------------------------------------------------------------------
# Host-side weight preparation (permute + zero-pad + bf16 cast, done once).
# ----------------------------------------------------------------------------
def _prep_nnconv_weights(raw, edge_feats, in_l, out_l, in_p, out_p):
    # W3[f, i, o] = nn_w[f, i*out + o]  (matches torch .view(-1, in, out)).
    w3 = raw["nn_w"].reshape(edge_feats, in_l, out_l)
    w_pad = jnp.zeros((edge_feats, in_p, out_p), jnp.float32)
    w_pad = w_pad.at[:, :in_l, :out_l].set(w3)
    # W_perm[(f*in_p + i), o] = W3[f, i, o]  -> matches z column order.
    w_perm = w_pad.reshape(edge_feats * in_p, out_p).astype(jnp.bfloat16)

    b_pad = jnp.zeros((in_p, out_p), jnp.float32)
    b_pad = b_pad.at[:in_l, :out_l].set(raw["nn_b"].reshape(in_l, out_l))
    b_perm = b_pad.astype(jnp.bfloat16)

    r_pad = jnp.zeros((in_p, out_p), jnp.float32)
    r_pad = r_pad.at[:in_l, :out_l].set(raw["root"]).astype(jnp.bfloat16)

    c_pad = jnp.zeros((1, out_p), jnp.float32)
    c_pad = c_pad.at[:, :out_l].set(raw["bias"].reshape(1, out_l))  # f32 bias
    return w_perm, b_perm, r_pad, c_pad


def _build_graph_mats(edge_index, n_nodes, n_pad, e_pad):
    src, dst = edge_index[0], edge_index[1]
    e = src.shape[0]
    node_ids = jnp.arange(n_pad)
    g = (src[:, None] == node_ids[None, :]).astype(jnp.float32)      # [E, NP]
    s = (dst[None, :] == node_ids[:, None]).astype(jnp.float32)      # [NP, E]
    deg = s.sum(axis=1, keepdims=True)                               # [NP, 1]
    inv_deg = jnp.where(deg > 0.0, 1.0 / jnp.maximum(deg, 1.0), 0.0)
    g = jnp.pad(g, ((0, e_pad - e), (0, 0))).astype(jnp.bfloat16)
    s = jnp.pad(s, ((0, 0), (0, e_pad - e))).astype(jnp.bfloat16)
    return g, s, inv_deg


def invoice_gcn_forward(x, edge_index, edge_attr, params,
                        in_feats, hidden_feats, out_feats):
    n = x.shape[0]
    e, edge_feats = edge_attr.shape
    n_pad = _round_up(n, 8)
    e_pad = _round_up(e, 8)
    hid_p = _round_up(hidden_feats, 128)   # lane-dense hidden activations
    out_p = _round_up(out_feats, 128)      # lane-dense HBM output store

    g, s, inv_deg = _build_graph_mats(edge_index, n, n_pad, e_pad)
    x0 = jnp.pad(x, ((0, n_pad - n), (0, 0)))
    ea = jnp.pad(edge_attr, ((0, e_pad - e), (0, 0)))

    layer_dims = [
        (in_feats, hidden_feats, in_feats, hid_p),
        (hidden_feats, hidden_feats, hid_p, hid_p),
        (hidden_feats, hidden_feats, hid_p, hid_p),
        (hidden_feats, out_feats, hid_p, out_p),
    ]
    flat_w = []
    for name, (in_l, out_l, in_p, op) in zip(
            ("conv1", "conv2", "conv3", "conv4"), layer_dims):
        flat_w.extend(_prep_nnconv_weights(params[name], edge_feats,
                                           in_l, out_l, in_p, op))

    n_inputs = 5 + len(flat_w)
    out_pad = pl.pallas_call(
        invoice_gcn_kernel,
        out_shape=jax.ShapeDtypeStruct((n_pad, out_p), jnp.float32),
        in_specs=[pl.BlockSpec(memory_space=pltpu.MemorySpace.VMEM)] * n_inputs,
        out_specs=pl.BlockSpec(memory_space=pltpu.MemorySpace.VMEM),
        compiler_params=pltpu.CompilerParams(
            vmem_limit_bytes=32 * 1024 * 1024),
    )(x0, ea, g, s, inv_deg, *flat_w)
    return out_pad[:n, :out_feats]


# ----------------------------------------------------------------------------
# Synthetic parameters + pure-JAX reference (for a loose sanity check).
# ----------------------------------------------------------------------------
def make_nnconv_params(key, edge_feats, in_feats, out_feats):
    k1, k2, k3, k4 = jax.random.split(key, 4)
    scale = 0.1
    return {
        "nn_w": scale * jax.random.normal(k1, (edge_feats, in_feats * out_feats),
                                          jnp.float32),
        "nn_b": scale * jax.random.normal(k2, (1, in_feats * out_feats),
                                          jnp.float32),
        "root": scale * jax.random.normal(k3, (in_feats, out_feats), jnp.float32),
        "bias": scale * jax.random.normal(k4, (1, out_feats), jnp.float32),
    }


def invoice_gcn_reference(x, edge_index, edge_attr, params,
                          in_feats, hidden_feats, out_feats):
    src, dst = edge_index[0], edge_index[1]

    def nnconv(h, p, in_f, out_f, relu):
        n = h.shape[0]
        w_flat = jnp.dot(edge_attr, p["nn_w"]) + p["nn_b"]          # [E, in*out]
        w3 = w_flat.reshape(-1, in_f, out_f)
        msg = jnp.einsum("ei,eio->eo", h[src], w3)                  # [E, out]
        summed = jnp.zeros((n, out_f), jnp.float32).at[dst].add(msg)
        cnt = jnp.zeros((n,), jnp.float32).at[dst].add(1.0)
        agg = summed / jnp.maximum(cnt, 1.0)[:, None]
        o = agg + h @ p["root"] + p["bias"]
        return jnp.maximum(o, 0.0) if relu else o

    h = nnconv(x, params["conv1"], in_feats, hidden_feats, True)
    h = nnconv(h, params["conv2"], hidden_feats, hidden_feats, True)
    h = nnconv(h, params["conv3"], hidden_feats, hidden_feats, True)
    return nnconv(h, params["conv4"], hidden_feats, out_feats, False)


if __name__ == "__main__":
    # Small, deterministic problem sizes.
    N = 12            # number of graph nodes (text boxes on an invoice)
    E = 24            # number of edges
    IN_FEATS = 16
    EDGE_FEATS = 8
    HIDDEN_FEATS = 32
    OUT_FEATS = 5

    root_key = jax.random.PRNGKey(0)
    kx, ke, ki, kp = jax.random.split(root_key, 4)

    x = jax.random.normal(kx, (N, IN_FEATS), jnp.float32)
    edge_attr = jax.random.normal(ke, (E, EDGE_FEATS), jnp.float32)
    edge_index = jax.random.randint(ki, (2, E), 0, N, jnp.int32)

    kp1, kp2, kp3, kp4 = jax.random.split(kp, 4)
    params = {
        "conv1": make_nnconv_params(kp1, EDGE_FEATS, IN_FEATS, HIDDEN_FEATS),
        "conv2": make_nnconv_params(kp2, EDGE_FEATS, HIDDEN_FEATS, HIDDEN_FEATS),
        "conv3": make_nnconv_params(kp3, EDGE_FEATS, HIDDEN_FEATS, HIDDEN_FEATS),
        "conv4": make_nnconv_params(kp4, EDGE_FEATS, HIDDEN_FEATS, OUT_FEATS),
    }

    out = invoice_gcn_forward(x, edge_index, edge_attr, params,
                              IN_FEATS, HIDDEN_FEATS, OUT_FEATS)
    out = jax.block_until_ready(out)
    assert out.shape == (N, OUT_FEATS)
    assert bool(jnp.all(jnp.isfinite(out)))

    # Loose sanity check vs an f32 pure-JAX reference (kernel uses bf16 MXU
    # operands with f32 accumulation, so allow a generous tolerance).
    ref = jax.block_until_ready(
        invoice_gcn_reference(x, edge_index, edge_attr, params,
                              IN_FEATS, HIDDEN_FEATS, OUT_FEATS))
    max_err = float(jnp.max(jnp.abs(out - ref)))
    tol = 0.1 + 0.1 * float(jnp.max(jnp.abs(ref)))
    assert max_err <= tol, f"max abs err {max_err} > tol {tol}"

    print("KERNEL_OK")
</pallas_src>

<mosaic_0001>
module attributes {stable_mosaic.version = 11 : i64} {
  func.func @invoice_gcn_kernel(%arg0: memref<16x16xf32, #tpu.memory_space<vmem>>, %arg1: memref<24x8xf32, #tpu.memory_space<vmem>>, %arg2: memref<24x16xbf16, #tpu.memory_space<vmem>>, %arg3: memref<16x24xbf16, #tpu.memory_space<vmem>>, %arg4: memref<16x1xf32, #tpu.memory_space<vmem>>, %arg5: memref<128x128xbf16, #tpu.memory_space<vmem>>, %arg6: memref<16x128xbf16, #tpu.memory_space<vmem>>, %arg7: memref<16x128xbf16, #tpu.memory_space<vmem>>, %arg8: memref<1x128xf32, #tpu.memory_space<vmem>>, %arg9: memref<1024x128xbf16, #tpu.memory_space<vmem>>, %arg10: memref<128x128xbf16, #tpu.memory_space<vmem>>, %arg11: memref<128x128xbf16, #tpu.memory_space<vmem>>, %arg12: memref<1x128xf32, #tpu.memory_space<vmem>>, %arg13: memref<1024x128xbf16, #tpu.memory_space<vmem>>, %arg14: memref<128x128xbf16, #tpu.memory_space<vmem>>, %arg15: memref<128x128xbf16, #tpu.memory_space<vmem>>, %arg16: memref<1x128xf32, #tpu.memory_space<vmem>>, %arg17: memref<1024x128xbf16, #tpu.memory_space<vmem>>, %arg18: memref<128x128xbf16, #tpu.memory_space<vmem>>, %arg19: memref<128x128xbf16, #tpu.memory_space<vmem>>, %arg20: memref<1x128xf32, #tpu.memory_space<vmem>>, %arg21: memref<16x128xf32, #tpu.memory_space<vmem>>) attributes {dimension_semantics = [], scalar_prefetch = 0 : i64, scratch_operands = 0 : i64, tpu.core_type = #tpu.core_type<tc>} {
    %c0 = arith.constant 0 : index
    %c0_0 = arith.constant 0 : index
    %0 = vector.load %arg1[%c0, %c0_0] : memref<24x8xf32, #tpu.memory_space<vmem>>, vector<24x8xf32>
    %c0_1 = arith.constant 0 : index
    %c0_2 = arith.constant 0 : index
    %1 = vector.load %arg2[%c0_1, %c0_2] : memref<24x16xbf16, #tpu.memory_space<vmem>>, vector<24x16xbf16>
    %c0_3 = arith.constant 0 : index
    %c0_4 = arith.constant 0 : index
    %2 = vector.load %arg3[%c0_3, %c0_4] : memref<16x24xbf16, #tpu.memory_space<vmem>>, vector<16x24xbf16>
    %c0_5 = arith.constant 0 : index
    %c0_6 = arith.constant 0 : index
    %3 = vector.load %arg4[%c0_5, %c0_6] : memref<16x1xf32, #tpu.memory_space<vmem>>, vector<16x1xf32>
    %c0_7 = arith.constant 0 : index
    %c0_8 = arith.constant 0 : index
    %4 = vector.load %arg0[%c0_7, %c0_8] : memref<16x16xf32, #tpu.memory_space<vmem>>, vector<16x16xf32>
    %5 = arith.truncf %4 : vector<16x16xf32> to vector<16x16xbf16>
    %cst = arith.constant dense<0.000000e+00> : vector<24x16xf32>
    %6 = tpu.matmul %1, %5, %cst {dimension_numbers = #tpu.dot_dimension_numbers<[1], [0], [0], [1], [0, 0, 1, 1], [], []>} : vector<24x16xbf16>, vector<16x16xbf16>, vector<24x16xf32> -> vector<24x16xf32>
    %7 = arith.truncf %6 : vector<24x16xf32> to vector<24x16xbf16>
    %8 = vector.extract_strided_slice %0 {offsets = [0, 0], sizes = [24, 1], strides = [1, 1]} : vector<24x8xf32> to vector<24x1xf32>
    %9 = vector.broadcast %8 : vector<24x1xf32> to vector<24x16xf32>
    %10 = arith.mulf %6, %9 : vector<24x16xf32>
    %11 = arith.truncf %10 : vector<24x16xf32> to vector<24x16xbf16>
    %12 = vector.extract_strided_slice %0 {offsets = [0, 1], sizes = [24, 1], strides = [1, 1]} : vector<24x8xf32> to vector<24x1xf32>
    %13 = vector.broadcast %12 : vector<24x1xf32> to vector<24x16xf32>
    %14 = arith.mulf %6, %13 : vector<24x16xf32>
    %15 = arith.truncf %14 : vector<24x16xf32> to vector<24x16xbf16>
    %16 = vector.extract_strided_slice %0 {offsets = [0, 2], sizes = [24, 1], strides = [1, 1]} : vector<24x8xf32> to vector<24x1xf32>
    %17 = vector.broadcast %16 : vector<24x1xf32> to vector<24x16xf32>
    %18 = arith.mulf %6, %17 : vector<24x16xf32>
    %19 = arith.truncf %18 : vector<24x16xf32> to vector<24x16xbf16>
    %20 = vector.extract_strided_slice %0 {offsets = [0, 3], sizes = [24, 1], strides = [1, 1]} : vector<24x8xf32> to vector<24x1xf32>
    %21 = vector.broadcast %20 : vector<24x1xf32> to vector<24x16xf32>
    %22 = arith.mulf %6, %21 : vector<24x16xf32>
    %23 = arith.truncf %22 : vector<24x16xf32> to vector<24x16xbf16>
    %24 = vector.extract_strided_slice %0 {offsets = [0, 4], sizes = [24, 1], strides = [1, 1]} : vector<24x8xf32> to vector<24x1xf32>
    %25 = vector.broadcast %24 : vector<24x1xf32> to vector<24x16xf32>
    %26 = arith.mulf %6, %25 : vector<24x16xf32>
    %27 = arith.truncf %26 : vector<24x16xf32> to vector<24x16xbf16>
    %28 = vector.extract_strided_slice %0 {offsets = [0, 5], sizes = [24, 1], strides = [1, 1]} : vector<24x8xf32> to vector<24x1xf32>
    %29 = vector.broadcast %28 : vector<24x1xf32> to vector<24x16xf32>
    %30 = arith.mulf %6, %29 : vector<24x16xf32>
    %31 = arith.truncf %30 : vector<24x16xf32> to vector<24x16xbf16>
    %32 = vector.extract_strided_slice %0 {offsets = [0, 6], sizes = [24, 1], strides = [1, 1]} : vector<24x8xf32> to vector<24x1xf32>
    %33 = vector.broadcast %32 : vector<24x1xf32> to vector<24x16xf32>
    %34 = arith.mulf %6, %33 : vector<24x16xf32>
    %35 = arith.truncf %34 : vector<24x16xf32> to vector<24x16xbf16>
    %36 = vector.extract_strided_slice %0 {offsets = [0, 7], sizes = [24, 1], strides = [1, 1]} : vector<24x8xf32> to vector<24x1xf32>
    %37 = vector.broadcast %36 : vector<24x1xf32> to vector<24x16xf32>
    %38 = arith.mulf %6, %37 : vector<24x16xf32>
    %39 = arith.truncf %38 : vector<24x16xf32> to vector<24x16xbf16>
    %40 = tpu.concatenate %11, %15, %19, %23, %27, %31, %35, %39 in 1 : vector<24x16xbf16>, vector<24x16xbf16>, vector<24x16xbf16>, vector<24x16xbf16>, vector<24x16xbf16>, vector<24x16xbf16>, vector<24x16xbf16>, vector<24x16xbf16> -> vector<24x128xbf16>
    %c0_9 = arith.constant 0 : index
    %c0_10 = arith.constant 0 : index
    %41 = vector.load %arg5[%c0_9, %c0_10] : memref<128x128xbf16, #tpu.memory_space<vmem>>, vector<128x128xbf16>
    %cst_11 = arith.constant dense<0.000000e+00> : vector<24x128xf32>
    %42 = tpu.matmul %40, %41, %cst_11 {dimension_numbers = #tpu.dot_dimension_numbers<[1], [0], [0], [1], [0, 0, 1, 1], [], []>} : vector<24x128xbf16>, vector<128x128xbf16>, vector<24x128xf32> -> vector<24x128xf32>
    %c0_12 = arith.constant 0 : index
    %c0_13 = arith.constant 0 : index
    %43 = vector.load %arg6[%c0_12, %c0_13] : memref<16x128xbf16, #tpu.memory_space<vmem>>, vector<16x128xbf16>
    %cst_14 = arith.constant dense<0.000000e+00> : vector<24x128xf32>
    %44 = tpu.matmul %7, %43, %cst_14 {dimension_numbers = #tpu.dot_dimension_numbers<[1], [0], [0], [1], [0, 0, 1, 1], [], []>} : vector<24x16xbf16>, vector<16x128xbf16>, vector<24x128xf32> -> vector<24x128xf32>
    %45 = arith.addf %42, %44 : vector<24x128xf32>
    %46 = arith.truncf %45 : vector<24x128xf32> to vector<24x128xbf16>
    %cst_15 = arith.constant dense<0.000000e+00> : vector<16x128xf32>
    %47 = tpu.matmul %2, %46, %cst_15 {dimension_numbers = #tpu.dot_dimension_numbers<[1], [0], [0], [1], [0, 0, 1, 1], [], []>} : vector<16x24xbf16>, vector<24x128xbf16>, vector<16x128xf32> -> vector<16x128xf32>
    %48 = vector.broadcast %3 : vector<16x1xf32> to vector<16x128xf32>
    %49 = arith.mulf %47, %48 : vector<16x128xf32>
    %c0_16 = arith.constant 0 : index
    %c0_17 = arith.constant 0 : index
    %50 = vector.load %arg7[%c0_16, %c0_17] : memref<16x128xbf16, #tpu.memory_space<vmem>>, vector<16x128xbf16>
    %cst_18 = arith.constant dense<0.000000e+00> : vector<16x128xf32>
    %51 = tpu.matmul %5, %50, %cst_18 {dimension_numbers = #tpu.dot_dimension_numbers<[1], [0], [0], [1], [0, 0, 1, 1], [], []>} : vector<16x16xbf16>, vector<16x128xbf16>, vector<16x128xf32> -> vector<16x128xf32>
    %52 = arith.addf %49, %51 : vector<16x128xf32>
    %c0_19 = arith.constant 0 : index
    %c0_20 = arith.constant 0 : index
    %53 = vector.load %arg8[%c0_19, %c0_20] : memref<1x128xf32, #tpu.memory_space<vmem>>, vector<1x128xf32>
    %54 = vector.broadcast %53 : vector<1x128xf32> to vector<16x128xf32>
    %55 = arith.addf %52, %54 : vector<16x128xf32>
    %cst_21 = arith.constant 0.000000e+00 : f32
    %56 = vector.broadcast %cst_21 : f32 to vector<16x128xf32>
    %57 = arith.maximumf %55, %56 : vector<16x128xf32>
    %58 = arith.truncf %57 : vector<16x128xf32> to vector<16x128xbf16>
    %cst_22 = arith.constant dense<0.000000e+00> : vector<24x128xf32>
    %59 = tpu.matmul %1, %58, %cst_22 {dimension_numbers = #tpu.dot_dimension_numbers<[1], [0], [0], [1], [0, 0, 1, 1], [], []>} : vector<24x16xbf16>, vector<16x128xbf16>, vector<24x128xf32> -> vector<24x128xf32>
    %60 = arith.truncf %59 : vector<24x128xf32> to vector<24x128xbf16>
    %61 = vector.extract_strided_slice %0 {offsets = [0, 0], sizes = [24, 1], strides = [1, 1]} : vector<24x8xf32> to vector<24x1xf32>
    %62 = vector.broadcast %61 : vector<24x1xf32> to vector<24x128xf32>
    %63 = arith.mulf %59, %62 : vector<24x128xf32>
    %64 = arith.truncf %63 : vector<24x128xf32> to vector<24x128xbf16>
    %65 = vector.extract_strided_slice %0 {offsets = [0, 1], sizes = [24, 1], strides = [1, 1]} : vector<24x8xf32> to vector<24x1xf32>
    %66 = vector.broadcast %65 : vector<24x1xf32> to vector<24x128xf32>
    %67 = arith.mulf %59, %66 : vector<24x128xf32>
    %68 = arith.truncf %67 : vector<24x128xf32> to vector<24x128xbf16>
    %69 = vector.extract_strided_slice %0 {offsets = [0, 2], sizes = [24, 1], strides = [1, 1]} : vector<24x8xf32> to vector<24x1xf32>
    %70 = vector.broadcast %69 : vector<24x1xf32> to vector<24x128xf32>
    %71 = arith.mulf %59, %70 : vector<24x128xf32>
    %72 = arith.truncf %71 : vector<24x128xf32> to vector<24x128xbf16>
    %73 = vector.extract_strided_slice %0 {offsets = [0, 3], sizes = [24, 1], strides = [1, 1]} : vector<24x8xf32> to vector<24x1xf32>
    %74 = vector.broadcast %73 : vector<24x1xf32> to vector<24x128xf32>
    %75 = arith.mulf %59, %74 : vector<24x128xf32>
    %76 = arith.truncf %75 : vector<24x128xf32> to vector<24x128xbf16>
    %77 = vector.extract_strided_slice %0 {offsets = [0, 4], sizes = [24, 1], strides = [1, 1]} : vector<24x8xf32> to vector<24x1xf32>
    %78 = vector.broadcast %77 : vector<24x1xf32> to vector<24x128xf32>
    %79 = arith.mulf %59, %78 : vector<24x128xf32>
    %80 = arith.truncf %79 : vector<24x128xf32> to vector<24x128xbf16>
    %81 = vector.extract_strided_slice %0 {offsets = [0, 5], sizes = [24, 1], strides = [1, 1]} : vector<24x8xf32> to vector<24x1xf32>
    %82 = vector.broadcast %81 : vector<24x1xf32> to vector<24x128xf32>
    %83 = arith.mulf %59, %82 : vector<24x128xf32>
    %84 = arith.truncf %83 : vector<24x128xf32> to vector<24x128xbf16>
    %85 = vector.extract_strided_slice %0 {offsets = [0, 6], sizes = [24, 1], strides = [1, 1]} : vector<24x8xf32> to vector<24x1xf32>
    %86 = vector.broadcast %85 : vector<24x1xf32> to vector<24x128xf32>
    %87 = arith.mulf %59, %86 : vector<24x128xf32>
    %88 = arith.truncf %87 : vector<24x128xf32> to vector<24x128xbf16>
    %89 = vector.extract_strided_slice %0 {offsets = [0, 7], sizes = [24, 1], strides = [1, 1]} : vector<24x8xf32> to vector<24x1xf32>
    %90 = vector.broadcast %89 : vector<24x1xf32> to vector<24x128xf32>
    %91 = arith.mulf %59, %90 : vector<24x128xf32>
    %92 = arith.truncf %91 : vector<24x128xf32> to vector<24x128xbf16>
    %93 = tpu.concatenate %64, %68, %72, %76, %80, %84, %88, %92 in 1 : vector<24x128xbf16>, vector<24x128xbf16>, vector<24x128xbf16>, vector<24x128xbf16>, vector<24x128xbf16>, vector<24x128xbf16>, vector<24x128xbf16>, vector<24x128xbf16> -> vector<24x1024xbf16>
    %c0_23 = arith.constant 0 : index
    %c0_24 = arith.constant 0 : index
    %94 = vector.load %arg9[%c0_23, %c0_24] : memref<1024x128xbf16, #tpu.memory_space<vmem>>, vector<1024x128xbf16>
    %cst_25 = arith.constant dense<0.000000e+00> : vector<24x128xf32>
    %95 = tpu.matmul %93, %94, %cst_25 {dimension_numbers = #tpu.dot_dimension_numbers<[1], [0], [0], [1], [0, 0, 1, 1], [], []>} : vector<24x1024xbf16>, vector<1024x128xbf16>, vector<24x128xf32> -> vector<24x128xf32>
    %c0_26 = arith.constant 0 : index
    %c0_27 = arith.constant 0 : index
    %96 = vector.load %arg10[%c0_26, %c0_27] : memref<128x128xbf16, #tpu.memory_space<vmem>>, vector<128x128xbf16>
    %cst_28 = arith.constant dense<0.000000e+00> : vector<24x128xf32>
    %97 = tpu.matmul %60, %96, %cst_28 {dimension_numbers = #tpu.dot_dimension_numbers<[1], [0], [0], [1], [0, 0, 1, 1], [], []>} : vector<24x128xbf16>, vector<128x128xbf16>, vector<24x128xf32> -> vector<24x128xf32>
    %98 = arith.addf %95, %97 : vector<24x128xf32>
    %99 = arith.truncf %98 : vector<24x128xf32> to vector<24x128xbf16>
    %cst_29 = arith.constant dense<0.000000e+00> : vector<16x128xf32>
    %100 = tpu.matmul %2, %99, %cst_29 {dimension_numbers = #tpu.dot_dimension_numbers<[1], [0], [0], [1], [0, 0, 1, 1], [], []>} : vector<16x24xbf16>, vector<24x128xbf16>, vector<16x128xf32> -> vector<16x128xf32>
    %101 = vector.broadcast %3 : vector<16x1xf32> to vector<16x128xf32>
    %102 = arith.mulf %100, %101 : vector<16x128xf32>
    %c0_30 = arith.constant 0 : index
    %c0_31 = arith.constant 0 : index
    %103 = vector.load %arg11[%c0_30, %c0_31] : memref<128x128xbf16, #tpu.memory_space<vmem>>, vector<128x128xbf16>
    %cst_32 = arith.constant dense<0.000000e+00> : vector<16x128xf32>
    %104 = tpu.matmul %58, %103, %cst_32 {dimension_numbers = #tpu.dot_dimension_numbers<[1], [0], [0], [1], [0, 0, 1, 1], [], []>} : vector<16x128xbf16>, vector<128x128xbf16>, vector<16x128xf32> -> vector<16x128xf32>
    %105 = arith.addf %102, %104 : vector<16x128xf32>
    %c0_33 = arith.constant 0 : index
    %c0_34 = arith.constant 0 : index
    %106 = vector.load %arg12[%c0_33, %c0_34] : memref<1x128xf32, #tpu.memory_space<vmem>>, vector<1x128xf32>
    %107 = vector.broadcast %106 : vector<1x128xf32> to vector<16x128xf32>
    %108 = arith.addf %105, %107 : vector<16x128xf32>
    %cst_35 = arith.constant 0.000000e+00 : f32
    %109 = vector.broadcast %cst_35 : f32 to vector<16x128xf32>
    %110 = arith.maximumf %108, %109 : vector<16x128xf32>
    %111 = arith.truncf %110 : vector<16x128xf32> to vector<16x128xbf16>
    %cst_36 = arith.constant dense<0.000000e+00> : vector<24x128xf32>
    %112 = tpu.matmul %1, %111, %cst_36 {dimension_numbers = #tpu.dot_dimension_numbers<[1], [0], [0], [1], [0, 0, 1, 1], [], []>} : vector<24x16xbf16>, vector<16x128xbf16>, vector<24x128xf32> -> vector<24x128xf32>
    %113 = arith.truncf %112 : vector<24x128xf32> to vector<24x128xbf16>
    %114 = vector.extract_strided_slice %0 {offsets = [0, 0], sizes = [24, 1], strides = [1, 1]} : vector<24x8xf32> to vector<24x1xf32>
    %115 = vector.broadcast %114 : vector<24x1xf32> to vector<24x128xf32>
    %116 = arith.mulf %112, %115 : vector<24x128xf32>
    %117 = arith.truncf %116 : vector<24x128xf32> to vector<24x128xbf16>
    %118 = vector.extract_strided_slice %0 {offsets = [0, 1], sizes = [24, 1], strides = [1, 1]} : vector<24x8xf32> to vector<24x1xf32>
    %119 = vector.broadcast %118 : vector<24x1xf32> to vector<24x128xf32>
    %120 = arith.mulf %112, %119 : vector<24x128xf32>
    %121 = arith.truncf %120 : vector<24x128xf32> to vector<24x128xbf16>
    %122 = vector.extract_strided_slice %0 {offsets = [0, 2], sizes = [24, 1], strides = [1, 1]} : vector<24x8xf32> to vector<24x1xf32>
    %123 = vector.broadcast %122 : vector<24x1xf32> to vector<24x128xf32>
    %124 = arith.mulf %112, %123 : vector<24x128xf32>
    %125 = arith.truncf %124 : vector<24x128xf32> to vector<24x128xbf16>
    %126 = vector.extract_strided_slice %0 {offsets = [0, 3], sizes = [24, 1], strides = [1, 1]} : vector<24x8xf32> to vector<24x1xf32>
    %127 = vector.broadcast %126 : vector<24x1xf32> to vector<24x128xf32>
    %128 = arith.mulf %112, %127 : vector<24x128xf32>
    %129 = arith.truncf %128 : vector<24x128xf32> to vector<24x128xbf16>
    %130 = vector.extract_strided_slice %0 {offsets = [0, 4], sizes = [24, 1], strides = [1, 1]} : vector<24x8xf32> to vector<24x1xf32>
    %131 = vector.broadcast %130 : vector<24x1xf32> to vector<24x128xf32>
    %132 = arith.mulf %112, %131 : vector<24x128xf32>
    %133 = arith.truncf %132 : vector<24x128xf32> to vector<24x128xbf16>
    %134 = vector.extract_strided_slice %0 {offsets = [0, 5], sizes = [24, 1], strides = [1, 1]} : vector<24x8xf32> to vector<24x1xf32>
    %135 = vector.broadcast %134 : vector<24x1xf32> to vector<24x128xf32>
    %136 = arith.mulf %112, %135 : vector<24x128xf32>
    %137 = arith.truncf %136 : vector<24x128xf32> to vector<24x128xbf16>
    %138 = vector.extract_strided_slice %0 {offsets = [0, 6], sizes = [24, 1], strides = [1, 1]} : vector<24x8xf32> to vector<24x1xf32>
    %139 = vector.broadcast %138 : vector<24x1xf32> to vector<24x128xf32>
    %140 = arith.mulf %112, %139 : vector<24x128xf32>
    %141 = arith.truncf %140 : vector<24x128xf32> to vector<24x128xbf16>
    %142 = vector.extract_strided_slice %0 {offsets = [0, 7], sizes = [24, 1], strides = [1, 1]} : vector<24x8xf32> to vector<24x1xf32>
    %143 = vector.broadcast %142 : vector<24x1xf32> to vector<24x128xf32>
    %144 = arith.mulf %112, %143 : vector<24x128xf32>
    %145 = arith.truncf %144 : vector<24x128xf32> to vector<24x128xbf16>
    %146 = tpu.concatenate %117, %121, %125, %129, %133, %137, %141, %145 in 1 : vector<24x128xbf16>, vector<24x128xbf16>, vector<24x128xbf16>, vector<24x128xbf16>, vector<24x128xbf16>, vector<24x128xbf16>, vector<24x128xbf16>, vector<24x128xbf16> -> vector<24x1024xbf16>
    %c0_37 = arith.constant 0 : index
    %c0_38 = arith.constant 0 : index
    %147 = vector.load %arg13[%c0_37, %c0_38] : memref<1024x128xbf16, #tpu.memory_space<vmem>>, vector<1024x128xbf16>
    %cst_39 = arith.constant dense<0.000000e+00> : vector<24x128xf32>
    %148 = tpu.matmul %146, %147, %cst_39 {dimension_numbers = #tpu.dot_dimension_numbers<[1], [0], [0], [1], [0, 0, 1, 1], [], []>} : vector<24x1024xbf16>, vector<1024x128xbf16>, vector<24x128xf32> -> vector<24x128xf32>
    %c0_40 = arith.constant 0 : index
    %c0_41 = arith.constant 0 : index
    %149 = vector.load %arg14[%c0_40, %c0_41] : memref<128x128xbf16, #tpu.memory_space<vmem>>, vector<128x128xbf16>
    %cst_42 = arith.constant dense<0.000000e+00> : vector<24x128xf32>
    %150 = tpu.matmul %113, %149, %cst_42 {dimension_numbers = #tpu.dot_dimension_numbers<[1], [0], [0], [1], [0, 0, 1, 1], [], []>} : vector<24x128xbf16>, vector<128x128xbf16>, vector<24x128xf32> -> vector<24x128xf32>
    %151 = arith.addf %148, %150 : vector<24x128xf32>
    %152 = arith.truncf %151 : vector<24x128xf32> to vector<24x128xbf16>
    %cst_43 = arith.constant dense<0.000000e+00> : vector<16x128xf32>
    %153 = tpu.matmul %2, %152, %cst_43 {dimension_numbers = #tpu.dot_dimension_numbers<[1], [0], [0], [1], [0, 0, 1, 1], [], []>} : vector<16x24xbf16>, vector<24x128xbf16>, vector<16x128xf32> -> vector<16x128xf32>
    %154 = vector.broadcast %3 : vector<16x1xf32> to vector<16x128xf32>
    %155 = arith.mulf %153, %154 : vector<16x128xf32>
    %c0_44 = arith.constant 0 : index
    %c0_45 = arith.constant 0 : index
    %156 = vector.load %arg15[%c0_44, %c0_45] : memref<128x128xbf16, #tpu.memory_space<vmem>>, vector<128x128xbf16>
    %cst_46 = arith.constant dense<0.000000e+00> : vector<16x128xf32>
    %157 = tpu.matmul %111, %156, %cst_46 {dimension_numbers = #tpu.dot_dimension_numbers<[1], [0], [0], [1], [0, 0, 1, 1], [], []>} : vector<16x128xbf16>, vector<128x128xbf16>, vector<16x128xf32> -> vector<16x128xf32>
    %158 = arith.addf %155, %157 : vector<16x128xf32>
    %c0_47 = arith.constant 0 : index
    %c0_48 = arith.constant 0 : index
    %159 = vector.load %arg16[%c0_47, %c0_48] : memref<1x128xf32, #tpu.memory_space<vmem>>, vector<1x128xf32>
    %160 = vector.broadcast %159 : vector<1x128xf32> to vector<16x128xf32>
    %161 = arith.addf %158, %160 : vector<16x128xf32>
    %cst_49 = arith.constant 0.000000e+00 : f32
    %162 = vector.broadcast %cst_49 : f32 to vector<16x128xf32>
    %163 = arith.maximumf %161, %162 : vector<16x128xf32>
    %164 = arith.truncf %163 : vector<16x128xf32> to vector<16x128xbf16>
    %cst_50 = arith.constant dense<0.000000e+00> : vector<24x128xf32>
    %165 = tpu.matmul %1, %164, %cst_50 {dimension_numbers = #tpu.dot_dimension_numbers<[1], [0], [0], [1], [0, 0, 1, 1], [], []>} : vector<24x16xbf16>, vector<16x128xbf16>, vector<24x128xf32> -> vector<24x128xf32>
    %166 = arith.truncf %165 : vector<24x128xf32> to vector<24x128xbf16>
    %167 = vector.extract_strided_slice %0 {offsets = [0, 0], sizes = [24, 1], strides = [1, 1]} : vector<24x8xf32> to vector<24x1xf32>
    %168 = vector.broadcast %167 : vector<24x1xf32> to vector<24x128xf32>
    %169 = arith.mulf %165, %168 : vector<24x128xf32>
    %170 = arith.truncf %169 : vector<24x128xf32> to vector<24x128xbf16>
    %171 = vector.extract_strided_slice %0 {offsets = [0, 1], sizes = [24, 1], strides = [1, 1]} : vector<24x8xf32> to vector<24x1xf32>
    %172 = vector.broadcast %171 : vector<24x1xf32> to vector<24x128xf32>
    %173 = arith.mulf %165, %172 : vector<24x128xf32>
    %174 = arith.truncf %173 : vector<24x128xf32> to vector<24x128xbf16>
    %175 = vector.extract_strided_slice %0 {offsets = [0, 2], sizes = [24, 1], strides = [1, 1]} : vector<24x8xf32> to vector<24x1xf32>
    %176 = vector.broadcast %175 : vector<24x1xf32> to vector<24x128xf32>
    %177 = arith.mulf %165, %176 : vector<24x128xf32>
    %178 = arith.truncf %177 : vector<24x128xf32> to vector<24x128xbf16>
    %179 = vector.extract_strided_slice %0 {offsets = [0, 3], sizes = [24, 1], strides = [1, 1]} : vector<24x8xf32> to vector<24x1xf32>
    %180 = vector.broadcast %179 : vector<24x1xf32> to vector<24x128xf32>
    %181 = arith.mulf %165, %180 : vector<24x128xf32>
    %182 = arith.truncf %181 : vector<24x128xf32> to vector<24x128xbf16>
    %183 = vector.extract_strided_slice %0 {offsets = [0, 4], sizes = [24, 1], strides = [1, 1]} : vector<24x8xf32> to vector<24x1xf32>
    %184 = vector.broadcast %183 : vector<24x1xf32> to vector<24x128xf32>
    %185 = arith.mulf %165, %184 : vector<24x128xf32>
    %186 = arith.truncf %185 : vector<24x128xf32> to vector<24x128xbf16>
    %187 = vector.extract_strided_slice %0 {offsets = [0, 5], sizes = [24, 1], strides = [1, 1]} : vector<24x8xf32> to vector<24x1xf32>
    %188 = vector.broadcast %187 : vector<24x1xf32> to vector<24x128xf32>
    %189 = arith.mulf %165, %188 : vector<24x128xf32>
    %190 = arith.truncf %189 : vector<24x128xf32> to vector<24x128xbf16>
    %191 = vector.extract_strided_slice %0 {offsets = [0, 6], sizes = [24, 1], strides = [1, 1]} : vector<24x8xf32> to vector<24x1xf32>
    %192 = vector.broadcast %191 : vector<24x1xf32> to vector<24x128xf32>
    %193 = arith.mulf %165, %192 : vector<24x128xf32>
    %194 = arith.truncf %193 : vector<24x128xf32> to vector<24x128xbf16>
    %195 = vector.extract_strided_slice %0 {offsets = [0, 7], sizes = [24, 1], strides = [1, 1]} : vector<24x8xf32> to vector<24x1xf32>
    %196 = vector.broadcast %195 : vector<24x1xf32> to vector<24x128xf32>
    %197 = arith.mulf %165, %196 : vector<24x128xf32>
    %198 = arith.truncf %197 : vector<24x128xf32> to vector<24x128xbf16>
    %199 = tpu.concatenate %170, %174, %178, %182, %186, %190, %194, %198 in 1 : vector<24x128xbf16>, vector<24x128xbf16>, vector<24x128xbf16>, vector<24x128xbf16>, vector<24x128xbf16>, vector<24x128xbf16>, vector<24x128xbf16>, vector<24x128xbf16> -> vector<24x1024xbf16>
    %c0_51 = arith.constant 0 : index
    %c0_52 = arith.constant 0 : index
    %200 = vector.load %arg17[%c0_51, %c0_52] : memref<1024x128xbf16, #tpu.memory_space<vmem>>, vector<1024x128xbf16>
    %cst_53 = arith.constant dense<0.000000e+00> : vector<24x128xf32>
    %201 = tpu.matmul %199, %200, %cst_53 {dimension_numbers = #tpu.dot_dimension_numbers<[1], [0], [0], [1], [0, 0, 1, 1], [], []>} : vector<24x1024xbf16>, vector<1024x128xbf16>, vector<24x128xf32> -> vector<24x128xf32>
    %c0_54 = arith.constant 0 : index
    %c0_55 = arith.constant 0 : index
    %202 = vector.load %arg18[%c0_54, %c0_55] : memref<128x128xbf16, #tpu.memory_space<vmem>>, vector<128x128xbf16>
    %cst_56 = arith.constant dense<0.000000e+00> : vector<24x128xf32>
    %203 = tpu.matmul %166, %202, %cst_56 {dimension_numbers = #tpu.dot_dimension_numbers<[1], [0], [0], [1], [0, 0, 1, 1], [], []>} : vector<24x128xbf16>, vector<128x128xbf16>, vector<24x128xf32> -> vector<24x128xf32>
    %204 = arith.addf %201, %203 : vector<24x128xf32>
    %205 = arith.truncf %204 : vector<24x128xf32> to vector<24x128xbf16>
    %cst_57 = arith.constant dense<0.000000e+00> : vector<16x128xf32>
    %206 = tpu.matmul %2, %205, %cst_57 {dimension_numbers = #tpu.dot_dimension_numbers<[1], [0], [0], [1], [0, 0, 1, 1], [], []>} : vector<16x24xbf16>, vector<24x128xbf16>, vector<16x128xf32> -> vector<16x128xf32>
    %207 = vector.broadcast %3 : vector<16x1xf32> to vector<16x128xf32>
    %208 = arith.mulf %206, %207 : vector<16x128xf32>
    %c0_58 = arith.constant 0 : index
    %c0_59 = arith.constant 0 : index
    %209 = vector.load %arg19[%c0_58, %c0_59] : memref<128x128xbf16, #tpu.memory_space<vmem>>, vector<128x128xbf16>
    %cst_60 = arith.constant dense<0.000000e+00> : vector<16x128xf32>
    %210 = tpu.matmul %164, %209, %cst_60 {dimension_numbers = #tpu.dot_dimension_numbers<[1], [0], [0], [1], [0, 0, 1, 1], [], []>} : vector<16x128xbf16>, vector<128x128xbf16>, vector<16x128xf32> -> vector<16x128xf32>
    %211 = arith.addf %208, %210 : vector<16x128xf32>
    %c0_61 = arith.constant 0 : index
    %c0_62 = arith.constant 0 : index
    %212 = vector.load %arg20[%c0_61, %c0_62] : memref<1x128xf32, #tpu.memory_space<vmem>>, vector<1x128xf32>
    %213 = vector.broadcast %212 : vector<1x128xf32> to vector<16x128xf32>
    %214 = arith.addf %211, %213 : vector<16x128xf32>
    %c0_63 = arith.constant 0 : index
    %c0_64 = arith.constant 0 : index
    %215 = vector.load %arg21[%c0_63, %c0_64] : memref<16x128xf32, #tpu.memory_space<vmem>>, vector<16x128xf32>
    tpu.vector_store %arg21[%c0_63, %c0_64], %214 {strides = array<i32>} : memref<16x128xf32, #tpu.memory_space<vmem>>, vector<16x128xf32>,
    return
  }
}

</mosaic_0001>

<llo_original>
// kernel: tpu_custom_call.1
$region0: #{tpu_custom_call.1}
  #allocation0 [shape = 'u32[]', space=smem, size = 0x4, offset = 0x4, fixed_abs, tag = 'smem constant byte address 0x4 - core index']
  #allocation1 [shape = 'u32[144,128]{1,0:T(1,128)}', space=vmem, size = 0x12000, scoped, tag = 'internal scratch']
  %s0 = inlined_call_operand.hbm [shape: f32[16,16], index: 0, kind: input, shape index: {}]
  %s1 = inlined_call_operand.vmem [shape: f32[24,8], index: 1, kind: input, shape index: {}]
  %s2 = inlined_call_operand.vmem [shape: bf16[24,16], index: 2, kind: input, shape index: {}]
  %s3 = inlined_call_operand.hbm [shape: bf16[16,24], index: 3, kind: input, shape index: {}]
  %s4 = inlined_call_operand.vmem [shape: f32[16,1], index: 4, kind: input, shape index: {}]
  %s5 = inlined_call_operand.vmem [shape: bf16[128,128], index: 5, kind: input, shape index: {}]
  %s6 = inlined_call_operand.hbm [shape: bf16[16,128], index: 6, kind: input, shape index: {}]
  %s7 = inlined_call_operand.hbm [shape: bf16[16,128], index: 7, kind: input, shape index: {}]
  %s8 = inlined_call_operand.vmem [shape: f32[1,128], index: 8, kind: input, shape index: {}]
  %s9 = inlined_call_operand.hbm [shape: bf16[1024,128], index: 9, kind: input, shape index: {}]
  %s10 = inlined_call_operand.hbm [shape: bf16[128,128], index: 10, kind: input, shape index: {}]
  %s11 = inlined_call_operand.hbm [shape: bf16[128,128], index: 11, kind: input, shape index: {}]
  %s12 = inlined_call_operand.hbm [shape: f32[1,128], index: 12, kind: input, shape index: {}]
  %s13 = inlined_call_operand.hbm [shape: bf16[1024,128], index: 13, kind: input, shape index: {}]
  %s14 = inlined_call_operand.hbm [shape: bf16[128,128], index: 14, kind: input, shape index: {}]
  %s15 = inlined_call_operand.hbm [shape: bf16[128,128], index: 15, kind: input, shape index: {}]
  %s16 = inlined_call_operand.hbm [shape: f32[1,128], index: 16, kind: input, shape index: {}]
  %s17 = inlined_call_operand.hbm [shape: bf16[1024,128], index: 17, kind: input, shape index: {}]
  %s18 = inlined_call_operand.vmem [shape: bf16[128,128], index: 18, kind: input, shape index: {}]
  %s19 = inlined_call_operand.hbm [shape: bf16[128,128], index: 19, kind: input, shape index: {}]
  %s20 = inlined_call_operand.vmem [shape: f32[1,128], index: 20, kind: input, shape index: {}]
  %s21 = inlined_call_operand.hbm [shape: f32[16,128], index: 21, kind: output, shape index: {}]
  %s22 = sld [smem:[#allocation0]]
  $region150: #{tpu_custom_call.1} parent=0
    _
  %s24 = ssub.s32 1, %s22
  %s25 = scalar_select 0, %s24, %s22
  $region1: #{tpu_custom_call.1} parent=0
    #allocation2 [shape = 'u8[8192]{0}', space=vmem, size = 0x2000, scoped, tag = 'input window, operand 0, single buffered']
    #allocation3 [shape = 's32[1]{0}', space=sflag, size = 0x4, scoped, tag = 'scoped memory for tpu_custom_call.1']
    #allocation4 [shape = 's32[1]{0}', space=sflag, size = 0x4, scoped, tag = 'scoped memory for tpu_custom_call.1']
    #allocation5 [shape = 'u8[4096]{0}', space=vmem, size = 0x1000, scoped, tag = 'input window, operand 3, single buffered']
    #allocation6 [shape = 's32[1]{0}', space=sflag, size = 0x4, scoped, tag = 'scoped memory for tpu_custom_call.1']
    #allocation7 [shape = 'u8[4096]{0}', space=vmem, size = 0x1000, scoped, tag = 'input window, operand 6, single buffered']
    #allocation8 [shape = 'u8[4096]{0}', space=vmem, size = 0x1000, scoped, tag = 'input window, operand 7, single buffered']
    #allocation9 [shape = 's32[1]{0}', space=sflag, size = 0x4, scoped, tag = 'scoped memory for tpu_custom_call.1']
    #allocation10 [shape = 'u8[262144]{0}', space=vmem, size = 0x40000, scoped, tag = 'input window, operand 9, single buffered']
    #allocation11 [shape = 'u8[32768]{0}', space=vmem, size = 0x8000, scoped, tag = 'input window, operand 10, single buffered']
    #allocation12 [shape = 's32[1]{0}', space=sflag, size = 0x4, scoped, tag = 'scoped memory for tpu_custom_call.1']
    #allocation13 [shape = 'u8[32768]{0}', space=vmem, size = 0x8000, scoped, tag = 'input window, operand 11, single buffered']
    #allocation14 [shape = 'u8[512]{0}', space=vmem, size = 0x400, scoped, tag = 'input window, operand 12, single buffered']
    #allocation15 [shape = 's32[1]{0}', space=sflag, size = 0x4, scoped, tag = 'scoped memory for tpu_custom_call.1']
    #allocation16 [shape = 'u8[262144]{0}', space=vmem, size = 0x40000, scoped, tag = 'input window, operand 13, single buffered']
    #allocation17 [shape = 'u8[32768]{0}', space=vmem, size = 0x8000, scoped, tag = 'input window, operand 14, single buffered']
    #allocation18 [shape = 's32[1]{0}', space=sflag, size = 0x4, scoped, tag = 'scoped memory for tpu_custom_call.1']
    #allocation19 [shape = 'u8[32768]{0}', space=vmem, size = 0x8000, scoped, tag = 'input window, operand 15, single buffered']
    #allocation20 [shape = 'u8[512]{0}', space=vmem, size = 0x400, scoped, tag = 'input window, operand 16, single buffered']
    #allocation21 [shape = 's32[1]{0}', space=sflag, size = 0x4, scoped, tag = 'scoped memory for tpu_custom_call.1']
    #allocation22 [shape = 'u8[262144]{0}', space=vmem, size = 0x40000, scoped, tag = 'input window, operand 17, single buffered']
    #allocation23 [shape = 'u8[32768]{0}', space=vmem, size = 0x8000, scoped, tag = 'input window, operand 19, single buffered']
    #allocation24 [shape = 's32[1]{0}', space=sflag, size = 0x4, scoped, tag = 'scoped memory for tpu_custom_call.1']
    #allocation25 [shape = 'u8[8192]{0}', space=vmem, size = 0x2000, scoped, tag = 'output window, operand 0, single buffered']
    %26 = vsyncpa [#allocation3], 0
    %27 = vsyncpa [#allocation6], 0
    %28 = vsyncpa [#allocation9], 0
    %29 = vsyncpa [#allocation12], 0
    %30 = vsyncpa [#allocation15], 0
    %31 = vsyncpa [#allocation18], 0
    %32 = vsyncpa [#allocation21], 0
    %33 = vsyncpa [#allocation24], 0
    %34 = vsyncpa [#allocation4], 0
    // Predicated region
    $region2: #{tpu_custom_call.1} parent=1 // pred_check
      _
    $region3: #{tpu_custom_call.1} parent=1 // pred_check_branch
      %36 = sbr.rel (0) target = $region5
    $region4: #{tpu_custom_call.1} parent=1 // pred_region
      %s38 = ssub.s32 256, 256
      %39 = vsyncadd [#allocation3], %s38
      %s40 = sshll.u32 [#allocation2], 4
      %s41 = int_to_ptr.vmem [resolvable:$true] %s40
      %46 = dma.hbm_to_vmem [thread:$0]  %s0, 256, %s41, [#allocation3], 128, 128, 8
    $region5: #{tpu_custom_call.1} parent=1 // pred_fallthru
      _
    // Predicated region
    $region6: #{tpu_custom_call.1} parent=1 // pred_check
      _
    $region7: #{tpu_custom_call.1} parent=1 // pred_check_branch
      %48 = sbr.rel (0) target = $region9
    $region8: #{tpu_custom_call.1} parent=1 // pred_region
      _
    $region9: #{tpu_custom_call.1} parent=1 // pred_fallthru
      _
    // Predicated region
    $region10: #{tpu_custom_call.1} parent=1 // pred_check
      _
    $region11: #{tpu_custom_call.1} parent=1 // pred_check_branch
      %50 = sbr.rel (0) target = $region13
    $region12: #{tpu_custom_call.1} parent=1 // pred_region
      _
    $region13: #{tpu_custom_call.1} parent=1 // pred_fallthru
      _
    // Predicated region
    $region14: #{tpu_custom_call.1} parent=1 // pred_check
      _
    $region15: #{tpu_custom_call.1} parent=1 // pred_check_branch
      %52 = sbr.rel (0) target = $region17
    $region16: #{tpu_custom_call.1} parent=1 // pred_region
      %s54 = ssub.s32 128, 128
      %55 = vsyncadd [#allocation6], %s54
      %s56 = sshll.u32 [#allocation5], 4
      %s57 = int_to_ptr.vmem [resolvable:$true] %s56
      %62 = dma.hbm_to_vmem [thread:$0]  %s3, 128, %s57, [#allocation6], 64, 64, 4
    $region17: #{tpu_custom_call.1} parent=1 // pred_fallthru
      _
    // Predicated region
    $region18: #{tpu_custom_call.1} parent=1 // pred_check
      _
    $region19: #{tpu_custom_call.1} parent=1 // pred_check_branch
      %64 = sbr.rel (0) target = $region21
    $region20: #{tpu_custom_call.1} parent=1 // pred_region
      _
    $region21: #{tpu_custom_call.1} parent=1 // pred_fallthru
      _
    // Predicated region
    $region22: #{tpu_custom_call.1} parent=1 // pred_check
      _
    $region23: #{tpu_custom_call.1} parent=1 // pred_check_branch
      %66 = sbr.rel (0) target = $region25
    $region24: #{tpu_custom_call.1} parent=1 // pred_region
      _
    $region25: #{tpu_custom_call.1} parent=1 // pred_fallthru
      _
    // Predicated region
    $region26: #{tpu_custom_call.1} parent=1 // pred_check
      _
    $region27: #{tpu_custom_call.1} parent=1 // pred_check_branch
      %68 = sbr.rel (0) target = $region29
    $region28: #{tpu_custom_call.1} parent=1 // pred_region
      %s70 = ssub.s32 128, 128
      %71 = vsyncadd [#allocation6], %s70
      %s72 = sshll.u32 [#allocation7], 4
      %s73 = int_to_ptr.vmem [resolvable:$true] %s72
      %78 = dma.hbm_to_vmem [thread:$0]  %s6, 128, %s73, [#allocation6], 64, 64, 4
    $region29: #{tpu_custom_call.1} parent=1 // pred_fallthru
      _
    // Predicated region
    $region30: #{tpu_custom_call.1} parent=1 // pred_check
      _
    $region31: #{tpu_custom_call.1} parent=1 // pred_check_branch
      %80 = sbr.rel (0) target = $region33
    $region32: #{tpu_custom_call.1} parent=1 // pred_region
      %s82 = ssub.s32 128, 128
      %83 = vsyncadd [#allocation9], %s82
      %s84 = sshll.u32 [#allocation8], 4
      %s85 = int_to_ptr.vmem [resolvable:$true] %s84
      %90 = dma.hbm_to_vmem [thread:$0]  %s7, 128, %s85, [#allocation9], 64, 64, 4
    $region33: #{tpu_custom_call.1} parent=1 // pred_fallthru
      _
    // Predicated region
    $region34: #{tpu_custom_call.1} parent=1 // pred_check
      _
    $region35: #{tpu_custom_call.1} parent=1 // pred_check_branch
      %92 = sbr.rel (0) target = $region37
    $region36: #{tpu_custom_call.1} parent=1 // pred_region
      _
    $region37: #{tpu_custom_call.1} parent=1 // pred_fallthru
      _
    // Predicated region
    $region38: #{tpu_custom_call.1} parent=1 // pred_check
      _
    $region39: #{tpu_custom_call.1} parent=1 // pred_check_branch
      %94 = sbr.rel (0) target = $region41
    $region40: #{tpu_custom_call.1} parent=1 // pred_region
      %s96 = ssub.s32 8192, 8192
      %97 = vsyncadd [#allocation9], %s96
      %s98 = sshll.u32 [#allocation10], 4
      %s99 = int_to_ptr.vmem [resolvable:$true] %s98
      %104 = dma.hbm_to_vmem [thread:$0]  %s9, 8192, %s99, [#allocation9], 64, 64, 4
    $region41: #{tpu_custom_call.1} parent=1 // pred_fallthru
      _
    // Predicated region
    $region42: #{tpu_custom_call.1} parent=1 // pred_check
      _
    $region43: #{tpu_custom_call.1} parent=1 // pred_check_branch
      %106 = sbr.rel (0) target = $region45
    $region44: #{tpu_custom_call.1} parent=1 // pred_region
      %s108 = ssub.s32 1024, 1024
      %109 = vsyncadd [#allocation12], %s108
      %s110 = sshll.u32 [#allocation11], 4
      %s111 = int_to_ptr.vmem [resolvable:$true] %s110
      %116 = dma.hbm_to_vmem [thread:$0]  %s10, 1024, %s111, [#allocation12], 64, 64, 4
    $region45: #{tpu_custom_call.1} parent=1 // pred_fallthru
      _
    // Predicated region
    $region46: #{tpu_custom_call.1} parent=1 // pred_check
      _
    $region47: #{tpu_custom_call.1} parent=1 // pred_check_branch
      %118 = sbr.rel (0) target = $region49
    $region48: #{tpu_custom_call.1} parent=1 // pred_region
      %s120 = ssub.s32 1024, 1024
      %121 = vsyncadd [#allocation12], %s120
      %s122 = sshll.u32 [#allocation13], 4
      %s123 = int_to_ptr.vmem [resolvable:$true] %s122
      %128 = dma.hbm_to_vmem [thread:$0]  %s11, 1024, %s123, [#allocation12], 64, 64, 4
    $region49: #{tpu_custom_call.1} parent=1 // pred_fallthru
      _
    // Predicated region
    $region50: #{tpu_custom_call.1} parent=1 // pred_check
      _
    $region51: #{tpu_custom_call.1} parent=1 // pred_check_branch
      %130 = sbr.rel (0) target = $region53
    $region52: #{tpu_custom_call.1} parent=1 // pred_region
      %s132 = ssub.s32 16, 16
      %133 = vsyncadd [#allocation15], %s132
      %s135 = sshll.u32 [#allocation14], 4
      %s136 = int_to_ptr.vmem [resolvable:$true] %s135
      %138 = dma.hbm_to_vmem [thread:$0]  %s12, 16, %s136, [#allocation15]
    $region53: #{tpu_custom_call.1} parent=1 // pred_fallthru
      _
    // Predicated region
    $region54: #{tpu_custom_call.1} parent=1 // pred_check
      _
    $region55: #{tpu_custom_call.1} parent=1 // pred_check_branch
      %140 = sbr.rel (0) target = $region57
    $region56: #{tpu_custom_call.1} parent=1 // pred_region
      %s142 = ssub.s32 8192, 8192
      %143 = vsyncadd [#allocation15], %s142
      %s144 = sshll.u32 [#allocation16], 4
      %s145 = int_to_ptr.vmem [resolvable:$true] %s144
      %150 = dma.hbm_to_vmem [thread:$0]  %s13, 8192, %s145, [#allocation15], 64, 64, 4
    $region57: #{tpu_custom_call.1} parent=1 // pred_fallthru
      _
    // Predicated region
    $region58: #{tpu_custom_call.1} parent=1 // pred_check
      _
    $region59: #{tpu_custom_call.1} parent=1 // pred_check_branch
      %152 = sbr.rel (0) target = $region61
    $region60: #{tpu_custom_call.1} parent=1 // pred_region
      %s154 = ssub.s32 1024, 1024
      %155 = vsyncadd [#allocation18], %s154
      %s156 = sshll.u32 [#allocation17], 4
      %s157 = int_to_ptr.vmem [resolvable:$true] %s156
      %162 = dma.hbm_to_vmem [thread:$0]  %s14, 1024, %s157, [#allocation18], 64, 64, 4
    $region61: #{tpu_custom_call.1} parent=1 // pred_fallthru
      _
    // Predicated region
    $region62: #{tpu_custom_call.1} parent=1 // pred_check
      _
    $region63: #{tpu_custom_call.1} parent=1 // pred_check_branch
      %164 = sbr.rel (0) target = $region65
    $region64: #{tpu_custom_call.1} parent=1 // pred_region
      %s166 = ssub.s32 1024, 1024
      %167 = vsyncadd [#allocation18], %s166
      %s168 = sshll.u32 [#allocation19], 4
      %s169 = int_to_ptr.vmem [resolvable:$true] %s168
      %174 = dma.hbm_to_vmem [thread:$0]  %s15, 1024, %s169, [#allocation18], 64, 64, 4
    $region65: #{tpu_custom_call.1} parent=1 // pred_fallthru
      _
    // Predicated region
    $region66: #{tpu_custom_call.1} parent=1 // pred_check
      _
    $region67: #{tpu_custom_call.1} parent=1 // pred_check_branch
      %176 = sbr.rel (0) target = $region69
    $region68: #{tpu_custom_call.1} parent=1 // pred_region
      %s178 = ssub.s32 16, 16
      %179 = vsyncadd [#allocation21], %s178
      %s181 = sshll.u32 [#allocation20], 4
      %s182 = int_to_ptr.vmem [resolvable:$true] %s181
      %184 = dma.hbm_to_vmem [thread:$0]  %s16, 16, %s182, [#allocation21]
    $region69: #{tpu_custom_call.1} parent=1 // pred_fallthru
      _
    // Predicated region
    $region70: #{tpu_custom_call.1} parent=1 // pred_check
      _
    $region71: #{tpu_custom_call.1} parent=1 // pred_check_branch
      %186 = sbr.rel (0) target = $region73
    $region72: #{tpu_custom_call.1} parent=1 // pred_region
      %s188 = ssub.s32 8192, 8192
      %189 = vsyncadd [#allocation21], %s188
      %s190 = sshll.u32 [#allocation22], 4
      %s191 = int_to_ptr.vmem [resolvable:$true] %s190
      %196 = dma.hbm_to_vmem [thread:$0]  %s17, 8192, %s191, [#allocation21], 64, 64, 4
    $region73: #{tpu_custom_call.1} parent=1 // pred_fallthru
      _
    // Predicated region
    $region74: #{tpu_custom_call.1} parent=1 // pred_check
      _
    $region75: #{tpu_custom_call.1} parent=1 // pred_check_branch
      %198 = sbr.rel (0) target = $region77
    $region76: #{tpu_custom_call.1} parent=1 // pred_region
      _
    $region77: #{tpu_custom_call.1} parent=1 // pred_fallthru
      _
    // Predicated region
    $region78: #{tpu_custom_call.1} parent=1 // pred_check
      _
    $region79: #{tpu_custom_call.1} parent=1 // pred_check_branch
      %200 = sbr.rel (0) target = $region81
    $region80: #{tpu_custom_call.1} parent=1 // pred_region
      %s202 = ssub.s32 1024, 1024
      %203 = vsyncadd [#allocation24], %s202
      %s204 = sshll.u32 [#allocation23], 4
      %s205 = int_to_ptr.vmem [resolvable:$true] %s204
      %210 = dma.hbm_to_vmem [thread:$0]  %s19, 1024, %s205, [#allocation24], 64, 64, 4
    $region81: #{tpu_custom_call.1} parent=1 // pred_fallthru
      _
    // Predicated region
    $region82: #{tpu_custom_call.1} parent=1 // pred_check
      _
    $region83: #{tpu_custom_call.1} parent=1 // pred_check_branch
      %212 = sbr.rel (0) target = $region85
    $region84: #{tpu_custom_call.1} parent=1 // pred_region
      _
    $region85: #{tpu_custom_call.1} parent=1 // pred_fallthru
      _
    // Predicated region
    $region86: #{tpu_custom_call.1} parent=1 // pred_check
      _
    $region87: #{tpu_custom_call.1} parent=1 // pred_check_branch
      %214 = sbr.rel (0) target = $region89
    $region88: #{tpu_custom_call.1} parent=1 // pred_region
      %215 = dma.done [#allocation3], 256
    $region89: #{tpu_custom_call.1} parent=1 // pred_fallthru
      _
    // Predicated region
    $region90: #{tpu_custom_call.1} parent=1 // pred_check
      _
    $region91: #{tpu_custom_call.1} parent=1 // pred_check_branch
      %217 = sbr.rel (0) target = $region93
    $region92: #{tpu_custom_call.1} parent=1 // pred_region
      %218 = dma.done [#allocation6], 128
    $region93: #{tpu_custom_call.1} parent=1 // pred_fallthru
      _
    // Predicated region
    $region94: #{tpu_custom_call.1} parent=1 // pred_check
      _
    $region95: #{tpu_custom_call.1} parent=1 // pred_check_branch
      %220 = sbr.rel (0) target = $region97
    $region96: #{tpu_custom_call.1} parent=1 // pred_region
      %221 = dma.done [#allocation6], 128
    $region97: #{tpu_custom_call.1} parent=1 // pred_fallthru
      _
    // Predicated region
    $region98: #{tpu_custom_call.1} parent=1 // pred_check
      _
    $region99: #{tpu_custom_call.1} parent=1 // pred_check_branch
      %223 = sbr.rel (0) target = $region101
    $region100: #{tpu_custom_call.1} parent=1 // pred_region
      %224 = dma.done [#allocation9], 128
    $region101: #{tpu_custom_call.1} parent=1 // pred_fallthru
      _
    // Predicated region
    $region102: #{tpu_custom_call.1} parent=1 // pred_check
      _
    $region103: #{tpu_custom_call.1} parent=1 // pred_check_branch
      %226 = sbr.rel (0) target = $region105
    $region104: #{tpu_custom_call.1} parent=1 // pred_region
      %227 = dma.done [#allocation9], 8192
    $region105: #{tpu_custom_call.1} parent=1 // pred_fallthru
      _
    // Predicated region
    $region106: #{tpu_custom_call.1} parent=1 // pred_check
      _
    $region107: #{tpu_custom_call.1} parent=1 // pred_check_branch
      %229 = sbr.rel (0) target = $region109
    $region108: #{tpu_custom_call.1} parent=1 // pred_region
      %230 = dma.done [#allocation12], 1024
    $region109: #{tpu_custom_call.1} parent=1 // pred_fallthru
      _
    // Predicated region
    $region110: #{tpu_custom_call.1} parent=1 // pred_check
      _
    $region111: #{tpu_custom_call.1} parent=1 // pred_check_branch
      %232 = sbr.rel (0) target = $region113
    $region112: #{tpu_custom_call.1} parent=1 // pred_region
      %233 = dma.done [#allocation12], 1024
    $region113: #{tpu_custom_call.1} parent=1 // pred_fallthru
      _
    // Predicated region
    $region114: #{tpu_custom_call.1} parent=1 // pred_check
      _
    $region115: #{tpu_custom_call.1} parent=1 // pred_check_branch
      %235 = sbr.rel (0) target = $region117
    $region116: #{tpu_custom_call.1} parent=1 // pred_region
      %236 = dma.done [#allocation15], 16
    $region117: #{tpu_custom_call.1} parent=1 // pred_fallthru
      _
    // Predicated region
    $region118: #{tpu_custom_call.1} parent=1 // pred_check
      _
    $region119: #{tpu_custom_call.1} parent=1 // pred_check_branch
      %238 = sbr.rel (0) target = $region121
    $region120: #{tpu_custom_call.1} parent=1 // pred_region
      %239 = dma.done [#allocation15], 8192
    $region121: #{tpu_custom_call.1} parent=1 // pred_fallthru
      _
    // Predicated region
    $region122: #{tpu_custom_call.1} parent=1 // pred_check
      _
    $region123: #{tpu_custom_call.1} parent=1 // pred_check_branch
      %241 = sbr.rel (0) target = $region125
    $region124: #{tpu_custom_call.1} parent=1 // pred_region
      %242 = dma.done [#allocation18], 1024
    $region125: #{tpu_custom_call.1} parent=1 // pred_fallthru
      _
    // Predicated region
    $region126: #{tpu_custom_call.1} parent=1 // pred_check
      _
    $region127: #{tpu_custom_call.1} parent=1 // pred_check_branch
      %244 = sbr.rel (0) target = $region129
    $region128: #{tpu_custom_call.1} parent=1 // pred_region
      %245 = dma.done [#allocation18], 1024
    $region129: #{tpu_custom_call.1} parent=1 // pred_fallthru
      _
    // Predicated region
    $region130: #{tpu_custom_call.1} parent=1 // pred_check
      _
    $region131: #{tpu_custom_call.1} parent=1 // pred_check_branch
      %247 = sbr.rel (0) target = $region133
    $region132: #{tpu_custom_call.1} parent=1 // pred_region
      %248 = dma.done [#allocation21], 16
    $region133: #{tpu_custom_call.1} parent=1 // pred_fallthru
      _
    // Predicated region
    $region134: #{tpu_custom_call.1} parent=1 // pred_check
      _
    $region135: #{tpu_custom_call.1} parent=1 // pred_check_branch
      %250 = sbr.rel (0) target = $region137
    $region136: #{tpu_custom_call.1} parent=1 // pred_region
      %251 = dma.done [#allocation21], 8192
    $region137: #{tpu_custom_call.1} parent=1 // pred_fallthru
      _
    // Predicated region
    $region138: #{tpu_custom_call.1} parent=1 // pred_check
      _
    $region139: #{tpu_custom_call.1} parent=1 // pred_check_branch
      %253 = sbr.rel (0) target = $region141
    $region140: #{tpu_custom_call.1} parent=1 // pred_region
      %254 = dma.done [#allocation24], 1024
    $region141: #{tpu_custom_call.1} parent=1 // pred_fallthru
      _
    %v256 = vld [vmem:[%s1] sm:$0xff]
    %v257 = vld [vmem:[%s1 + $0x8] sm:$0xff]
    %v258 = vld [vmem:[%s1 + $0x10] sm:$0xff]
    %v259 = vld [vmem:[%s2] sm:$0xf]
    %v260 = vld [vmem:[%s2 + $0x4] sm:$0xf]
    %v261 = vld [vmem:[%s2 + $0x8] sm:$0xf]
    %v262 = vld [vmem:[#allocation5] sm:$0xf]
    %v263 = vld [vmem:[#allocation5 + $0x4] sm:$0xf]
    %v264 = vld [vmem:[%s4] sm:$0xff]
    %v265 = vld [vmem:[%s4 + $0x8] sm:$0xff]
    %v266 = vld [vmem:[#allocation2] sm:$0xff]
    %v267 = vld [vmem:[#allocation2 + $0x8] sm:$0xff]
    %v268 = vpack.c.bf16 %v267, %v266
    %v272 = vunpack.c.l.b16 %v259
    %v273 = vunpack.c.l.b16 %v260
    %v274 = vunpack.c.l.b16 %v261
    %v275 = vpack.c.b16 %v273, %v272
    %v276 = vpack.c.b16 %v274, %v274
    %vm277 = vcmask 130048
    %v279 = vsel %vm277, %v275, 0
    %v282 = vsel %vm277, %v276, 0
    %284 = vmatprep.subr.bf16.mxu0 0
    %285 = vmatpush1.bf16.msra.mxu0 %v268
    %286 = vmatprep.subr.bf16.mxu0 0
    %287 = vmatpush1.bf16.msra.mxu0 0
    %288 = vmatprep.subr.bf16.mxu0 0
    %289 = vmatpush1.bf16.msra.mxu0 0
    %290 = vmatprep.subr.bf16.mxu0 0
    %291 = vmatpush1.bf16.msra.mxu0 0
    %292 = vmatprep.subr.bf16.mxu0 0
    %293 = vmatpush1.bf16.msra.mxu0 0
    %294 = vmatprep.subr.bf16.mxu0 0
    %295 = vmatpush1.bf16.msra.mxu0 0
    %296 = vmatprep.subr.bf16.mxu0 0
    %297 = vmatpush1.bf16.msra.mxu0 0
    %298 = vmatprep.subr.bf16.mxu0 0
    %299 = vmatpush1.bf16.msra.mxu0 0
    %300 = vmatprep.subr.bf16.mxu0 0
    %301 = vmatpush1.bf16.msra.mxu0 0
    %302 = vmatprep.subr.bf16.mxu0 0
    %303 = vmatpush1.bf16.msra.mxu0 0
    %304 = vmatprep.subr.bf16.mxu0 0
    %305 = vmatpush1.bf16.msra.mxu0 0
    %306 = vmatprep.subr.bf16.mxu0 0
    %307 = vmatpush1.bf16.msra.mxu0 0
    %308 = vmatprep.subr.bf16.mxu0 0
    %309 = vmatpush1.bf16.msra.mxu0 0
    %310 = vmatprep.subr.bf16.mxu0 0
    %311 = vmatpush1.bf16.msra.mxu0 0
    %312 = vmatprep.subr.bf16.mxu0 0
    %313 = vmatpush1.bf16.msra.mxu0 0
    %314 = vmatprep.subr.bf16.mxu0 0
    %315 = vmatpush1.bf16.msra.mxu0 0
    %316 = vmatprep.mubr.bf16.mxu0 0
    %317 = vmatmul.mubr.bf16.gmra.mrb[0].mxu0 %v279
    %v318 = vpop.f32.mrb[0].mxu0
    %v319 = vadd.f32 0.0, %v318
    %v320 = vpop.f32.mrb[0].mxu0
    %v321 = vpop.f32.mrb[0].mxu0
    %v322 = vadd.f32 0.0, %v321
    %v323 = vpop.f32.mrb[0].mxu0
    %324 = vmatprep.mubr.bf16.mxu0 0
    %325 = vmatmul.mubr.bf16.gmra.mrb[0].mxu0 %v282
    %v326 = vpop.f32.mrb[0].mxu0
    %v327 = vadd.f32 0.0, %v326
    %v328 = vpop.f32.mrb[0].mxu0
    %v329 = vpop.f32.mrb[0].mxu0
    %v330 = vpop.f32.mrb[0].mxu0
    %331 = vdwg.mxu0
    %v332 = vpack.c.bf16 %v322, %v319
    %v333 = vpack.c.bf16 %v327, %v327
    %335 = vset.pattern.permute.xlu0 0
    %336 = vperm.xlu0 %335, %v256
    %v337 = vpop.permute.xlu0 %336
    %340 = vset.pattern.permute.xlu0 0
    %341 = vperm.xlu0 %340, %v257
    %v342 = vpop.permute.xlu0 %341
    %345 = vset.pattern.permute.xlu0 0
    %346 = vperm.xlu0 %345, %v258
    %v347 = vpop.permute.xlu0 %346
    %v349 = vmul.f32 %v319, %v337
    %v350 = vmul.f32 %v322, %v342
    %v351 = vmul.f32 %v327, %v347
    %v352 = vpack.c.bf16 %v350, %v349
    %v353 = vpack.c.bf16 %v351, %v351
    %354 = vset.pattern.permute.xlu0 1
    %355 = vperm.xlu0 %354, %v256
    %v356 = vpop.permute.xlu0 %355
    %358 = vset.pattern.permute.xlu0 1
    %359 = vperm.xlu0 %358, %v257
    %v360 = vpop.permute.xlu0 %359
    %362 = vset.pattern.permute.xlu0 1
    %363 = vperm.xlu0 %362, %v258
    %v364 = vpop.permute.xlu0 %363
    %v366 = vmul.f32 %v319, %v356
    %v367 = vmul.f32 %v322, %v360
    %v368 = vmul.f32 %v327, %v364
    %v369 = vpack.c.bf16 %v367, %v366
    %v370 = vpack.c.bf16 %v368, %v368
    %371 = vset.pattern.permute.xlu0 2
    %372 = vperm.xlu0 %371, %v256
    %v373 = vpop.permute.xlu0 %372
    %375 = vset.pattern.permute.xlu0 2
    %376 = vperm.xlu0 %375, %v257
    %v377 = vpop.permute.xlu0 %376
    %379 = vset.pattern.permute.xlu0 2
    %380 = vperm.xlu0 %379, %v258
    %v381 = vpop.permute.xlu0 %380
    %v383 = vmul.f32 %v319, %v373
    %v384 = vmul.f32 %v322, %v377
    %v385 = vmul.f32 %v327, %v381
    %v386 = vpack.c.bf16 %v384, %v383
    %v387 = vpack.c.bf16 %v385, %v385
    %388 = vset.pattern.permute.xlu0 3
    %389 = vperm.xlu0 %388, %v256
    %v390 = vpop.permute.xlu0 %389
    %392 = vset.pattern.permute.xlu0 3
    %393 = vperm.xlu0 %392, %v257
    %v394 = vpop.permute.xlu0 %393
    %396 = vset.pattern.permute.xlu0 3
    %397 = vperm.xlu0 %396, %v258
    %v398 = vpop.permute.xlu0 %397
    %v400 = vmul.f32 %v319, %v390
    %v401 = vmul.f32 %v322, %v394
    %v402 = vmul.f32 %v327, %v398
    %v403 = vpack.c.bf16 %v401, %v400
    %v404 = vpack.c.bf16 %v402, %v402
    %405 = vset.pattern.permute.xlu0 4
    %406 = vperm.xlu0 %405, %v256
    %v407 = vpop.permute.xlu0 %406
    %409 = vset.pattern.permute.xlu0 4
    %410 = vperm.xlu0 %409, %v257
    %v411 = vpop.permute.xlu0 %410
    %413 = vset.pattern.permute.xlu0 4
    %414 = vperm.xlu0 %413, %v258
    %v415 = vpop.permute.xlu0 %414
    %v417 = vmul.f32 %v319, %v407
    %v418 = vmul.f32 %v322, %v411
    %v419 = vmul.f32 %v327, %v415
    %v420 = vpack.c.bf16 %v418, %v417
    %v421 = vpack.c.bf16 %v419, %v419
    %422 = vset.pattern.permute.xlu0 5
    %423 = vperm.xlu0 %422, %v256
    %v424 = vpop.permute.xlu0 %423
    %426 = vset.pattern.permute.xlu0 5
    %427 = vperm.xlu0 %426, %v257
    %v428 = vpop.permute.xlu0 %427
    %430 = vset.pattern.permute.xlu0 5
    %431 = vperm.xlu0 %430, %v258
    %v432 = vpop.permute.xlu0 %431
    %v434 = vmul.f32 %v319, %v424
    %v435 = vmul.f32 %v322, %v428
    %v436 = vmul.f32 %v327, %v432
    %v437 = vpack.c.bf16 %v435, %v434
    %v438 = vpack.c.bf16 %v436, %v436
    %439 = vset.pattern.permute.xlu0 6
    %440 = vperm.xlu0 %439, %v256
    %v441 = vpop.permute.xlu0 %440
    %443 = vset.pattern.permute.xlu0 6
    %444 = vperm.xlu0 %443, %v257
    %v445 = vpop.permute.xlu0 %444
    %447 = vset.pattern.permute.xlu0 6
    %448 = vperm.xlu0 %447, %v258
    %v449 = vpop.permute.xlu0 %448
    %v451 = vmul.f32 %v319, %v441
    %v452 = vmul.f32 %v322, %v445
    %v453 = vmul.f32 %v327, %v449
    %v454 = vpack.c.bf16 %v452, %v451
    %v455 = vpack.c.bf16 %v453, %v453
    %456 = vset.pattern.permute.xlu0 7
    %457 = vperm.xlu0 %456, %v256
    %v458 = vpop.permute.xlu0 %457
    %460 = vset.pattern.permute.xlu0 7
    %461 = vperm.xlu0 %460, %v257
    %v462 = vpop.permute.xlu0 %461
    %464 = vset.pattern.permute.xlu0 7
    %465 = vperm.xlu0 %464, %v258
    %v466 = vpop.permute.xlu0 %465
    %v468 = vmul.f32 %v319, %v458
    %v469 = vmul.f32 %v322, %v462
    %v470 = vmul.f32 %v327, %v466
    %v471 = vpack.c.bf16 %v469, %v468
    %v472 = vpack.c.bf16 %v470, %v470
    %475 = vrot.lane.b32.xlu0 %v369, 16
    %v476 = vpop.permute.xlu0 %475
    %477 = vrot.lane.b32.xlu0 %v370, 16
    %v478 = vpop.permute.xlu0 %477
    %481 = vrot.lane.b32.xlu0 %v386, 32
    %v482 = vpop.permute.xlu0 %481
    %483 = vrot.lane.b32.xlu0 %v387, 32
    %v484 = vpop.permute.xlu0 %483
    %487 = vrot.lane.b32.xlu0 %v403, 48
    %v488 = vpop.permute.xlu0 %487
    %489 = vrot.lane.b32.xlu0 %v404, 48
    %v490 = vpop.permute.xlu0 %489
    %493 = vrot.lane.b32.xlu0 %v420, 64
    %v494 = vpop.permute.xlu0 %493
    %495 = vrot.lane.b32.xlu0 %v421, 64
    %v496 = vpop.permute.xlu0 %495
    %499 = vrot.lane.b32.xlu0 %v437, 80
    %v500 = vpop.permute.xlu0 %499
    %501 = vrot.lane.b32.xlu0 %v438, 80
    %v502 = vpop.permute.xlu0 %501
    %505 = vrot.lane.b32.xlu0 %v454, 96
    %v506 = vpop.permute.xlu0 %505
    %507 = vrot.lane.b32.xlu0 %v455, 96
    %v508 = vpop.permute.xlu0 %507
    %511 = vrot.lane.b32.xlu0 %v471, 112
    %v512 = vpop.permute.xlu0 %511
    %513 = vrot.lane.b32.xlu0 %v472, 112
    %v514 = vpop.permute.xlu0 %513
    %v517 = vsel %vm277, %v352, %v476
    %v520 = vsel %vm277, %v353, %v478
    %vm521 = vcmask 261120
    %v523 = vsel %vm521, %v517, %v482
    %v525 = vsel %vm521, %v520, %v484
    %vm526 = vcmask 392192
    %v528 = vsel %vm526, %v523, %v488
    %v530 = vsel %vm526, %v525, %v490
    %vm531 = vcmask 523264
    %v533 = vsel %vm531, %v528, %v494
    %v535 = vsel %vm531, %v530, %v496
    %vm536 = vcmask 654336
    %v538 = vsel %vm536, %v533, %v500
    %v540 = vsel %vm536, %v535, %v502
    %vm541 = vcmask 785408
    %v543 = vsel %vm541, %v538, %v506
    %v545 = vsel %vm541, %v540, %v508
    %vm546 = vcmask 916480
    %v548 = vsel %vm546, %v543, %v512
    %v551 = vsel %vm546, %v545, %v514
    %v553 = vld [vmem:[%s5] sm:$0xf]
    %v554 = vld [vmem:[%s5 + $0x4] sm:$0xf]
    %v555 = vld [vmem:[%s5 + $0x8] sm:$0xf]
    %v556 = vld [vmem:[%s5 + $0xc] sm:$0xf]
    %v557 = vld [vmem:[%s5 + $0x10] sm:$0xf]
    %v558 = vld [vmem:[%s5 + $0x14] sm:$0xf]
    %v559 = vld [vmem:[%s5 + $0x18] sm:$0xf]
    %v560 = vld [vmem:[%s5 + $0x1c] sm:$0xf]
    %v561 = vld [vmem:[%s5 + $0x20] sm:$0xf]
    %v562 = vld [vmem:[%s5 + $0x24] sm:$0xf]
    %v563 = vld [vmem:[%s5 + $0x28] sm:$0xf]
    %v564 = vld [vmem:[%s5 + $0x2c] sm:$0xf]
    %v565 = vld [vmem:[%s5 + $0x30] sm:$0xf]
    %v566 = vld [vmem:[%s5 + $0x34] sm:$0xf]
    %v567 = vld [vmem:[%s5 + $0x38] sm:$0xf]
    %v568 = vld [vmem:[%s5 + $0x3c] sm:$0xf]
    %v569 = vld [vmem:[#allocation7] sm:$0xf]
    %v570 = vld [vmem:[#allocation7 + $0x4] sm:$0xf]
    %v573 = vunpack.c.l.b16 %v569
    %v574 = vunpack.c.l.b16 %v570
    %v575 = vpack.c.b16 %v574, %v573
    %v578 = vsel %vm277, %v332, 0
    %v581 = vsel %vm277, %v333, 0
    %583 = vmatprep.subr.bf16.mxu0 0
    %584 = vmatpush1.bf16.msra.mxu0 %v575
    %585 = vmatprep.subr.bf16.mxu0 0
    %586 = vmatpush1.bf16.msra.mxu0 0
    %587 = vmatprep.subr.bf16.mxu0 0
    %588 = vmatpush1.bf16.msra.mxu0 0
    %589 = vmatprep.subr.bf16.mxu0 0
    %590 = vmatpush1.bf16.msra.mxu0 0
    %591 = vmatprep.subr.bf16.mxu0 0
    %592 = vmatpush1.bf16.msra.mxu0 0
    %593 = vmatprep.subr.bf16.mxu0 0
    %594 = vmatpush1.bf16.msra.mxu0 0
    %595 = vmatprep.subr.bf16.mxu0 0
    %596 = vmatpush1.bf16.msra.mxu0 0
    %597 = vmatprep.subr.bf16.mxu0 0
    %598 = vmatpush1.bf16.msra.mxu0 0
    %599 = vmatprep.subr.bf16.mxu0 0
    %600 = vmatpush1.bf16.msra.mxu0 0
    %601 = vmatprep.subr.bf16.mxu0 0
    %602 = vmatpush1.bf16.msra.mxu0 0
    %603 = vmatprep.subr.bf16.mxu0 0
    %604 = vmatpush1.bf16.msra.mxu0 0
    %605 = vmatprep.subr.bf16.mxu0 0
    %606 = vmatpush1.bf16.msra.mxu0 0
    %607 = vmatprep.subr.bf16.mxu0 0
    %608 = vmatpush1.bf16.msra.mxu0 0
    %609 = vmatprep.subr.bf16.mxu0 0
    %610 = vmatpush1.bf16.msra.mxu0 0
    %611 = vmatprep.subr.bf16.mxu0 0
    %612 = vmatpush1.bf16.msra.mxu0 0
    %613 = vmatprep.subr.bf16.mxu0 0
    %614 = vmatpush1.bf16.msra.mxu0 0
    %615 = vmatprep.mubr.bf16.mxu0 0
    %616 = vmatmul.mubr.bf16.gmra.mrb[0].mxu0 %v578
    %v617 = vpop.f32.mrb[0].mxu0
    %v618 = vadd.f32 0.0, %v617
    %v619 = vpop.f32.mrb[0].mxu0
    %v620 = vpop.f32.mrb[0].mxu0
    %v621 = vadd.f32 0.0, %v620
    %v622 = vpop.f32.mrb[0].mxu0
    %623 = vmatprep.mubr.bf16.mxu0 0
    %624 = vmatmul.mubr.bf16.gmra.mrb[0].mxu0 %v581
    %v625 = vpop.f32.mrb[0].mxu0
    %v626 = vadd.f32 0.0, %v625
    %v627 = vpop.f32.mrb[0].mxu0
    %v628 = vpop.f32.mrb[0].mxu0
    %v629 = vpop.f32.mrb[0].mxu0
    %630 = vdwg.mxu0
    %v647 = vunpack.c.l.b16 %v553
    %v648 = vunpack.c.l.b16 %v554
    %v649 = vunpack.c.l.b16 %v555
    %v650 = vunpack.c.l.b16 %v556
    %v651 = vunpack.c.l.b16 %v557
    %v652 = vunpack.c.l.b16 %v558
    %v653 = vunpack.c.l.b16 %v559
    %v654 = vunpack.c.l.b16 %v560
    %v655 = vunpack.c.l.b16 %v561
    %v656 = vunpack.c.l.b16 %v562
    %v657 = vunpack.c.l.b16 %v563
    %v658 = vunpack.c.l.b16 %v564
    %v659 = vunpack.c.l.b16 %v565
    %v660 = vunpack.c.l.b16 %v566
    %v661 = vunpack.c.l.b16 %v567
    %v662 = vunpack.c.l.b16 %v568
    %v663 = vpack.c.b16 %v648, %v647
    %v664 = vpack.c.b16 %v650, %v649
    %v665 = vpack.c.b16 %v652, %v651
    %v666 = vpack.c.b16 %v654, %v653
    %v667 = vpack.c.b16 %v656, %v655
    %v668 = vpack.c.b16 %v658, %v657
    %v669 = vpack.c.b16 %v660, %v659
    %v670 = vpack.c.b16 %v662, %v661
    %679 = vmatprep.subr.bf16.mxu0 0
    %680 = vmatpush1.bf16.msra.mxu0 %v663
    %681 = vmatprep.subr.bf16.mxu0 0
    %682 = vmatpush1.bf16.msra.mxu0 %v664
    %683 = vmatprep.subr.bf16.mxu0 0
    %684 = vmatpush1.bf16.msra.mxu0 %v665
    %685 = vmatprep.subr.bf16.mxu0 0
    %686 = vmatpush1.bf16.msra.mxu0 %v666
    %687 = vmatprep.subr.bf16.mxu0 0
    %688 = vmatpush1.bf16.msra.mxu0 %v667
    %689 = vmatprep.subr.bf16.mxu0 0
    %690 = vmatpush1.bf16.msra.mxu0 %v668
    %691 = vmatprep.subr.bf16.mxu0 0
    %692 = vmatpush1.bf16.msra.mxu0 %v669
    %693 = vmatprep.subr.bf16.mxu0 0
    %694 = vmatpush1.bf16.msra.mxu0 %v670
    %695 = vmatprep.subr.bf16.mxu0 0
    %696 = vmatpush1.bf16.msra.mxu0 0
    %697 = vmatprep.subr.bf16.mxu0 0
    %698 = vmatpush1.bf16.msra.mxu0 0
    %699 = vmatprep.subr.bf16.mxu0 0
    %700 = vmatpush1.bf16.msra.mxu0 0
    %701 = vmatprep.subr.bf16.mxu0 0
    %702 = vmatpush1.bf16.msra.mxu0 0
    %703 = vmatprep.subr.bf16.mxu0 0
    %704 = vmatpush1.bf16.msra.mxu0 0
    %705 = vmatprep.subr.bf16.mxu0 0
    %706 = vmatpush1.bf16.msra.mxu0 0
    %707 = vmatprep.subr.bf16.mxu0 0
    %708 = vmatpush1.bf16.msra.mxu0 0
    %709 = vmatprep.subr.bf16.mxu0 0
    %710 = vmatpush1.bf16.msra.mxu0 0
    %711 = vmatprep.mubr.bf16.mxu0 0
    %712 = vmatmul.mubr.bf16.gmra.mrb[0].mxu0 %v548
    %v713 = vpop.f32.mrb[0].mxu0
    %v714 = vadd.f32 %v618, %v713
    %v715 = vpop.f32.mrb[0].mxu0
    %v716 = vpop.f32.mrb[0].mxu0
    %v717 = vadd.f32 %v621, %v716
    %v718 = vpop.f32.mrb[0].mxu0
    %719 = vmatprep.mubr.bf16.mxu0 0
    %720 = vmatmul.mubr.bf16.gmra.mrb[0].mxu0 %v551
    %v721 = vpop.f32.mrb[0].mxu0
    %v722 = vadd.f32 %v626, %v721
    %v723 = vpop.f32.mrb[0].mxu0
    %v724 = vpop.f32.mrb[0].mxu0
    %v725 = vpop.f32.mrb[0].mxu0
    %726 = vdwg.mxu0
    %v727 = vpack.c.bf16 %v717, %v714
    %v728 = vpack.c.bf16 %v722, %v722
    %v731 = vunpack.c.l.b16 %v262
    %v732 = vunpack.c.l.b16 %v263
    %v733 = vpack.c.b16 %v732, %v731
    %vm734 = vcmask 195584
    %v736 = vsel %vm734, %v733, 0
    %vm738 = vcmask 1043456
    %v740 = vsel %vm738, %v728, 0
    %742 = vmatprep.subr.bf16.mxu0 0
    %743 = vmatpush1.bf16.msra.mxu0 %v727
    %744 = vmatprep.subr.bf16.mxu0 0
    %745 = vmatpush1.bf16.msra.mxu0 %v740
    %746 = vmatprep.subr.bf16.mxu0 0
    %747 = vmatpush1.bf16.msra.mxu0 0
    %748 = vmatprep.subr.bf16.mxu0 0
    %749 = vmatpush1.bf16.msra.mxu0 0
    %750 = vmatprep.subr.bf16.mxu0 0
    %751 = vmatpush1.bf16.msra.mxu0 0
    %752 = vmatprep.subr.bf16.mxu0 0
    %753 = vmatpush1.bf16.msra.mxu0 0
    %754 = vmatprep.subr.bf16.mxu0 0
    %755 = vmatpush1.bf16.msra.mxu0 0
    %756 = vmatprep.subr.bf16.mxu0 0
    %757 = vmatpush1.bf16.msra.mxu0 0
    %758 = vmatprep.subr.bf16.mxu0 0
    %759 = vmatpush1.bf16.msra.mxu0 0
    %760 = vmatprep.subr.bf16.mxu0 0
    %761 = vmatpush1.bf16.msra.mxu0 0
    %762 = vmatprep.subr.bf16.mxu0 0
    %763 = vmatpush1.bf16.msra.mxu0 0
    %764 = vmatprep.subr.bf16.mxu0 0
    %765 = vmatpush1.bf16.msra.mxu0 0
    %766 = vmatprep.subr.bf16.mxu0 0
    %767 = vmatpush1.bf16.msra.mxu0 0
    %768 = vmatprep.subr.bf16.mxu0 0
    %769 = vmatpush1.bf16.msra.mxu0 0
    %770 = vmatprep.subr.bf16.mxu0 0
    %771 = vmatpush1.bf16.msra.mxu0 0
    %772 = vmatprep.subr.bf16.mxu0 0
    %773 = vmatpush1.bf16.msra.mxu0 0
    %774 = vmatprep.mubr.bf16.mxu0 0
    %775 = vmatmul.mubr.bf16.gmra.mrb[0].mxu0 %v736
    %v776 = vpop.f32.mrb[0].mxu0
    %v777 = vadd.f32 0.0, %v776
    %v778 = vpop.f32.mrb[0].mxu0
    %v779 = vpop.f32.mrb[0].mxu0
    %v780 = vadd.f32 0.0, %v779
    %v781 = vpop.f32.mrb[0].mxu0
    %782 = vdwg.mxu0
    %784 = vset.pattern.permute.xlu0 0
    %785 = vperm.xlu0 %784, %v264
    %v786 = vpop.permute.xlu0 %785
    %789 = vset.pattern.permute.xlu0 0
    %790 = vperm.xlu0 %789, %v265
    %v791 = vpop.permute.xlu0 %790
    %v793 = vmul.f32 %v777, %v786
    %v794 = vmul.f32 %v780, %v791
    %v795 = vld [vmem:[#allocation8] sm:$0xf]
    %v796 = vld [vmem:[#allocation8 + $0x4] sm:$0xf]
    %v799 = vunpack.c.l.b16 %v795
    %v800 = vunpack.c.l.b16 %v796
    %v801 = vpack.c.b16 %v800, %v799
    %v804 = vsel %vm277, %v268, 0
    %806 = vmatprep.subr.bf16.mxu0 0
    %807 = vmatpush1.bf16.msra.mxu0 %v801
    %808 = vmatprep.subr.bf16.mxu0 0
    %809 = vmatpush1.bf16.msra.mxu0 0
    %810 = vmatprep.subr.bf16.mxu0 0
    %811 = vmatpush1.bf16.msra.mxu0 0
    %812 = vmatprep.subr.bf16.mxu0 0
    %813 = vmatpush1.bf16.msra.mxu0 0
    %814 = vmatprep.subr.bf16.mxu0 0
    %815 = vmatpush1.bf16.msra.mxu0 0
    %816 = vmatprep.subr.bf16.mxu0 0
    %817 = vmatpush1.bf16.msra.mxu0 0
    %818 = vmatprep.subr.bf16.mxu0 0
    %819 = vmatpush1.bf16.msra.mxu0 0
    %820 = vmatprep.subr.bf16.mxu0 0
    %821 = vmatpush1.bf16.msra.mxu0 0
    %822 = vmatprep.subr.bf16.mxu0 0
    %823 = vmatpush1.bf16.msra.mxu0 0
    %824 = vmatprep.subr.bf16.mxu0 0
    %825 = vmatpush1.bf16.msra.mxu0 0
    %826 = vmatprep.subr.bf16.mxu0 0
    %827 = vmatpush1.bf16.msra.mxu0 0
    %828 = vmatprep.subr.bf16.mxu0 0
    %829 = vmatpush1.bf16.msra.mxu0 0
    %830 = vmatprep.subr.bf16.mxu0 0
    %831 = vmatpush1.bf16.msra.mxu0 0
    %832 = vmatprep.subr.bf16.mxu0 0
    %833 = vmatpush1.bf16.msra.mxu0 0
    %834 = vmatprep.subr.bf16.mxu0 0
    %835 = vmatpush1.bf16.msra.mxu0 0
    %836 = vmatprep.subr.bf16.mxu0 0
    %837 = vmatpush1.bf16.msra.mxu0 0
    %838 = vmatprep.mubr.bf16.mxu0 0
    %839 = vmatmul.mubr.bf16.gmra.mrb[0].mxu0 %v804
    %v840 = vpop.f32.mrb[0].mxu0
    %v841 = vadd.f32 0.0, %v840
    %v842 = vpop.f32.mrb[0].mxu0
    %v843 = vpop.f32.mrb[0].mxu0
    %v844 = vadd.f32 0.0, %v843
    %v845 = vpop.f32.mrb[0].mxu0
    %846 = vdwg.mxu0
    %v847 = vadd.f32 %v793, %v841
    %v848 = vadd.f32 %v794, %v844
    %v849 = vld [vmem:[%s8] sm:$0x1]
    %v851 = vlaneseq
    %v852 = vshrl.u32 %v851, 7
    %v853 = vsub.s32 0, %v852
    %v854 = vrot.slane %v849, %v853
    %v856 = vadd.f32 %v847, %v854
    %v857 = vadd.f32 %v848, %v854
    %v858 = vmax.f32 %v856, 0.0
    %v859 = vmax.f32 %v857, 0.0
    %v860 = vpack.c.bf16 %v859, %v858
    %861 = vmatprep.subr.bf16.mxu0 0
    %862 = vmatpush1.bf16.msra.mxu0 %v860
    %863 = vmatprep.subr.bf16.mxu0 0
    %864 = vmatpush1.bf16.msra.mxu0 0
    %865 = vmatprep.subr.bf16.mxu0 0
    %866 = vmatpush1.bf16.msra.mxu0 0
    %867 = vmatprep.subr.bf16.mxu0 0
    %868 = vmatpush1.bf16.msra.mxu0 0
    %869 = vmatprep.subr.bf16.mxu0 0
    %870 = vmatpush1.bf16.msra.mxu0 0
    %871 = vmatprep.subr.bf16.mxu0 0
    %872 = vmatpush1.bf16.msra.mxu0 0
    %873 = vmatprep.subr.bf16.mxu0 0
    %874 = vmatpush1.bf16.msra.mxu0 0
    %875 = vmatprep.subr.bf16.mxu0 0
    %876 = vmatpush1.bf16.msra.mxu0 0
    %877 = vmatprep.subr.bf16.mxu0 0
    %878 = vmatpush1.bf16.msra.mxu0 0
    %879 = vmatprep.subr.bf16.mxu0 0
    %880 = vmatpush1.bf16.msra.mxu0 0
    %881 = vmatprep.subr.bf16.mxu0 0
    %882 = vmatpush1.bf16.msra.mxu0 0
    %883 = vmatprep.subr.bf16.mxu0 0
    %884 = vmatpush1.bf16.msra.mxu0 0
    %885 = vmatprep.subr.bf16.mxu0 0
    %886 = vmatpush1.bf16.msra.mxu0 0
    %887 = vmatprep.subr.bf16.mxu0 0
    %888 = vmatpush1.bf16.msra.mxu0 0
    %889 = vmatprep.subr.bf16.mxu0 0
    %890 = vmatpush1.bf16.msra.mxu0 0
    %891 = vmatprep.subr.bf16.mxu0 0
    %892 = vmatpush1.bf16.msra.mxu0 0
    %893 = vmatprep.mubr.bf16.mxu0 0
    %894 = vmatmul.mubr.bf16.gmra.mrb[0].mxu0 %v279
    %v895 = vpop.f32.mrb[0].mxu0
    %v896 = vadd.f32 0.0, %v895
    %v897 = vpop.f32.mrb[0].mxu0
    %v898 = vpop.f32.mrb[0].mxu0
    %v899 = vadd.f32 0.0, %v898
    %v900 = vpop.f32.mrb[0].mxu0
    %901 = vmatprep.mubr.bf16.mxu0 0
    %902 = vmatmul.mubr.bf16.gmra.mrb[0].mxu0 %v282
    %v903 = vpop.f32.mrb[0].mxu0
    %v904 = vadd.f32 0.0, %v903
    %v905 = vpop.f32.mrb[0].mxu0
    %v906 = vpop.f32.mrb[0].mxu0
    %v907 = vpop.f32.mrb[0].mxu0
    %908 = vdwg.mxu0
    %v909 = vpack.c.bf16 %v899, %v896
    %v910 = vpack.c.bf16 %v904, %v904
    %v911 = vmul.f32 %v896, %v337
    %v912 = vmul.f32 %v899, %v342
    %v913 = vmul.f32 %v904, %v347
    %v914 = vpack.c.bf16 %v912, %v911
    %v915 = vpack.c.bf16 %v913, %v913
    %v916 = vmul.f32 %v896, %v356
    %v917 = vmul.f32 %v899, %v360
    %v918 = vmul.f32 %v904, %v364
    %v919 = vpack.c.bf16 %v917, %v916
    %v920 = vpack.c.bf16 %v918, %v918
    %v921 = vmul.f32 %v896, %v373
    %v922 = vmul.f32 %v899, %v377
    %v923 = vmul.f32 %v904, %v381
    %v924 = vpack.c.bf16 %v922, %v921
    %v925 = vpack.c.bf16 %v923, %v923
    %v926 = vmul.f32 %v896, %v390
    %v927 = vmul.f32 %v899, %v394
    %v928 = vmul.f32 %v904, %v398
    %v929 = vpack.c.bf16 %v927, %v926
    %v930 = vpack.c.bf16 %v928, %v928
    %v931 = vmul.f32 %v896, %v407
    %v932 = vmul.f32 %v899, %v411
    %v933 = vmul.f32 %v904, %v415
    %v934 = vpack.c.bf16 %v932, %v931
    %v935 = vpack.c.bf16 %v933, %v933
    %v936 = vmul.f32 %v896, %v424
    %v937 = vmul.f32 %v899, %v428
    %v938 = vmul.f32 %v904, %v432
    %v939 = vpack.c.bf16 %v937, %v936
    %v940 = vpack.c.bf16 %v938, %v938
    %v941 = vmul.f32 %v896, %v441
    %v942 = vmul.f32 %v899, %v445
    %v943 = vmul.f32 %v904, %v449
    %v944 = vpack.c.bf16 %v942, %v941
    %v945 = vpack.c.bf16 %v943, %v943
    %v946 = vmul.f32 %v896, %v458
    %v947 = vmul.f32 %v899, %v462
    %v948 = vmul.f32 %v904, %v466
    %v949 = vpack.c.bf16 %v947, %v946
    %v950 = vpack.c.bf16 %v948, %v948
    %v951 = vld [vmem:[#allocation10] sm:$0xf]
    %v952 = vld [vmem:[#allocation10 + $0x4] sm:$0xf]
    %v953 = vld [vmem:[#allocation10 + $0x8] sm:$0xf]
    %v954 = vld [vmem:[#allocation10 + $0xc] sm:$0xf]
    %v955 = vld [vmem:[#allocation10 + $0x10] sm:$0xf]
    %v956 = vld [vmem:[#allocation10 + $0x14] sm:$0xf]
    %v957 = vld [vmem:[#allocation10 + $0x18] sm:$0xf]
    %v958 = vld [vmem:[#allocation10 + $0x1c] sm:$0xf]
    %v959 = vld [vmem:[#allocation10 + $0x20] sm:$0xf]
    %v960 = vld [vmem:[#allocation10 + $0x24] sm:$0xf]
    %v961 = vld [vmem:[#allocation10 + $0x28] sm:$0xf]
    %v962 = vld [vmem:[#allocation10 + $0x2c] sm:$0xf]
    %v963 = vld [vmem:[#allocation10 + $0x30] sm:$0xf]
    %v964 = vld [vmem:[#allocation10 + $0x34] sm:$0xf]
    %v965 = vld [vmem:[#allocation10 + $0x38] sm:$0xf]
    %v966 = vld [vmem:[#allocation10 + $0x3c] sm:$0xf]
    %v967 = vld [vmem:[#allocation10 + $0x40] sm:$0xf]
    %v968 = vld [vmem:[#allocation10 + $0x44] sm:$0xf]
    %v969 = vld [vmem:[#allocation10 + $0x48] sm:$0xf]
    %v970 = vld [vmem:[#allocation10 + $0x4c] sm:$0xf]
    %v971 = vld [vmem:[#allocation10 + $0x50] sm:$0xf]
    %v972 = vld [vmem:[#allocation10 + $0x54] sm:$0xf]
    %v973 = vld [vmem:[#allocation10 + $0x58] sm:$0xf]
    %v974 = vld [vmem:[#allocation10 + $0x5c] sm:$0xf]
    %v975 = vld [vmem:[#allocation10 + $0x60] sm:$0xf]
    %v976 = vld [vmem:[#allocation10 + $0x64] sm:$0xf]
    %v977 = vld [vmem:[#allocation10 + $0x68] sm:$0xf]
    %v978 = vld [vmem:[#allocation10 + $0x6c] sm:$0xf]
    %v979 = vld [vmem:[#allocation10 + $0x70] sm:$0xf]
    %v980 = vld [vmem:[#allocation10 + $0x74] sm:$0xf]
    %v981 = vld [vmem:[#allocation10 + $0x78] sm:$0xf]
    %v982 = vld [vmem:[#allocation10 + $0x7c] sm:$0xf]
    %v983 = vld [vmem:[#allocation10 + $0x80] sm:$0xf]
    %v984 = vld [vmem:[#allocation10 + $0x84] sm:$0xf]
    %v985 = vld [vmem:[#allocation10 + $0x88] sm:$0xf]
    %v986 = vld [vmem:[#allocation10 + $0x8c] sm:$0xf]
    %v987 = vld [vmem:[#allocation10 + $0x90] sm:$0xf]
    %v988 = vld [vmem:[#allocation10 + $0x94] sm:$0xf]
    %v989 = vld [vmem:[#allocation10 + $0x98] sm:$0xf]
    %v990 = vld [vmem:[#allocation10 + $0x9c] sm:$0xf]
    %v991 = vld [vmem:[#allocation10 + $0xa0] sm:$0xf]
    %v992 = vld [vmem:[#allocation10 + $0xa4] sm:$0xf]
    %v993 = vld [vmem:[#allocation10 + $0xa8] sm:$0xf]
    %v994 = vld [vmem:[#allocation10 + $0xac] sm:$0xf]
    %v995 = vld [vmem:[#allocation10 + $0xb0] sm:$0xf]
    %v996 = vld [vmem:[#allocation10 + $0xb4] sm:$0xf]
    %v997 = vld [vmem:[#allocation10 + $0xb8] sm:$0xf]
    %v998 = vld [vmem:[#allocation10 + $0xbc] sm:$0xf]
    %v999 = vld [vmem:[#allocation10 + $0xc0] sm:$0xf]
    %v1000 = vld [vmem:[#allocation10 + $0xc4] sm:$0xf]
    %v1001 = vld [vmem:[#allocation10 + $0xc8] sm:$0xf]
    %v1002 = vld [vmem:[#allocation10 + $0xcc] sm:$0xf]
    %v1003 = vld [vmem:[#allocation10 + $0xd0] sm:$0xf]
    %v1004 = vld [vmem:[#allocation10 + $0xd4] sm:$0xf]
    %v1005 = vld [vmem:[#allocation10 + $0xd8] sm:$0xf]
    %v1006 = vld [vmem:[#allocation10 + $0xdc] sm:$0xf]
    %v1007 = vld [vmem:[#allocation10 + $0xe0] sm:$0xf]
    %v1008 = vld [vmem:[#allocation10 + $0xe4] sm:$0xf]
    %v1009 = vld [vmem:[#allocation10 + $0xe8] sm:$0xf]
    %v1010 = vld [vmem:[#allocation10 + $0xec] sm:$0xf]
    %v1011 = vld [vmem:[#allocation10 + $0xf0] sm:$0xf]
    %v1012 = vld [vmem:[#allocation10 + $0xf4] sm:$0xf]
    %v1013 = vld [vmem:[#allocation10 + $0xf8] sm:$0xf]
    %v1014 = vld [vmem:[#allocation10 + $0xfc] sm:$0xf]
    %v1015 = vld [vmem:[#allocation10 + $0x100] sm:$0xf]
    %v1016 = vld [vmem:[#allocation10 + $0x104] sm:$0xf]
    %v1017 = vld [vmem:[#allocation10 + $0x108] sm:$0xf]
    %v1018 = vld [vmem:[#allocation10 + $0x10c] sm:$0xf]
    %v1019 = vld [vmem:[#allocation10 + $0x110] sm:$0xf]
    %v1020 = vld [vmem:[#allocation10 + $0x114] sm:$0xf]
    %v1021 = vld [vmem:[#allocation10 + $0x118] sm:$0xf]
    %v1022 = vld [vmem:[#allocation10 + $0x11c] sm:$0xf]
    %v1023 = vld [vmem:[#allocation10 + $0x120] sm:$0xf]
    %v1024 = vld [vmem:[#allocation10 + $0x124] sm:$0xf]
    %v1025 = vld [vmem:[#allocation10 + $0x128] sm:$0xf]
    %v1026 = vld [vmem:[#allocation10 + $0x12c] sm:$0xf]
    %v1027 = vld [vmem:[#allocation10 + $0x130] sm:$0xf]
    %v1028 = vld [vmem:[#allocation10 + $0x134] sm:$0xf]
    %v1029 = vld [vmem:[#allocation10 + $0x138] sm:$0xf]
    %v1030 = vld [vmem:[#allocation10 + $0x13c] sm:$0xf]
    %v1031 = vld [vmem:[#allocation10 + $0x140] sm:$0xf]
    %v1032 = vld [vmem:[#allocation10 + $0x144] sm:$0xf]
    %v1033 = vld [vmem:[#allocation10 + $0x148] sm:$0xf]
    %v1034 = vld [vmem:[#allocation10 + $0x14c] sm:$0xf]
    %v1035 = vld [vmem:[#allocation10 + $0x150] sm:$0xf]
    %v1036 = vld [vmem:[#allocation10 + $0x154] sm:$0xf]
    %v1037 = vld [vmem:[#allocation10 + $0x158] sm:$0xf]
    %v1038 = vld [vmem:[#allocation10 + $0x15c] sm:$0xf]
    %v1039 = vld [vmem:[#allocation10 + $0x160] sm:$0xf]
    %v1040 = vld [vmem:[#allocation10 + $0x164] sm:$0xf]
    %v1041 = vld [vmem:[#allocation10 + $0x168] sm:$0xf]
    %v1042 = vld [vmem:[#allocation10 + $0x16c] sm:$0xf]
    %v1043 = vld [vmem:[#allocation10 + $0x170] sm:$0xf]
    %v1044 = vld [vmem:[#allocation10 + $0x174] sm:$0xf]
    %v1045 = vld [vmem:[#allocation10 + $0x178] sm:$0xf]
    %v1046 = vld [vmem:[#allocation10 + $0x17c] sm:$0xf]
    %v1047 = vld [vmem:[#allocation10 + $0x180] sm:$0xf]
    %v1048 = vld [vmem:[#allocation10 + $0x184] sm:$0xf]
    %v1049 = vld [vmem:[#allocation10 + $0x188] sm:$0xf]
    %v1050 = vld [vmem:[#allocation10 + $0x18c] sm:$0xf]
    %v1051 = vld [vmem:[#allocation10 + $0x190] sm:$0xf]
    %v1052 = vld [vmem:[#allocation10 + $0x194] sm:$0xf]
    %v1053 = vld [vmem:[#allocation10 + $0x198] sm:$0xf]
    %v1054 = vld [vmem:[#allocation10 + $0x19c] sm:$0xf]
    %v1055 = vld [vmem:[#allocation10 + $0x1a0] sm:$0xf]
    %v1056 = vld [vmem:[#allocation10 + $0x1a4] sm:$0xf]
    %v1057 = vld [vmem:[#allocation10 + $0x1a8] sm:$0xf]
    %v1058 = vld [vmem:[#allocation10 + $0x1ac] sm:$0xf]
    %v1059 = vld [vmem:[#allocation10 + $0x1b0] sm:$0xf]
    %v1060 = vld [vmem:[#allocation10 + $0x1b4] sm:$0xf]
    %v1061 = vld [vmem:[#allocation10 + $0x1b8] sm:$0xf]
    %v1062 = vld [vmem:[#allocation10 + $0x1bc] sm:$0xf]
    %v1063 = vld [vmem:[#allocation10 + $0x1c0] sm:$0xf]
    %v1064 = vld [vmem:[#allocation10 + $0x1c4] sm:$0xf]
    %v1065 = vld [vmem:[#allocation10 + $0x1c8] sm:$0xf]
    %v1066 = vld [vmem:[#allocation10 + $0x1cc] sm:$0xf]
    %v1067 = vld [vmem:[#allocation10 + $0x1d0] sm:$0xf]
    %v1068 = vld [vmem:[#allocation10 + $0x1d4] sm:$0xf]
    %v1069 = vld [vmem:[#allocation10 + $0x1d8] sm:$0xf]
    %v1070 = vld [vmem:[#allocation10 + $0x1dc] sm:$0xf]
    %v1071 = vld [vmem:[#allocation10 + $0x1e0] sm:$0xf]
    %v1072 = vld [vmem:[#allocation10 + $0x1e4] sm:$0xf]
    %v1073 = vld [vmem:[#allocation10 + $0x1e8] sm:$0xf]
    %v1074 = vld [vmem:[#allocation10 + $0x1ec] sm:$0xf]
    %v1075 = vld [vmem:[#allocation10 + $0x1f0] sm:$0xf]
    %v1076 = vld [vmem:[#allocation10 + $0x1f4] sm:$0xf]
    %v1077 = vld [vmem:[#allocation10 + $0x1f8] sm:$0xf]
    %v1078 = vld [vmem:[#allocation10 + $0x1fc] sm:$0xf]
    %v1079 = vld [vmem:[#allocation11] sm:$0xf]
    %v1080 = vld [vmem:[#allocation11 + $0x4] sm:$0xf]
    %v1081 = vld [vmem:[#allocation11 + $0x8] sm:$0xf]
    %v1082 = vld [vmem:[#allocation11 + $0xc] sm:$0xf]
    %v1083 = vld [vmem:[#allocation11 + $0x10] sm:$0xf]
    %v1084 = vld [vmem:[#allocation11 + $0x14] sm:$0xf]
    %v1085 = vld [vmem:[#allocation11 + $0x18] sm:$0xf]
    %v1086 = vld [vmem:[#allocation11 + $0x1c] sm:$0xf]
    %v1087 = vld [vmem:[#allocation11 + $0x20] sm:$0xf]
    %v1088 = vld [vmem:[#allocation11 + $0x24] sm:$0xf]
    %v1089 = vld [vmem:[#allocation11 + $0x28] sm:$0xf]
    %v1090 = vld [vmem:[#allocation11 + $0x2c] sm:$0xf]
    %v1091 = vld [vmem:[#allocation11 + $0x30] sm:$0xf]
    %v1092 = vld [vmem:[#allocation11 + $0x34] sm:$0xf]
    %v1093 = vld [vmem:[#allocation11 + $0x38] sm:$0xf]
    %v1094 = vld [vmem:[#allocation11 + $0x3c] sm:$0xf]
    %v1111 = vunpack.c.l.b16 %v1079
    %v1112 = vunpack.c.l.b16 %v1080
    %v1113 = vunpack.c.l.b16 %v1081
    %v1114 = vunpack.c.l.b16 %v1082
    %v1115 = vunpack.c.l.b16 %v1083
    %v1116 = vunpack.c.l.b16 %v1084
    %v1117 = vunpack.c.l.b16 %v1085
    %v1118 = vunpack.c.l.b16 %v1086
    %v1119 = vunpack.c.l.b16 %v1087
    %v1120 = vunpack.c.l.b16 %v1088
    %v1121 = vunpack.c.l.b16 %v1089
    %v1122 = vunpack.c.l.b16 %v1090
    %v1123 = vunpack.c.l.b16 %v1091
    %v1124 = vunpack.c.l.b16 %v1092
    %v1125 = vunpack.c.l.b16 %v1093
    %v1126 = vunpack.c.l.b16 %v1094
    %v1127 = vpack.c.b16 %v1112, %v1111
    %v1128 = vpack.c.b16 %v1114, %v1113
    %v1129 = vpack.c.b16 %v1116, %v1115
    %v1130 = vpack.c.b16 %v1118, %v1117
    %v1131 = vpack.c.b16 %v1120, %v1119
    %v1132 = vpack.c.b16 %v1122, %v1121
    %v1133 = vpack.c.b16 %v1124, %v1123
    %v1134 = vpack.c.b16 %v1126, %v1125
    %1143 = vmatprep.subr.bf16.mxu0 0
    %1144 = vmatpush1.bf16.msra.mxu0 %v1127
    %1145 = vmatprep.subr.bf16.mxu0 0
    %1146 = vmatpush1.bf16.msra.mxu0 %v1128
    %1147 = vmatprep.subr.bf16.mxu0 0
    %1148 = vmatpush1.bf16.msra.mxu0 %v1129
    %1149 = vmatprep.subr.bf16.mxu0 0
    %1150 = vmatpush1.bf16.msra.mxu0 %v1130
    %1151 = vmatprep.subr.bf16.mxu0 0
    %1152 = vmatpush1.bf16.msra.mxu0 %v1131
    %1153 = vmatprep.subr.bf16.mxu0 0
    %1154 = vmatpush1.bf16.msra.mxu0 %v1132
    %1155 = vmatprep.subr.bf16.mxu0 0
    %1156 = vmatpush1.bf16.msra.mxu0 %v1133
    %1157 = vmatprep.subr.bf16.mxu0 0
    %1158 = vmatpush1.bf16.msra.mxu0 %v1134
    %1159 = vmatprep.subr.bf16.mxu0 0
    %1160 = vmatpush1.bf16.msra.mxu0 0
    %1161 = vmatprep.subr.bf16.mxu0 0
    %1162 = vmatpush1.bf16.msra.mxu0 0
    %1163 = vmatprep.subr.bf16.mxu0 0
    %1164 = vmatpush1.bf16.msra.mxu0 0
    %1165 = vmatprep.subr.bf16.mxu0 0
    %1166 = vmatpush1.bf16.msra.mxu0 0
    %1167 = vmatprep.subr.bf16.mxu0 0
    %1168 = vmatpush1.bf16.msra.mxu0 0
    %1169 = vmatprep.subr.bf16.mxu0 0
    %1170 = vmatpush1.bf16.msra.mxu0 0
    %1171 = vmatprep.subr.bf16.mxu0 0
    %1172 = vmatpush1.bf16.msra.mxu0 0
    %1173 = vmatprep.subr.bf16.mxu0 0
    %1174 = vmatpush1.bf16.msra.mxu0 0
    %1175 = vmatprep.mubr.bf16.mxu0 0
    %1176 = vmatmul.mubr.bf16.gmra.mrb[0].mxu0 %v909
    %v1177 = vpop.f32.mrb[0].mxu0
    %v1178 = vadd.f32 0.0, %v1177
    %v1179 = vpop.f32.mrb[0].mxu0
    %v1180 = vpop.f32.mrb[0].mxu0
    %v1181 = vadd.f32 0.0, %v1180
    %v1182 = vpop.f32.mrb[0].mxu0
    %1183 = vmatprep.mubr.bf16.mxu0 0
    %1184 = vmatmul.mubr.bf16.gmra.mrb[0].mxu0 %v910
    %v1185 = vpop.f32.mrb[0].mxu0
    %v1186 = vadd.f32 0.0, %v1185
    %v1187 = vpop.f32.mrb[0].mxu0
    %v1188 = vpop.f32.mrb[0].mxu0
    %v1189 = vpop.f32.mrb[0].mxu0
    %1190 = vdwg.mxu0
    %v1319 = vunpack.c.l.b16 %v951
    %v1320 = vunpack.c.l.b16 %v952
    %v1321 = vunpack.c.l.b16 %v953
    %v1322 = vunpack.c.l.b16 %v954
    %v1323 = vunpack.c.l.b16 %v955
    %v1324 = vunpack.c.l.b16 %v956
    %v1325 = vunpack.c.l.b16 %v957
    %v1326 = vunpack.c.l.b16 %v958
    %v1327 = vunpack.c.l.b16 %v959
    %v1328 = vunpack.c.l.b16 %v960
    %v1329 = vunpack.c.l.b16 %v961
    %v1330 = vunpack.c.l.b16 %v962
    %v1331 = vunpack.c.l.b16 %v963
    %v1332 = vunpack.c.l.b16 %v964
    %v1333 = vunpack.c.l.b16 %v965
    %v1334 = vunpack.c.l.b16 %v966
    %v1335 = vunpack.c.l.b16 %v967
    %v1336 = vunpack.c.l.b16 %v968
    %v1337 = vunpack.c.l.b16 %v969
    %v1338 = vunpack.c.l.b16 %v970
    %v1339 = vunpack.c.l.b16 %v971
    %v1340 = vunpack.c.l.b16 %v972
    %v1341 = vunpack.c.l.b16 %v973
    %v1342 = vunpack.c.l.b16 %v974
    %v1343 = vunpack.c.l.b16 %v975
    %v1344 = vunpack.c.l.b16 %v976
    %v1345 = vunpack.c.l.b16 %v977
    %v1346 = vunpack.c.l.b16 %v978
    %v1347 = vunpack.c.l.b16 %v979
    %v1348 = vunpack.c.l.b16 %v980
    %v1349 = vunpack.c.l.b16 %v981
    %v1350 = vunpack.c.l.b16 %v982
    %v1351 = vunpack.c.l.b16 %v983
    %v1352 = vunpack.c.l.b16 %v984
    %v1353 = vunpack.c.l.b16 %v985
    %v1354 = vunpack.c.l.b16 %v986
    %v1355 = vunpack.c.l.b16 %v987
    %v1356 = vunpack.c.l.b16 %v988
    %v1357 = vunpack.c.l.b16 %v989
    %v1358 = vunpack.c.l.b16 %v990
    %v1359 = vunpack.c.l.b16 %v991
    %v1360 = vunpack.c.l.b16 %v992
    %v1361 = vunpack.c.l.b16 %v993
    %v1362 = vunpack.c.l.b16 %v994
    %v1363 = vunpack.c.l.b16 %v995
    %v1364 = vunpack.c.l.b16 %v996
    %v1365 = vunpack.c.l.b16 %v997
    %v1366 = vunpack.c.l.b16 %v998
    %v1367 = vunpack.c.l.b16 %v999
    %v1368 = vunpack.c.l.b16 %v1000
    %v1369 = vunpack.c.l.b16 %v1001
    %v1370 = vunpack.c.l.b16 %v1002
    %v1371 = vunpack.c.l.b16 %v1003
    %v1372 = vunpack.c.l.b16 %v1004
    %v1373 = vunpack.c.l.b16 %v1005
    %v1374 = vunpack.c.l.b16 %v1006
    %v1375 = vunpack.c.l.b16 %v1007
    %v1376 = vunpack.c.l.b16 %v1008
    %v1377 = vunpack.c.l.b16 %v1009
    %v1378 = vunpack.c.l.b16 %v1010
    %v1379 = vunpack.c.l.b16 %v1011
    %v1380 = vunpack.c.l.b16 %v1012
    %v1381 = vunpack.c.l.b16 %v1013
    %v1382 = vunpack.c.l.b16 %v1014
    %v1383 = vunpack.c.l.b16 %v1015
    %v1384 = vunpack.c.l.b16 %v1016
    %v1385 = vunpack.c.l.b16 %v1017
    %v1386 = vunpack.c.l.b16 %v1018
    %v1387 = vunpack.c.l.b16 %v1019
    %v1388 = vunpack.c.l.b16 %v1020
    %v1389 = vunpack.c.l.b16 %v1021
    %v1390 = vunpack.c.l.b16 %v1022
    %v1391 = vunpack.c.l.b16 %v1023
    %v1392 = vunpack.c.l.b16 %v1024
    %v1393 = vunpack.c.l.b16 %v1025
    %v1394 = vunpack.c.l.b16 %v1026
    %v1395 = vunpack.c.l.b16 %v1027
    %v1396 = vunpack.c.l.b16 %v1028
    %v1397 = vunpack.c.l.b16 %v1029
    %v1398 = vunpack.c.l.b16 %v1030
    %v1399 = vunpack.c.l.b16 %v1031
    %v1400 = vunpack.c.l.b16 %v1032
    %v1401 = vunpack.c.l.b16 %v1033
    %v1402 = vunpack.c.l.b16 %v1034
    %v1403 = vunpack.c.l.b16 %v1035
    %v1404 = vunpack.c.l.b16 %v1036
    %v1405 = vunpack.c.l.b16 %v1037
    %v1406 = vunpack.c.l.b16 %v1038
    %v1407 = vunpack.c.l.b16 %v1039
    %v1408 = vunpack.c.l.b16 %v1040
    %v1409 = vunpack.c.l.b16 %v1041
    %v1410 = vunpack.c.l.b16 %v1042
    %v1411 = vunpack.c.l.b16 %v1043
    %v1412 = vunpack.c.l.b16 %v1044
    %v1413 = vunpack.c.l.b16 %v1045
    %v1414 = vunpack.c.l.b16 %v1046
    %v1415 = vunpack.c.l.b16 %v1047
    %v1416 = vunpack.c.l.b16 %v1048
    %v1417 = vunpack.c.l.b16 %v1049
    %v1418 = vunpack.c.l.b16 %v1050
    %v1419 = vunpack.c.l.b16 %v1051
    %v1420 = vunpack.c.l.b16 %v1052
    %v1421 = vunpack.c.l.b16 %v1053
    %v1422 = vunpack.c.l.b16 %v1054
    %v1423 = vunpack.c.l.b16 %v1055
    %v1424 = vunpack.c.l.b16 %v1056
    %v1425 = vunpack.c.l.b16 %v1057
    %v1426 = vunpack.c.l.b16 %v1058
    %v1427 = vunpack.c.l.b16 %v1059
    %v1428 = vunpack.c.l.b16 %v1060
    %v1429 = vunpack.c.l.b16 %v1061
    %v1430 = vunpack.c.l.b16 %v1062
    %v1431 = vunpack.c.l.b16 %v1063
    %v1432 = vunpack.c.l.b16 %v1064
    %v1433 = vunpack.c.l.b16 %v1065
    %v1434 = vunpack.c.l.b16 %v1066
    %v1435 = vunpack.c.l.b16 %v1067
    %v1436 = vunpack.c.l.b16 %v1068
    %v1437 = vunpack.c.l.b16 %v1069
    %v1438 = vunpack.c.l.b16 %v1070
    %v1439 = vunpack.c.l.b16 %v1071
    %v1440 = vunpack.c.l.b16 %v1072
    %v1441 = vunpack.c.l.b16 %v1073
    %v1442 = vunpack.c.l.b16 %v1074
    %v1443 = vunpack.c.l.b16 %v1075
    %v1444 = vunpack.c.l.b16 %v1076
    %v1445 = vunpack.c.l.b16 %v1077
    %v1446 = vunpack.c.l.b16 %v1078
    %v1447 = vpack.c.b16 %v1320, %v1319
    %v1448 = vpack.c.b16 %v1322, %v1321
    %v1449 = vpack.c.b16 %v1324, %v1323
    %v1450 = vpack.c.b16 %v1326, %v1325
    %v1451 = vpack.c.b16 %v1328, %v1327
    %v1452 = vpack.c.b16 %v1330, %v1329
    %v1453 = vpack.c.b16 %v1332, %v1331
    %v1454 = vpack.c.b16 %v1334, %v1333
    %v1455 = vpack.c.b16 %v1336, %v1335
    %v1456 = vpack.c.b16 %v1338, %v1337
    %v1457 = vpack.c.b16 %v1340, %v1339
    %v1458 = vpack.c.b16 %v1342, %v1341
    %v1459 = vpack.c.b16 %v1344, %v1343
    %v1460 = vpack.c.b16 %v1346, %v1345
    %v1461 = vpack.c.b16 %v1348, %v1347
    %v1462 = vpack.c.b16 %v1350, %v1349
    %v1463 = vpack.c.b16 %v1352, %v1351
    %v1464 = vpack.c.b16 %v1354, %v1353
    %v1465 = vpack.c.b16 %v1356, %v1355
    %v1466 = vpack.c.b16 %v1358, %v1357
    %v1467 = vpack.c.b16 %v1360, %v1359
    %v1468 = vpack.c.b16 %v1362, %v1361
    %v1469 = vpack.c.b16 %v1364, %v1363
    %v1470 = vpack.c.b16 %v1366, %v1365
    %v1471 = vpack.c.b16 %v1368, %v1367
    %v1472 = vpack.c.b16 %v1370, %v1369
    %v1473 = vpack.c.b16 %v1372, %v1371
    %v1474 = vpack.c.b16 %v1374, %v1373
    %v1475 = vpack.c.b16 %v1376, %v1375
    %v1476 = vpack.c.b16 %v1378, %v1377
    %v1477 = vpack.c.b16 %v1380, %v1379
    %v1478 = vpack.c.b16 %v1382, %v1381
    %v1479 = vpack.c.b16 %v1384, %v1383
    %v1480 = vpack.c.b16 %v1386, %v1385
    %v1481 = vpack.c.b16 %v1388, %v1387
    %v1482 = vpack.c.b16 %v1390, %v1389
    %v1483 = vpack.c.b16 %v1392, %v1391
    %v1484 = vpack.c.b16 %v1394, %v1393
    %v1485 = vpack.c.b16 %v1396, %v1395
    %v1486 = vpack.c.b16 %v1398, %v1397
    %v1487 = vpack.c.b16 %v1400, %v1399
    %v1488 = vpack.c.b16 %v1402, %v1401
    %v1489 = vpack.c.b16 %v1404, %v1403
    %v1490 = vpack.c.b16 %v1406, %v1405
    %v1491 = vpack.c.b16 %v1408, %v1407
    %v1492 = vpack.c.b16 %v1410, %v1409
    %v1493 = vpack.c.b16 %v1412, %v1411
    %v1494 = vpack.c.b16 %v1414, %v1413
    %v1495 = vpack.c.b16 %v1416, %v1415
    %v1496 = vpack.c.b16 %v1418, %v1417
    %v1497 = vpack.c.b16 %v1420, %v1419
    %v1498 = vpack.c.b16 %v1422, %v1421
    %v1499 = vpack.c.b16 %v1424, %v1423
    %v1500 = vpack.c.b16 %v1426, %v1425
    %v1501 = vpack.c.b16 %v1428, %v1427
    %v1502 = vpack.c.b16 %v1430, %v1429
    %v1503 = vpack.c.b16 %v1432, %v1431
    %v1504 = vpack.c.b16 %v1434, %v1433
    %v1505 = vpack.c.b16 %v1436, %v1435
    %v1506 = vpack.c.b16 %v1438, %v1437
    %v1507 = vpack.c.b16 %v1440, %v1439
    %v1508 = vpack.c.b16 %v1442, %v1441
    %v1509 = vpack.c.b16 %v1444, %v1443
    %v1510 = vpack.c.b16 %v1446, %v1445
    %1575 = vmatprep.subr.bf16.mxu0 0
    %1576 = vmatpush1.bf16.msra.mxu0 %v1447
    %1577 = vmatprep.subr.bf16.mxu0 0
    %1578 = vmatpush1.bf16.msra.mxu0 %v1448
    %1579 = vmatprep.subr.bf16.mxu0 0
    %1580 = vmatpush1.bf16.msra.mxu0 %v1449
    %1581 = vmatprep.subr.bf16.mxu0 0
    %1582 = vmatpush1.bf16.msra.mxu0 %v1450
    %1583 = vmatprep.subr.bf16.mxu0 0
    %1584 = vmatpush1.bf16.msra.mxu0 %v1451
    %1585 = vmatprep.subr.bf16.mxu0 0
    %1586 = vmatpush1.bf16.msra.mxu0 %v1452
    %1587 = vmatprep.subr.bf16.mxu0 0
    %1588 = vmatpush1.bf16.msra.mxu0 %v1453
    %1589 = vmatprep.subr.bf16.mxu0 0
    %1590 = vmatpush1.bf16.msra.mxu0 %v1454
    %1591 = vmatprep.subr.bf16.mxu0 0
    %1592 = vmatpush1.bf16.msra.mxu0 %v1455
    %1593 = vmatprep.subr.bf16.mxu0 0
    %1594 = vmatpush1.bf16.msra.mxu0 %v1456
    %1595 = vmatprep.subr.bf16.mxu0 0
    %1596 = vmatpush1.bf16.msra.mxu0 %v1457
    %1597 = vmatprep.subr.bf16.mxu0 0
    %1598 = vmatpush1.bf16.msra.mxu0 %v1458
    %1599 = vmatprep.subr.bf16.mxu0 0
    %1600 = vmatpush1.bf16.msra.mxu0 %v1459
    %1601 = vmatprep.subr.bf16.mxu0 0
    %1602 = vmatpush1.bf16.msra.mxu0 %v1460
    %1603 = vmatprep.subr.bf16.mxu0 0
    %1604 = vmatpush1.bf16.msra.mxu0 %v1461
    %1605 = vmatprep.subr.bf16.mxu0 0
    %1606 = vmatpush1.bf16.msra.mxu0 %v1462
    %1607 = vmatprep.mubr.bf16.mxu0 %v919
    %1608 = vmatmul.mubr.bf16.gmra.mrb[0].mxu0 %v914
    %v1609 = vpop.f32.mrb[0].mxu0
    %v1610 = vadd.f32 %v1178, %v1609
    %v1611 = vpop.f32.mrb[0].mxu0
    %v1612 = vpop.f32.mrb[0].mxu0
    %v1613 = vadd.f32 %v1181, %v1612
    %v1614 = vpop.f32.mrb[0].mxu0
    %1615 = vmatprep.mubr.bf16.mxu0 %v920
    %1616 = vmatmul.mubr.bf16.gmra.mrb[0].mxu0 %v915
    %v1617 = vpop.f32.mrb[0].mxu0
    %v1618 = vadd.f32 %v1186, %v1617
    %v1619 = vpop.f32.mrb[0].mxu0
    %v1620 = vpop.f32.mrb[0].mxu0
    %v1621 = vpop.f32.mrb[0].mxu0
    %1622 = vdwg.mxu0
    %1623 = vmatprep.subr.bf16.mxu0 0
    %1624 = vmatpush1.bf16.msra.mxu0 %v1463
    %1625 = vmatprep.subr.bf16.mxu0 0
    %1626 = vmatpush1.bf16.msra.mxu0 %v1464
    %1627 = vmatprep.subr.bf16.mxu0 0
    %1628 = vmatpush1.bf16.msra.mxu0 %v1465
    %1629 = vmatprep.subr.bf16.mxu0 0
    %1630 = vmatpush1.bf16.msra.mxu0 %v1466
    %1631 = vmatprep.subr.bf16.mxu0 0
    %1632 = vmatpush1.bf16.msra.mxu0 %v1467
    %1633 = vmatprep.subr.bf16.mxu0 0
    %1634 = vmatpush1.bf16.msra.mxu0 %v1468
    %1635 = vmatprep.subr.bf16.mxu0 0
    %1636 = vmatpush1.bf16.msra.mxu0 %v1469
    %1637 = vmatprep.subr.bf16.mxu0 0
    %1638 = vmatpush1.bf16.msra.mxu0 %v1470
    %1639 = vmatprep.subr.bf16.mxu0 0
    %1640 = vmatpush1.bf16.msra.mxu0 %v1471
    %1641 = vmatprep.subr.bf16.mxu0 0
    %1642 = vmatpush1.bf16.msra.mxu0 %v1472
    %1643 = vmatprep.subr.bf16.mxu0 0
    %1644 = vmatpush1.bf16.msra.mxu0 %v1473
    %1645 = vmatprep.subr.bf16.mxu0 0
    %1646 = vmatpush1.bf16.msra.mxu0 %v1474
    %1647 = vmatprep.subr.bf16.mxu0 0
    %1648 = vmatpush1.bf16.msra.mxu0 %v1475
    %1649 = vmatprep.subr.bf16.mxu0 0
    %1650 = vmatpush1.bf16.msra.mxu0 %v1476
    %1651 = vmatprep.subr.bf16.mxu0 0
    %1652 = vmatpush1.bf16.msra.mxu0 %v1477
    %1653 = vmatprep.subr.bf16.mxu0 0
    %1654 = vmatpush1.bf16.msra.mxu0 %v1478
    %1655 = vmatprep.mubr.bf16.mxu0 %v929
    %1656 = vmatmul.mubr.bf16.gmra.mrb[0].mxu0 %v924
    %v1657 = vpop.f32.mrb[0].mxu0
    %v1658 = vadd.f32 %v1610, %v1657
    %v1659 = vpop.f32.mrb[0].mxu0
    %v1660 = vpop.f32.mrb[0].mxu0
    %v1661 = vadd.f32 %v1613, %v1660
    %v1662 = vpop.f32.mrb[0].mxu0
    %1663 = vmatprep.mubr.bf16.mxu0 %v930
    %1664 = vmatmul.mubr.bf16.gmra.mrb[0].mxu0 %v925
    %v1665 = vpop.f32.mrb[0].mxu0
    %v1666 = vadd.f32 %v1618, %v1665
    %v1667 = vpop.f32.mrb[0].mxu0
    %v1668 = vpop.f32.mrb[0].mxu0
    %v1669 = vpop.f32.mrb[0].mxu0
    %1670 = vdwg.mxu0
    %1671 = vmatprep.subr.bf16.mxu0 0
    %1672 = vmatpush1.bf16.msra.mxu0 %v1479
    %1673 = vmatprep.subr.bf16.mxu0 0
    %1674 = vmatpush1.bf16.msra.mxu0 %v1480
    %1675 = vmatprep.subr.bf16.mxu0 0
    %1676 = vmatpush1.bf16.msra.mxu0 %v1481
    %1677 = vmatprep.subr.bf16.mxu0 0
    %1678 = vmatpush1.bf16.msra.mxu0 %v1482
    %1679 = vmatprep.subr.bf16.mxu0 0
    %1680 = vmatpush1.bf16.msra.mxu0 %v1483
    %1681 = vmatprep.subr.bf16.mxu0 0
    %1682 = vmatpush1.bf16.msra.mxu0 %v1484
    %1683 = vmatprep.subr.bf16.mxu0 0
    %1684 = vmatpush1.bf16.msra.mxu0 %v1485
    %1685 = vmatprep.subr.bf16.mxu0 0
    %1686 = vmatpush1.bf16.msra.mxu0 %v1486
    %1687 = vmatprep.subr.bf16.mxu0 0
    %1688 = vmatpush1.bf16.msra.mxu0 %v1487
    %1689 = vmatprep.subr.bf16.mxu0 0
    %1690 = vmatpush1.bf16.msra.mxu0 %v1488
    %1691 = vmatprep.subr.bf16.mxu0 0
    %1692 = vmatpush1.bf16.msra.mxu0 %v1489
    %1693 = vmatprep.subr.bf16.mxu0 0
    %1694 = vmatpush1.bf16.msra.mxu0 %v1490
    %1695 = vmatprep.subr.bf16.mxu0 0
    %1696 = vmatpush1.bf16.msra.mxu0 %v1491
    %1697 = vmatprep.subr.bf16.mxu0 0
    %1698 = vmatpush1.bf16.msra.mxu0 %v1492
    %1699 = vmatprep.subr.bf16.mxu0 0
    %1700 = vmatpush1.bf16.msra.mxu0 %v1493
    %1701 = vmatprep.subr.bf16.mxu0 0
    %1702 = vmatpush1.bf16.msra.mxu0 %v1494
    %1703 = vmatprep.mubr.bf16.mxu0 %v939
    %1704 = vmatmul.mubr.bf16.gmra.mrb[0].mxu0 %v934
    %v1705 = vpop.f32.mrb[0].mxu0
    %v1706 = vadd.f32 %v1658, %v1705
    %v1707 = vpop.f32.mrb[0].mxu0
    %v1708 = vpop.f32.mrb[0].mxu0
    %v1709 = vadd.f32 %v1661, %v1708
    %v1710 = vpop.f32.mrb[0].mxu0
    %1711 = vmatprep.mubr.bf16.mxu0 %v940
    %1712 = vmatmul.mubr.bf16.gmra.mrb[0].mxu0 %v935
    %v1713 = vpop.f32.mrb[0].mxu0
    %v1714 = vadd.f32 %v1666, %v1713
    %v1715 = vpop.f32.mrb[0].mxu0
    %v1716 = vpop.f32.mrb[0].mxu0
    %v1717 = vpop.f32.mrb[0].mxu0
    %1718 = vdwg.mxu0
    %1719 = vmatprep.subr.bf16.mxu0 0
    %1720 = vmatpush1.bf16.msra.mxu0 %v1495
    %1721 = vmatprep.subr.bf16.mxu0 0
    %1722 = vmatpush1.bf16.msra.mxu0 %v1496
    %1723 = vmatprep.subr.bf16.mxu0 0
    %1724 = vmatpush1.bf16.msra.mxu0 %v1497
    %1725 = vmatprep.subr.bf16.mxu0 0
    %1726 = vmatpush1.bf16.msra.mxu0 %v1498
    %1727 = vmatprep.subr.bf16.mxu0 0
    %1728 = vmatpush1.bf16.msra.mxu0 %v1499
    %1729 = vmatprep.subr.bf16.mxu0 0
    %1730 = vmatpush1.bf16.msra.mxu0 %v1500
    %1731 = vmatprep.subr.bf16.mxu0 0
    %1732 = vmatpush1.bf16.msra.mxu0 %v1501
    %1733 = vmatprep.subr.bf16.mxu0 0
    %1734 = vmatpush1.bf16.msra.mxu0 %v1502
    %1735 = vmatprep.subr.bf16.mxu0 0
    %1736 = vmatpush1.bf16.msra.mxu0 %v1503
    %1737 = vmatprep.subr.bf16.mxu0 0
    %1738 = vmatpush1.bf16.msra.mxu0 %v1504
    %1739 = vmatprep.subr.bf16.mxu0 0
    %1740 = vmatpush1.bf16.msra.mxu0 %v1505
    %1741 = vmatprep.subr.bf16.mxu0 0
    %1742 = vmatpush1.bf16.msra.mxu0 %v1506
    %1743 = vmatprep.subr.bf16.mxu0 0
    %1744 = vmatpush1.bf16.msra.mxu0 %v1507
    %1745 = vmatprep.subr.bf16.mxu0 0
    %1746 = vmatpush1.bf16.msra.mxu0 %v1508
    %1747 = vmatprep.subr.bf16.mxu0 0
    %1748 = vmatpush1.bf16.msra.mxu0 %v1509
    %1749 = vmatprep.subr.bf16.mxu0 0
    %1750 = vmatpush1.bf16.msra.mxu0 %v1510
    %1751 = vmatprep.mubr.bf16.mxu0 %v949
    %1752 = vmatmul.mubr.bf16.gmra.mrb[0].mxu0 %v944
    %v1753 = vpop.f32.mrb[0].mxu0
    %v1754 = vadd.f32 %v1706, %v1753
    %v1755 = vpop.f32.mrb[0].mxu0
    %v1756 = vpop.f32.mrb[0].mxu0
    %v1757 = vadd.f32 %v1709, %v1756
    %v1758 = vpop.f32.mrb[0].mxu0
    %1759 = vmatprep.mubr.bf16.mxu0 %v950
    %1760 = vmatmul.mubr.bf16.gmra.mrb[0].mxu0 %v945
    %v1761 = vpop.f32.mrb[0].mxu0
    %v1762 = vadd.f32 %v1714, %v1761
    %v1763 = vpop.f32.mrb[0].mxu0
    %v1764 = vpop.f32.mrb[0].mxu0
    %v1765 = vpop.f32.mrb[0].mxu0
    %1766 = vdwg.mxu0
    %v1767 = vpack.c.bf16 %v1757, %v1754
    %v1768 = vpack.c.bf16 %v1762, %v1762
    %v1770 = vsel %vm738, %v1768, 0
    %1772 = vmatprep.subr.bf16.mxu0 0
    %1773 = vmatpush1.bf16.msra.mxu0 %v1767
    %1774 = vmatprep.subr.bf16.mxu0 0
    %1775 = vmatpush1.bf16.msra.mxu0 %v1770
    %1776 = vmatprep.subr.bf16.mxu0 0
    %1777 = vmatpush1.bf16.msra.mxu0 0
    %1778 = vmatprep.subr.bf16.mxu0 0
    %1779 = vmatpush1.bf16.msra.mxu0 0
    %1780 = vmatprep.subr.bf16.mxu0 0
    %1781 = vmatpush1.bf16.msra.mxu0 0
    %1782 = vmatprep.subr.bf16.mxu0 0
    %1783 = vmatpush1.bf16.msra.mxu0 0
    %1784 = vmatprep.subr.bf16.mxu0 0
    %1785 = vmatpush1.bf16.msra.mxu0 0
    %1786 = vmatprep.subr.bf16.mxu0 0
    %1787 = vmatpush1.bf16.msra.mxu0 0
    %1788 = vmatprep.subr.bf16.mxu0 0
    %1789 = vmatpush1.bf16.msra.mxu0 0
    %1790 = vmatprep.subr.bf16.mxu0 0
    %1791 = vmatpush1.bf16.msra.mxu0 0
    %1792 = vmatprep.subr.bf16.mxu0 0
    %1793 = vmatpush1.bf16.msra.mxu0 0
    %1794 = vmatprep.subr.bf16.mxu0 0
    %1795 = vmatpush1.bf16.msra.mxu0 0
    %1796 = vmatprep.subr.bf16.mxu0 0
    %1797 = vmatpush1.bf16.msra.mxu0 0
    %1798 = vmatprep.subr.bf16.mxu0 0
    %1799 = vmatpush1.bf16.msra.mxu0 0
    %1800 = vmatprep.subr.bf16.mxu0 0
    %1801 = vmatpush1.bf16.msra.mxu0 0
    %1802 = vmatprep.subr.bf16.mxu0 0
    %1803 = vmatpush1.bf16.msra.mxu0 0
    %1804 = vmatprep.mubr.bf16.mxu0 0
    %1805 = vmatmul.mubr.bf16.gmra.mrb[0].mxu0 %v736
    %v1806 = vpop.f32.mrb[0].mxu0
    %v1807 = vadd.f32 0.0, %v1806
    %v1808 = vpop.f32.mrb[0].mxu0
    %v1809 = vpop.f32.mrb[0].mxu0
    %v1810 = vadd.f32 0.0, %v1809
    %v1811 = vpop.f32.mrb[0].mxu0
    %1812 = vdwg.mxu0
    %v1813 = vmul.f32 %v1807, %v786
    %v1814 = vmul.f32 %v1810, %v791
    %v1815 = vld [vmem:[#allocation13] sm:$0xf]
    %v1816 = vld [vmem:[#allocation13 + $0x4] sm:$0xf]
    %v1817 = vld [vmem:[#allocation13 + $0x8] sm:$0xf]
    %v1818 = vld [vmem:[#allocation13 + $0xc] sm:$0xf]
    %v1819 = vld [vmem:[#allocation13 + $0x10] sm:$0xf]
    %v1820 = vld [vmem:[#allocation13 + $0x14] sm:$0xf]
    %v1821 = vld [vmem:[#allocation13 + $0x18] sm:$0xf]
    %v1822 = vld [vmem:[#allocation13 + $0x1c] sm:$0xf]
    %v1823 = vld [vmem:[#allocation13 + $0x20] sm:$0xf]
    %v1824 = vld [vmem:[#allocation13 + $0x24] sm:$0xf]
    %v1825 = vld [vmem:[#allocation13 + $0x28] sm:$0xf]
    %v1826 = vld [vmem:[#allocation13 + $0x2c] sm:$0xf]
    %v1827 = vld [vmem:[#allocation13 + $0x30] sm:$0xf]
    %v1828 = vld [vmem:[#allocation13 + $0x34] sm:$0xf]
    %v1829 = vld [vmem:[#allocation13 + $0x38] sm:$0xf]
    %v1830 = vld [vmem:[#allocation13 + $0x3c] sm:$0xf]
    %v1847 = vunpack.c.l.b16 %v1815
    %v1848 = vunpack.c.l.b16 %v1816
    %v1849 = vunpack.c.l.b16 %v1817
    %v1850 = vunpack.c.l.b16 %v1818
    %v1851 = vunpack.c.l.b16 %v1819
    %v1852 = vunpack.c.l.b16 %v1820
    %v1853 = vunpack.c.l.b16 %v1821
    %v1854 = vunpack.c.l.b16 %v1822
    %v1855 = vunpack.c.l.b16 %v1823
    %v1856 = vunpack.c.l.b16 %v1824
    %v1857 = vunpack.c.l.b16 %v1825
    %v1858 = vunpack.c.l.b16 %v1826
    %v1859 = vunpack.c.l.b16 %v1827
    %v1860 = vunpack.c.l.b16 %v1828
    %v1861 = vunpack.c.l.b16 %v1829
    %v1862 = vunpack.c.l.b16 %v1830
    %v1863 = vpack.c.b16 %v1848, %v1847
    %v1864 = vpack.c.b16 %v1850, %v1849
    %v1865 = vpack.c.b16 %v1852, %v1851
    %v1866 = vpack.c.b16 %v1854, %v1853
    %v1867 = vpack.c.b16 %v1856, %v1855
    %v1868 = vpack.c.b16 %v1858, %v1857
    %v1869 = vpack.c.b16 %v1860, %v1859
    %v1870 = vpack.c.b16 %v1862, %v1861
    %1879 = vmatprep.subr.bf16.mxu0 0
    %1880 = vmatpush1.bf16.msra.mxu0 %v1863
    %1881 = vmatprep.subr.bf16.mxu0 0
    %1882 = vmatpush1.bf16.msra.mxu0 %v1864
    %1883 = vmatprep.subr.bf16.mxu0 0
    %1884 = vmatpush1.bf16.msra.mxu0 %v1865
    %1885 = vmatprep.subr.bf16.mxu0 0
    %1886 = vmatpush1.bf16.msra.mxu0 %v1866
    %1887 = vmatprep.subr.bf16.mxu0 0
    %1888 = vmatpush1.bf16.msra.mxu0 %v1867
    %1889 = vmatprep.subr.bf16.mxu0 0
    %1890 = vmatpush1.bf16.msra.mxu0 %v1868
    %1891 = vmatprep.subr.bf16.mxu0 0
    %1892 = vmatpush1.bf16.msra.mxu0 %v1869
    %1893 = vmatprep.subr.bf16.mxu0 0
    %1894 = vmatpush1.bf16.msra.mxu0 %v1870
    %1895 = vmatprep.subr.bf16.mxu0 0
    %1896 = vmatpush1.bf16.msra.mxu0 0
    %1897 = vmatprep.subr.bf16.mxu0 0
    %1898 = vmatpush1.bf16.msra.mxu0 0
    %1899 = vmatprep.subr.bf16.mxu0 0
    %1900 = vmatpush1.bf16.msra.mxu0 0
    %1901 = vmatprep.subr.bf16.mxu0 0
    %1902 = vmatpush1.bf16.msra.mxu0 0
    %1903 = vmatprep.subr.bf16.mxu0 0
    %1904 = vmatpush1.bf16.msra.mxu0 0
    %1905 = vmatprep.subr.bf16.mxu0 0
    %1906 = vmatpush1.bf16.msra.mxu0 0
    %1907 = vmatprep.subr.bf16.mxu0 0
    %1908 = vmatpush1.bf16.msra.mxu0 0
    %1909 = vmatprep.subr.bf16.mxu0 0
    %1910 = vmatpush1.bf16.msra.mxu0 0
    %1911 = vmatprep.mubr.bf16.mxu0 0
    %1912 = vmatmul.mubr.bf16.gmra.mrb[0].mxu0 %v860
    %v1913 = vpop.f32.mrb[0].mxu0
    %v1914 = vadd.f32 0.0, %v1913
    %v1915 = vpop.f32.mrb[0].mxu0
    %v1916 = vpop.f32.mrb[0].mxu0
    %v1917 = vadd.f32 0.0, %v1916
    %v1918 = vpop.f32.mrb[0].mxu0
    %1919 = vdwg.mxu0
    %v1920 = vadd.f32 %v1813, %v1914
    %v1921 = vadd.f32 %v1814, %v1917
    %v1922 = vld [vmem:[#allocation14] sm:$0x1]
    %v1924 = vlaneseq
    %v1925 = vshrl.u32 %v1924, 7
    %v1926 = vsub.s32 0, %v1925
    %v1927 = vrot.slane %v1922, %v1926
    %v1929 = vadd.f32 %v1920, %v1927
    %v1930 = vadd.f32 %v1921, %v1927
    %v1931 = vmax.f32 %v1929, 0.0
    %v1932 = vmax.f32 %v1930, 0.0
    %v1933 = vpack.c.bf16 %v1932, %v1931
    %1934 = vmatprep.subr.bf16.mxu0 0
    %1935 = vmatpush1.bf16.msra.mxu0 %v1933
    %1936 = vmatprep.subr.bf16.mxu0 0
    %1937 = vmatpush1.bf16.msra.mxu0 0
    %1938 = vmatprep.subr.bf16.mxu0 0
    %1939 = vmatpush1.bf16.msra.mxu0 0
    %1940 = vmatprep.subr.bf16.mxu0 0
    %1941 = vmatpush1.bf16.msra.mxu0 0
    %1942 = vmatprep.subr.bf16.mxu0 0
    %1943 = vmatpush1.bf16.msra.mxu0 0
    %1944 = vmatprep.subr.bf16.mxu0 0
    %1945 = vmatpush1.bf16.msra.mxu0 0
    %1946 = vmatprep.subr.bf16.mxu0 0
    %1947 = vmatpush1.bf16.msra.mxu0 0
    %1948 = vmatprep.subr.bf16.mxu0 0
    %1949 = vmatpush1.bf16.msra.mxu0 0
    %1950 = vmatprep.subr.bf16.mxu0 0
    %1951 = vmatpush1.bf16.msra.mxu0 0
    %1952 = vmatprep.subr.bf16.mxu0 0
    %1953 = vmatpush1.bf16.msra.mxu0 0
    %1954 = vmatprep.subr.bf16.mxu0 0
    %1955 = vmatpush1.bf16.msra.mxu0 0
    %1956 = vmatprep.subr.bf16.mxu0 0
    %1957 = vmatpush1.bf16.msra.mxu0 0
    %1958 = vmatprep.subr.bf16.mxu0 0
    %1959 = vmatpush1.bf16.msra.mxu0 0
    %1960 = vmatprep.subr.bf16.mxu0 0
    %1961 = vmatpush1.bf16.msra.mxu0 0
    %1962 = vmatprep.subr.bf16.mxu0 0
    %1963 = vmatpush1.bf16.msra.mxu0 0
    %1964 = vmatprep.subr.bf16.mxu0 0
    %1965 = vmatpush1.bf16.msra.mxu0 0
    %1966 = vmatprep.mubr.bf16.mxu0 0
    %1967 = vmatmul.mubr.bf16.gmra.mrb[0].mxu0 %v279
    %v1968 = vpop.f32.mrb[0].mxu0
    %v1969 = vadd.f32 0.0, %v1968
    %v1970 = vpop.f32.mrb[0].mxu0
    %v1971 = vpop.f32.mrb[0].mxu0
    %v1972 = vadd.f32 0.0, %v1971
    %v1973 = vpop.f32.mrb[0].mxu0
    %1974 = vmatprep.mubr.bf16.mxu0 0
    %1975 = vmatmul.mubr.bf16.gmra.mrb[0].mxu0 %v282
    %v1976 = vpop.f32.mrb[0].mxu0
    %v1977 = vadd.f32 0.0, %v1976
    %v1978 = vpop.f32.mrb[0].mxu0
    %v1979 = vpop.f32.mrb[0].mxu0
    %v1980 = vpop.f32.mrb[0].mxu0
    %1981 = vdwg.mxu0
    %v1982 = vpack.c.bf16 %v1972, %v1969
    %v1983 = vpack.c.bf16 %v1977, %v1977
    %v1984 = vmul.f32 %v1969, %v337
    %v1985 = vmul.f32 %v1972, %v342
    %v1986 = vmul.f32 %v1977, %v347
    %v1987 = vpack.c.bf16 %v1985, %v1984
    %v1988 = vpack.c.bf16 %v1986, %v1986
    %v1989 = vmul.f32 %v1969, %v356
    %v1990 = vmul.f32 %v1972, %v360
    %v1991 = vmul.f32 %v1977, %v364
    %v1992 = vpack.c.bf16 %v1990, %v1989
    %v1993 = vpack.c.bf16 %v1991, %v1991
    %v1994 = vmul.f32 %v1969, %v373
    %v1995 = vmul.f32 %v1972, %v377
    %v1996 = vmul.f32 %v1977, %v381
    %v1997 = vpack.c.bf16 %v1995, %v1994
    %v1998 = vpack.c.bf16 %v1996, %v1996
    %v1999 = vmul.f32 %v1969, %v390
    %v2000 = vmul.f32 %v1972, %v394
    %v2001 = vmul.f32 %v1977, %v398
    %v2002 = vpack.c.bf16 %v2000, %v1999
    %v2003 = vpack.c.bf16 %v2001, %v2001
    %v2004 = vmul.f32 %v1969, %v407
    %v2005 = vmul.f32 %v1972, %v411
    %v2006 = vmul.f32 %v1977, %v415
    %v2007 = vpack.c.bf16 %v2005, %v2004
    %v2008 = vpack.c.bf16 %v2006, %v2006
    %v2009 = vmul.f32 %v1969, %v424
    %v2010 = vmul.f32 %v1972, %v428
    %v2011 = vmul.f32 %v1977, %v432
    %v2012 = vpack.c.bf16 %v2010, %v2009
    %v2013 = vpack.c.bf16 %v2011, %v2011
    %v2014 = vmul.f32 %v1969, %v441
    %v2015 = vmul.f32 %v1972, %v445
    %v2016 = vmul.f32 %v1977, %v449
    %v2017 = vpack.c.bf16 %v2015, %v2014
    %v2018 = vpack.c.bf16 %v2016, %v2016
    %v2019 = vmul.f32 %v1969, %v458
    %v2020 = vmul.f32 %v1972, %v462
    %v2021 = vmul.f32 %v1977, %v466
    %v2022 = vpack.c.bf16 %v2020, %v2019
    %v2023 = vpack.c.bf16 %v2021, %v2021
    %v2024 = vld [vmem:[#allocation16] sm:$0xf]
    %v2025 = vld [vmem:[#allocation16 + $0x4] sm:$0xf]
    %v2026 = vld [vmem:[#allocation16 + $0x8] sm:$0xf]
    %v2027 = vld [vmem:[#allocation16 + $0xc] sm:$0xf]
    %v2028 = vld [vmem:[#allocation16 + $0x10] sm:$0xf]
    %v2029 = vld [vmem:[#allocation16 + $0x14] sm:$0xf]
    %v2030 = vld [vmem:[#allocation16 + $0x18] sm:$0xf]
    %v2031 = vld [vmem:[#allocation16 + $0x1c] sm:$0xf]
    %v2032 = vld [vmem:[#allocation16 + $0x20] sm:$0xf]
    %v2033 = vld [vmem:[#allocation16 + $0x24] sm:$0xf]
    %v2034 = vld [vmem:[#allocation16 + $0x28] sm:$0xf]
    %v2035 = vld [vmem:[#allocation16 + $0x2c] sm:$0xf]
    %v2036 = vld [vmem:[#allocation16 + $0x30] sm:$0xf]
    %v2037 = vld [vmem:[#allocation16 + $0x34] sm:$0xf]
    %v2038 = vld [vmem:[#allocation16 + $0x38] sm:$0xf]
    %v2039 = vld [vmem:[#allocation16 + $0x3c] sm:$0xf]
    %v2040 = vld [vmem:[#allocation16 + $0x40] sm:$0xf]
    %v2041 = vld [vmem:[#allocation16 + $0x44] sm:$0xf]
    %v2042 = vld [vmem:[#allocation16 + $0x48] sm:$0xf]
    %v2043 = vld [vmem:[#allocation16 + $0x4c] sm:$0xf]
    %v2044 = vld [vmem:[#allocation16 + $0x50] sm:$0xf]
    %v2045 = vld [vmem:[#allocation16 + $0x54] sm:$0xf]
    %v2046 = vld [vmem:[#allocation16 + $0x58] sm:$0xf]
    %v2047 = vld [vmem:[#allocation16 + $0x5c] sm:$0xf]
    %v2048 = vld [vmem:[#allocation16 + $0x60] sm:$0xf]
    %v2049 = vld [vmem:[#allocation16 + $0x64] sm:$0xf]
    %v2050 = vld [vmem:[#allocation16 + $0x68] sm:$0xf]
    %v2051 = vld [vmem:[#allocation16 + $0x6c] sm:$0xf]
    %v2052 = vld [vmem:[#allocation16 + $0x70] sm:$0xf]
    %v2053 = vld [vmem:[#allocation16 + $0x74] sm:$0xf]
    %v2054 = vld [vmem:[#allocation16 + $0x78] sm:$0xf]
    %v2055 = vld [vmem:[#allocation16 + $0x7c] sm:$0xf]
    %v2056 = vld [vmem:[#allocation16 + $0x80] sm:$0xf]
    %v2057 = vld [vmem:[#allocation16 + $0x84] sm:$0xf]
    %v2058 = vld [vmem:[#allocation16 + $0x88] sm:$0xf]
    %v2059 = vld [vmem:[#allocation16 + $0x8c] sm:$0xf]
    %v2060 = vld [vmem:[#allocation16 + $0x90] sm:$0xf]
    %v2061 = vld [vmem:[#allocation16 + $0x94] sm:$0xf]
    %v2062 = vld [vmem:[#allocation16 + $0x98] sm:$0xf]
    %v2063 = vld [vmem:[#allocation16 + $0x9c] sm:$0xf]
    %v2064 = vld [vmem:[#allocation16 + $0xa0] sm:$0xf]
    %v2065 = vld [vmem:[#allocation16 + $0xa4] sm:$0xf]
    %v2066 = vld [vmem:[#allocation16 + $0xa8] sm:$0xf]
    %v2067 = vld [vmem:[#allocation16 + $0xac] sm:$0xf]
    %v2068 = vld [vmem:[#allocation16 + $0xb0] sm:$0xf]
    %v2069 = vld [vmem:[#allocation16 + $0xb4] sm:$0xf]
    %v2070 = vld [vmem:[#allocation16 + $0xb8] sm:$0xf]
    %v2071 = vld [vmem:[#allocation16 + $0xbc] sm:$0xf]
    %v2072 = vld [vmem:[#allocation16 + $0xc0] sm:$0xf]
    %v2073 = vld [vmem:[#allocation16 + $0xc4] sm:$0xf]
    %v2074 = vld [vmem:[#allocation16 + $0xc8] sm:$0xf]
    %v2075 = vld [vmem:[#allocation16 + $0xcc] sm:$0xf]
    %v2076 = vld [vmem:[#allocation16 + $0xd0] sm:$0xf]
    %v2077 = vld [vmem:[#allocation16 + $0xd4] sm:$0xf]
    %v2078 = vld [vmem:[#allocation16 + $0xd8] sm:$0xf]
    %v2079 = vld [vmem:[#allocation16 + $0xdc] sm:$0xf]
    %v2080 = vld [vmem:[#allocation16 + $0xe0] sm:$0xf]
    %v2081 = vld [vmem:[#allocation16 + $0xe4] sm:$0xf]
    %v2082 = vld [vmem:[#allocation16 + $0xe8] sm:$0xf]
    %v2083 = vld [vmem:[#allocation16 + $0xec] sm:$0xf]
    %v2084 = vld [vmem:[#allocation16 + $0xf0] sm:$0xf]
    %v2085 = vld [vmem:[#allocation16 + $0xf4] sm:$0xf]
    %v2086 = vld [vmem:[#allocation16 + $0xf8] sm:$0xf]
    %v2087 = vld [vmem:[#allocation16 + $0xfc] sm:$0xf]
    %v2088 = vld [vmem:[#allocation16 + $0x100] sm:$0xf]
    %v2089 = vld [vmem:[#allocation16 + $0x104] sm:$0xf]
    %v2090 = vld [vmem:[#allocation16 + $0x108] sm:$0xf]
    %v2091 = vld [vmem:[#allocation16 + $0x10c] sm:$0xf]
    %v2092 = vld [vmem:[#allocation16 + $0x110] sm:$0xf]
    %v2093 = vld [vmem:[#allocation16 + $0x114] sm:$0xf]
    %v2094 = vld [vmem:[#allocation16 + $0x118] sm:$0xf]
    %v2095 = vld [vmem:[#allocation16 + $0x11c] sm:$0xf]
    %v2096 = vld [vmem:[#allocation16 + $0x120] sm:$0xf]
    %v2097 = vld [vmem:[#allocation16 + $0x124] sm:$0xf]
    %v2098 = vld [vmem:[#allocation16 + $0x128] sm:$0xf]
    %v2099 = vld [vmem:[#allocation16 + $0x12c] sm:$0xf]
    %v2100 = vld [vmem:[#allocation16 + $0x130] sm:$0xf]
    %v2101 = vld [vmem:[#allocation16 + $0x134] sm:$0xf]
    %v2102 = vld [vmem:[#allocation16 + $0x138] sm:$0xf]
    %v2103 = vld [vmem:[#allocation16 + $0x13c] sm:$0xf]
    %v2104 = vld [vmem:[#allocation16 + $0x140] sm:$0xf]
    %v2105 = vld [vmem:[#allocation16 + $0x144] sm:$0xf]
    %v2106 = vld [vmem:[#allocation16 + $0x148] sm:$0xf]
    %v2107 = vld [vmem:[#allocation16 + $0x14c] sm:$0xf]
    %v2108 = vld [vmem:[#allocation16 + $0x150] sm:$0xf]
    %v2109 = vld [vmem:[#allocation16 + $0x154] sm:$0xf]
    %v2110 = vld [vmem:[#allocation16 + $0x158] sm:$0xf]
    %v2111 = vld [vmem:[#allocation16 + $0x15c] sm:$0xf]
    %v2112 = vld [vmem:[#allocation16 + $0x160] sm:$0xf]
    %v2113 = vld [vmem:[#allocation16 + $0x164] sm:$0xf]
    %v2114 = vld [vmem:[#allocation16 + $0x168] sm:$0xf]
    %v2115 = vld [vmem:[#allocation16 + $0x16c] sm:$0xf]
    %v2116 = vld [vmem:[#allocation16 + $0x170] sm:$0xf]
    %v2117 = vld [vmem:[#allocation16 + $0x174] sm:$0xf]
    %v2118 = vld [vmem:[#allocation16 + $0x178] sm:$0xf]
    %v2119 = vld [vmem:[#allocation16 + $0x17c] sm:$0xf]
    %v2120 = vld [vmem:[#allocation16 + $0x180] sm:$0xf]
    %v2121 = vld [vmem:[#allocation16 + $0x184] sm:$0xf]
    %v2122 = vld [vmem:[#allocation16 + $0x188] sm:$0xf]
    %v2123 = vld [vmem:[#allocation16 + $0x18c] sm:$0xf]
    %v2124 = vld [vmem:[#allocation16 + $0x190] sm:$0xf]
    %v2125 = vld [vmem:[#allocation16 + $0x194] sm:$0xf]
    %v2126 = vld [vmem:[#allocation16 + $0x198] sm:$0xf]
    %v2127 = vld [vmem:[#allocation16 + $0x19c] sm:$0xf]
    %v2128 = vld [vmem:[#allocation16 + $0x1a0] sm:$0xf]
    %v2129 = vld [vmem:[#allocation16 + $0x1a4] sm:$0xf]
    %v2130 = vld [vmem:[#allocation16 + $0x1a8] sm:$0xf]
    %v2131 = vld [vmem:[#allocation16 + $0x1ac] sm:$0xf]
    %v2132 = vld [vmem:[#allocation16 + $0x1b0] sm:$0xf]
    %v2133 = vld [vmem:[#allocation16 + $0x1b4] sm:$0xf]
    %v2134 = vld [vmem:[#allocation16 + $0x1b8] sm:$0xf]
    %v2135 = vld [vmem:[#allocation16 + $0x1bc] sm:$0xf]
    %v2136 = vld [vmem:[#allocation16 + $0x1c0] sm:$0xf]
    %v2137 = vld [vmem:[#allocation16 + $0x1c4] sm:$0xf]
    %v2138 = vld [vmem:[#allocation16 + $0x1c8] sm:$0xf]
    %v2139 = vld [vmem:[#allocation16 + $0x1cc] sm:$0xf]
    %v2140 = vld [vmem:[#allocation16 + $0x1d0] sm:$0xf]
    %v2141 = vld [vmem:[#allocation16 + $0x1d4] sm:$0xf]
    %v2142 = vld [vmem:[#allocation16 + $0x1d8] sm:$0xf]
    %v2143 = vld [vmem:[#allocation16 + $0x1dc] sm:$0xf]
    %v2144 = vld [vmem:[#allocation16 + $0x1e0] sm:$0xf]
    %v2145 = vld [vmem:[#allocation16 + $0x1e4] sm:$0xf]
    %v2146 = vld [vmem:[#allocation16 + $0x1e8] sm:$0xf]
    %v2147 = vld [vmem:[#allocation16 + $0x1ec] sm:$0xf]
    %v2148 = vld [vmem:[#allocation16 + $0x1f0] sm:$0xf]
    %v2149 = vld [vmem:[#allocation16 + $0x1f4] sm:$0xf]
    %v2150 = vld [vmem:[#allocation16 + $0x1f8] sm:$0xf]
    %v2151 = vld [vmem:[#allocation16 + $0x1fc] sm:$0xf]
    %v2152 = vld [vmem:[#allocation17] sm:$0xf]
    %v2153 = vld [vmem:[#allocation17 + $0x4] sm:$0xf]
    %v2154 = vld [vmem:[#allocation17 + $0x8] sm:$0xf]
    %v2155 = vld [vmem:[#allocation17 + $0xc] sm:$0xf]
    %v2156 = vld [vmem:[#allocation17 + $0x10] sm:$0xf]
    %v2157 = vld [vmem:[#allocation17 + $0x14] sm:$0xf]
    %v2158 = vld [vmem:[#allocation17 + $0x18] sm:$0xf]
    %v2159 = vld [vmem:[#allocation17 + $0x1c] sm:$0xf]
    %v2160 = vld [vmem:[#allocation17 + $0x20] sm:$0xf]
    %v2161 = vld [vmem:[#allocation17 + $0x24] sm:$0xf]
    %v2162 = vld [vmem:[#allocation17 + $0x28] sm:$0xf]
    %v2163 = vld [vmem:[#allocation17 + $0x2c] sm:$0xf]
    %v2164 = vld [vmem:[#allocation17 + $0x30] sm:$0xf]
    %v2165 = vld [vmem:[#allocation17 + $0x34] sm:$0xf]
    %v2166 = vld [vmem:[#allocation17 + $0x38] sm:$0xf]
    %v2167 = vld [vmem:[#allocation17 + $0x3c] sm:$0xf]
    %v2184 = vunpack.c.l.b16 %v2152
    %v2185 = vunpack.c.l.b16 %v2153
    %v2186 = vunpack.c.l.b16 %v2154
    %v2187 = vunpack.c.l.b16 %v2155
    %v2188 = vunpack.c.l.b16 %v2156
    %v2189 = vunpack.c.l.b16 %v2157
    %v2190 = vunpack.c.l.b16 %v2158
    %v2191 = vunpack.c.l.b16 %v2159
    %v2192 = vunpack.c.l.b16 %v2160
    %v2193 = vunpack.c.l.b16 %v2161
    %v2194 = vunpack.c.l.b16 %v2162
    %v2195 = vunpack.c.l.b16 %v2163
    %v2196 = vunpack.c.l.b16 %v2164
    %v2197 = vunpack.c.l.b16 %v2165
    %v2198 = vunpack.c.l.b16 %v2166
    %v2199 = vunpack.c.l.b16 %v2167
    %v2200 = vpack.c.b16 %v2185, %v2184
    %v2201 = vpack.c.b16 %v2187, %v2186
    %v2202 = vpack.c.b16 %v2189, %v2188
    %v2203 = vpack.c.b16 %v2191, %v2190
    %v2204 = vpack.c.b16 %v2193, %v2192
    %v2205 = vpack.c.b16 %v2195, %v2194
    %v2206 = vpack.c.b16 %v2197, %v2196
    %v2207 = vpack.c.b16 %v2199, %v2198
    %2216 = vmatprep.subr.bf16.mxu0 0
    %2217 = vmatpush1.bf16.msra.mxu0 %v2200
    %2218 = vmatprep.subr.bf16.mxu0 0
    %2219 = vmatpush1.bf16.msra.mxu0 %v2201
    %2220 = vmatprep.subr.bf16.mxu0 0
    %2221 = vmatpush1.bf16.msra.mxu0 %v2202
    %2222 = vmatprep.subr.bf16.mxu0 0
    %2223 = vmatpush1.bf16.msra.mxu0 %v2203
    %2224 = vmatprep.subr.bf16.mxu0 0
    %2225 = vmatpush1.bf16.msra.mxu0 %v2204
    %2226 = vmatprep.subr.bf16.mxu0 0
    %2227 = vmatpush1.bf16.msra.mxu0 %v2205
    %2228 = vmatprep.subr.bf16.mxu0 0
    %2229 = vmatpush1.bf16.msra.mxu0 %v2206
    %2230 = vmatprep.subr.bf16.mxu0 0
    %2231 = vmatpush1.bf16.msra.mxu0 %v2207
    %2232 = vmatprep.subr.bf16.mxu0 0
    %2233 = vmatpush1.bf16.msra.mxu0 0
    %2234 = vmatprep.subr.bf16.mxu0 0
    %2235 = vmatpush1.bf16.msra.mxu0 0
    %2236 = vmatprep.subr.bf16.mxu0 0
    %2237 = vmatpush1.bf16.msra.mxu0 0
    %2238 = vmatprep.subr.bf16.mxu0 0
    %2239 = vmatpush1.bf16.msra.mxu0 0
    %2240 = vmatprep.subr.bf16.mxu0 0
    %2241 = vmatpush1.bf16.msra.mxu0 0
    %2242 = vmatprep.subr.bf16.mxu0 0
    %2243 = vmatpush1.bf16.msra.mxu0 0
    %2244 = vmatprep.subr.bf16.mxu0 0
    %2245 = vmatpush1.bf16.msra.mxu0 0
    %2246 = vmatprep.subr.bf16.mxu0 0
    %2247 = vmatpush1.bf16.msra.mxu0 0
    %2248 = vmatprep.mubr.bf16.mxu0 0
    %2249 = vmatmul.mubr.bf16.gmra.mrb[0].mxu0 %v1982
    %v2250 = vpop.f32.mrb[0].mxu0
    %v2251 = vadd.f32 0.0, %v2250
    %v2252 = vpop.f32.mrb[0].mxu0
    %v2253 = vpop.f32.mrb[0].mxu0
    %v2254 = vadd.f32 0.0, %v2253
    %v2255 = vpop.f32.mrb[0].mxu0
    %2256 = vmatprep.mubr.bf16.mxu0 0
    %2257 = vmatmul.mubr.bf16.gmra.mrb[0].mxu0 %v1983
    %v2258 = vpop.f32.mrb[0].mxu0
    %v2259 = vadd.f32 0.0, %v2258
    %v2260 = vpop.f32.mrb[0].mxu0
    %v2261 = vpop.f32.mrb[0].mxu0
    %v2262 = vpop.f32.mrb[0].mxu0
    %2263 = vdwg.mxu0
    %v2392 = vunpack.c.l.b16 %v2024
    %v2393 = vunpack.c.l.b16 %v2025
    %v2394 = vunpack.c.l.b16 %v2026
    %v2395 = vunpack.c.l.b16 %v2027
    %v2396 = vunpack.c.l.b16 %v2028
    %v2397 = vunpack.c.l.b16 %v2029
    %v2398 = vunpack.c.l.b16 %v2030
    %v2399 = vunpack.c.l.b16 %v2031
    %v2400 = vunpack.c.l.b16 %v2032
    %v2401 = vunpack.c.l.b16 %v2033
    %v2402 = vunpack.c.l.b16 %v2034
    %v2403 = vunpack.c.l.b16 %v2035
    %v2404 = vunpack.c.l.b16 %v2036
    %v2405 = vunpack.c.l.b16 %v2037
    %v2406 = vunpack.c.l.b16 %v2038
    %v2407 = vunpack.c.l.b16 %v2039
    %v2408 = vunpack.c.l.b16 %v2040
    %v2409 = vunpack.c.l.b16 %v2041
    %v2410 = vunpack.c.l.b16 %v2042
    %v2411 = vunpack.c.l.b16 %v2043
    %v2412 = vunpack.c.l.b16 %v2044
    %v2413 = vunpack.c.l.b16 %v2045
    %v2414 = vunpack.c.l.b16 %v2046
    %v2415 = vunpack.c.l.b16 %v2047
    %v2416 = vunpack.c.l.b16 %v2048
    %v2417 = vunpack.c.l.b16 %v2049
    %v2418 = vunpack.c.l.b16 %v2050
    %v2419 = vunpack.c.l.b16 %v2051
    %v2420 = vunpack.c.l.b16 %v2052
    %v2421 = vunpack.c.l.b16 %v2053
    %v2422 = vunpack.c.l.b16 %v2054
    %v2423 = vunpack.c.l.b16 %v2055
    %v2424 = vunpack.c.l.b16 %v2056
    %v2425 = vunpack.c.l.b16 %v2057
    %v2426 = vunpack.c.l.b16 %v2058
    %v2427 = vunpack.c.l.b16 %v2059
    %v2428 = vunpack.c.l.b16 %v2060
    %v2429 = vunpack.c.l.b16 %v2061
    %v2430 = vunpack.c.l.b16 %v2062
    %v2431 = vunpack.c.l.b16 %v2063
    %v2432 = vunpack.c.l.b16 %v2064
    %v2433 = vunpack.c.l.b16 %v2065
    %v2434 = vunpack.c.l.b16 %v2066
    %v2435 = vunpack.c.l.b16 %v2067
    %v2436 = vunpack.c.l.b16 %v2068
    %v2437 = vunpack.c.l.b16 %v2069
    %v2438 = vunpack.c.l.b16 %v2070
    %v2439 = vunpack.c.l.b16 %v2071
    %v2440 = vunpack.c.l.b16 %v2072
    %v2441 = vunpack.c.l.b16 %v2073
    %v2442 = vunpack.c.l.b16 %v2074
    %v2443 = vunpack.c.l.b16 %v2075
    %v2444 = vunpack.c.l.b16 %v2076
    %v2445 = vunpack.c.l.b16 %v2077
    %v2446 = vunpack.c.l.b16 %v2078
    %v2447 = vunpack.c.l.b16 %v2079
    %v2448 = vunpack.c.l.b16 %v2080
    %v2449 = vunpack.c.l.b16 %v2081
    %v2450 = vunpack.c.l.b16 %v2082
    %v2451 = vunpack.c.l.b16 %v2083
    %v2452 = vunpack.c.l.b16 %v2084
    %v2453 = vunpack.c.l.b16 %v2085
    %v2454 = vunpack.c.l.b16 %v2086
    %v2455 = vunpack.c.l.b16 %v2087
    %v2456 = vunpack.c.l.b16 %v2088
    %v2457 = vunpack.c.l.b16 %v2089
    %v2458 = vunpack.c.l.b16 %v2090
    %v2459 = vunpack.c.l.b16 %v2091
    %v2460 = vunpack.c.l.b16 %v2092
    %v2461 = vunpack.c.l.b16 %v2093
    %v2462 = vunpack.c.l.b16 %v2094
    %v2463 = vunpack.c.l.b16 %v2095
    %v2464 = vunpack.c.l.b16 %v2096
    %v2465 = vunpack.c.l.b16 %v2097
    %v2466 = vunpack.c.l.b16 %v2098
    %v2467 = vunpack.c.l.b16 %v2099
    %v2468 = vunpack.c.l.b16 %v2100
    %v2469 = vunpack.c.l.b16 %v2101
    %v2470 = vunpack.c.l.b16 %v2102
    %v2471 = vunpack.c.l.b16 %v2103
    %v2472 = vunpack.c.l.b16 %v2104
    %v2473 = vunpack.c.l.b16 %v2105
    %v2474 = vunpack.c.l.b16 %v2106
    %v2475 = vunpack.c.l.b16 %v2107
    %v2476 = vunpack.c.l.b16 %v2108
    %v2477 = vunpack.c.l.b16 %v2109
    %v2478 = vunpack.c.l.b16 %v2110
    %v2479 = vunpack.c.l.b16 %v2111
    %v2480 = vunpack.c.l.b16 %v2112
    %v2481 = vunpack.c.l.b16 %v2113
    %v2482 = vunpack.c.l.b16 %v2114
    %v2483 = vunpack.c.l.b16 %v2115
    %v2484 = vunpack.c.l.b16 %v2116
    %v2485 = vunpack.c.l.b16 %v2117
    %v2486 = vunpack.c.l.b16 %v2118
    %v2487 = vunpack.c.l.b16 %v2119
    %v2488 = vunpack.c.l.b16 %v2120
    %v2489 = vunpack.c.l.b16 %v2121
    %v2490 = vunpack.c.l.b16 %v2122
    %v2491 = vunpack.c.l.b16 %v2123
    %v2492 = vunpack.c.l.b16 %v2124
    %v2493 = vunpack.c.l.b16 %v2125
    %v2494 = vunpack.c.l.b16 %v2126
    %v2495 = vunpack.c.l.b16 %v2127
    %v2496 = vunpack.c.l.b16 %v2128
    %v2497 = vunpack.c.l.b16 %v2129
    %v2498 = vunpack.c.l.b16 %v2130
    %v2499 = vunpack.c.l.b16 %v2131
    %v2500 = vunpack.c.l.b16 %v2132
    %v2501 = vunpack.c.l.b16 %v2133
    %v2502 = vunpack.c.l.b16 %v2134
    %v2503 = vunpack.c.l.b16 %v2135
    %v2504 = vunpack.c.l.b16 %v2136
    %v2505 = vunpack.c.l.b16 %v2137
    %v2506 = vunpack.c.l.b16 %v2138
    %v2507 = vunpack.c.l.b16 %v2139
    %v2508 = vunpack.c.l.b16 %v2140
    %v2509 = vunpack.c.l.b16 %v2141
    %v2510 = vunpack.c.l.b16 %v2142
    %v2511 = vunpack.c.l.b16 %v2143
    %v2512 = vunpack.c.l.b16 %v2144
    %v2513 = vunpack.c.l.b16 %v2145
    %v2514 = vunpack.c.l.b16 %v2146
    %v2515 = vunpack.c.l.b16 %v2147
    %v2516 = vunpack.c.l.b16 %v2148
    %v2517 = vunpack.c.l.b16 %v2149
    %v2518 = vunpack.c.l.b16 %v2150
    %v2519 = vunpack.c.l.b16 %v2151
    %v2520 = vpack.c.b16 %v2393, %v2392
    %v2521 = vpack.c.b16 %v2395, %v2394
    %v2522 = vpack.c.b16 %v2397, %v2396
    %v2523 = vpack.c.b16 %v2399, %v2398
    %v2524 = vpack.c.b16 %v2401, %v2400
    %v2525 = vpack.c.b16 %v2403, %v2402
    %v2526 = vpack.c.b16 %v2405, %v2404
    %v2527 = vpack.c.b16 %v2407, %v2406
    %v2528 = vpack.c.b16 %v2409, %v2408
    %v2529 = vpack.c.b16 %v2411, %v2410
    %v2530 = vpack.c.b16 %v2413, %v2412
    %v2531 = vpack.c.b16 %v2415, %v2414
    %v2532 = vpack.c.b16 %v2417, %v2416
    %v2533 = vpack.c.b16 %v2419, %v2418
    %v2534 = vpack.c.b16 %v2421, %v2420
    %v2535 = vpack.c.b16 %v2423, %v2422
    %v2536 = vpack.c.b16 %v2425, %v2424
    %v2537 = vpack.c.b16 %v2427, %v2426
    %v2538 = vpack.c.b16 %v2429, %v2428
    %v2539 = vpack.c.b16 %v2431, %v2430
    %v2540 = vpack.c.b16 %v2433, %v2432
    %v2541 = vpack.c.b16 %v2435, %v2434
    %v2542 = vpack.c.b16 %v2437, %v2436
    %v2543 = vpack.c.b16 %v2439, %v2438
    %v2544 = vpack.c.b16 %v2441, %v2440
    %v2545 = vpack.c.b16 %v2443, %v2442
    %v2546 = vpack.c.b16 %v2445, %v2444
    %v2547 = vpack.c.b16 %v2447, %v2446
    %v2548 = vpack.c.b16 %v2449, %v2448
    %v2549 = vpack.c.b16 %v2451, %v2450
    %v2550 = vpack.c.b16 %v2453, %v2452
    %v2551 = vpack.c.b16 %v2455, %v2454
    %v2552 = vpack.c.b16 %v2457, %v2456
    %v2553 = vpack.c.b16 %v2459, %v2458
    %v2554 = vpack.c.b16 %v2461, %v2460
    %v2555 = vpack.c.b16 %v2463, %v2462
    %v2556 = vpack.c.b16 %v2465, %v2464
    %v2557 = vpack.c.b16 %v2467, %v2466
    %v2558 = vpack.c.b16 %v2469, %v2468
    %v2559 = vpack.c.b16 %v2471, %v2470
    %v2560 = vpack.c.b16 %v2473, %v2472
    %v2561 = vpack.c.b16 %v2475, %v2474
    %v2562 = vpack.c.b16 %v2477, %v2476
    %v2563 = vpack.c.b16 %v2479, %v2478
    %v2564 = vpack.c.b16 %v2481, %v2480
    %v2565 = vpack.c.b16 %v2483, %v2482
    %v2566 = vpack.c.b16 %v2485, %v2484
    %v2567 = vpack.c.b16 %v2487, %v2486
    %v2568 = vpack.c.b16 %v2489, %v2488
    %v2569 = vpack.c.b16 %v2491, %v2490
    %v2570 = vpack.c.b16 %v2493, %v2492
    %v2571 = vpack.c.b16 %v2495, %v2494
    %v2572 = vpack.c.b16 %v2497, %v2496
    %v2573 = vpack.c.b16 %v2499, %v2498
    %v2574 = vpack.c.b16 %v2501, %v2500
    %v2575 = vpack.c.b16 %v2503, %v2502
    %v2576 = vpack.c.b16 %v2505, %v2504
    %v2577 = vpack.c.b16 %v2507, %v2506
    %v2578 = vpack.c.b16 %v2509, %v2508
    %v2579 = vpack.c.b16 %v2511, %v2510
    %v2580 = vpack.c.b16 %v2513, %v2512
    %v2581 = vpack.c.b16 %v2515, %v2514
    %v2582 = vpack.c.b16 %v2517, %v2516
    %v2583 = vpack.c.b16 %v2519, %v2518
    %2648 = vmatprep.subr.bf16.mxu0 0
    %2649 = vmatpush1.bf16.msra.mxu0 %v2520
    %2650 = vmatprep.subr.bf16.mxu0 0
    %2651 = vmatpush1.bf16.msra.mxu0 %v2521
    %2652 = vmatprep.subr.bf16.mxu0 0
    %2653 = vmatpush1.bf16.msra.mxu0 %v2522
    %2654 = vmatprep.subr.bf16.mxu0 0
    %2655 = vmatpush1.bf16.msra.mxu0 %v2523
    %2656 = vmatprep.subr.bf16.mxu0 0
    %2657 = vmatpush1.bf16.msra.mxu0 %v2524
    %2658 = vmatprep.subr.bf16.mxu0 0
    %2659 = vmatpush1.bf16.msra.mxu0 %v2525
    %2660 = vmatprep.subr.bf16.mxu0 0
    %2661 = vmatpush1.bf16.msra.mxu0 %v2526
    %2662 = vmatprep.subr.bf16.mxu0 0
    %2663 = vmatpush1.bf16.msra.mxu0 %v2527
    %2664 = vmatprep.subr.bf16.mxu0 0
    %2665 = vmatpush1.bf16.msra.mxu0 %v2528
    %2666 = vmatprep.subr.bf16.mxu0 0
    %2667 = vmatpush1.bf16.msra.mxu0 %v2529
    %2668 = vmatprep.subr.bf16.mxu0 0
    %2669 = vmatpush1.bf16.msra.mxu0 %v2530
    %2670 = vmatprep.subr.bf16.mxu0 0
    %2671 = vmatpush1.bf16.msra.mxu0 %v2531
    %2672 = vmatprep.subr.bf16.mxu0 0
    %2673 = vmatpush1.bf16.msra.mxu0 %v2532
    %2674 = vmatprep.subr.bf16.mxu0 0
    %2675 = vmatpush1.bf16.msra.mxu0 %v2533
    %2676 = vmatprep.subr.bf16.mxu0 0
    %2677 = vmatpush1.bf16.msra.mxu0 %v2534
    %2678 = vmatprep.subr.bf16.mxu0 0
    %2679 = vmatpush1.bf16.msra.mxu0 %v2535
    %2680 = vmatprep.mubr.bf16.mxu0 %v1992
    %2681 = vmatmul.mubr.bf16.gmra.mrb[0].mxu0 %v1987
    %v2682 = vpop.f32.mrb[0].mxu0
    %v2683 = vadd.f32 %v2251, %v2682
    %v2684 = vpop.f32.mrb[0].mxu0
    %v2685 = vpop.f32.mrb[0].mxu0
    %v2686 = vadd.f32 %v2254, %v2685
    %v2687 = vpop.f32.mrb[0].mxu0
    %2688 = vmatprep.mubr.bf16.mxu0 %v1993
    %2689 = vmatmul.mubr.bf16.gmra.mrb[0].mxu0 %v1988
    %v2690 = vpop.f32.mrb[0].mxu0
    %v2691 = vadd.f32 %v2259, %v2690
    %v2692 = vpop.f32.mrb[0].mxu0
    %v2693 = vpop.f32.mrb[0].mxu0
    %v2694 = vpop.f32.mrb[0].mxu0
    %2695 = vdwg.mxu0
    %2696 = vmatprep.subr.bf16.mxu0 0
    %2697 = vmatpush1.bf16.msra.mxu0 %v2536
    %2698 = vmatprep.subr.bf16.mxu0 0
    %2699 = vmatpush1.bf16.msra.mxu0 %v2537
    %2700 = vmatprep.subr.bf16.mxu0 0
    %2701 = vmatpush1.bf16.msra.mxu0 %v2538
    %2702 = vmatprep.subr.bf16.mxu0 0
    %2703 = vmatpush1.bf16.msra.mxu0 %v2539
    %2704 = vmatprep.subr.bf16.mxu0 0
    %2705 = vmatpush1.bf16.msra.mxu0 %v2540
    %2706 = vmatprep.subr.bf16.mxu0 0
    %2707 = vmatpush1.bf16.msra.mxu0 %v2541
    %2708 = vmatprep.subr.bf16.mxu0 0
    %2709 = vmatpush1.bf16.msra.mxu0 %v2542
    %2710 = vmatprep.subr.bf16.mxu0 0
    %2711 = vmatpush1.bf16.msra.mxu0 %v2543
    %2712 = vmatprep.subr.bf16.mxu0 0
    %2713 = vmatpush1.bf16.msra.mxu0 %v2544
    %2714 = vmatprep.subr.bf16.mxu0 0
    %2715 = vmatpush1.bf16.msra.mxu0 %v2545
    %2716 = vmatprep.subr.bf16.mxu0 0
    %2717 = vmatpush1.bf16.msra.mxu0 %v2546
    %2718 = vmatprep.subr.bf16.mxu0 0
    %2719 = vmatpush1.bf16.msra.mxu0 %v2547
    %2720 = vmatprep.subr.bf16.mxu0 0
    %2721 = vmatpush1.bf16.msra.mxu0 %v2548
    %2722 = vmatprep.subr.bf16.mxu0 0
    %2723 = vmatpush1.bf16.msra.mxu0 %v2549
    %2724 = vmatprep.subr.bf16.mxu0 0
    %2725 = vmatpush1.bf16.msra.mxu0 %v2550
    %2726 = vmatprep.subr.bf16.mxu0 0
    %2727 = vmatpush1.bf16.msra.mxu0 %v2551
    %2728 = vmatprep.mubr.bf16.mxu0 %v2002
    %2729 = vmatmul.mubr.bf16.gmra.mrb[0].mxu0 %v1997
    %v2730 = vpop.f32.mrb[0].mxu0
    %v2731 = vadd.f32 %v2683, %v2730
    %v2732 = vpop.f32.mrb[0].mxu0
    %v2733 = vpop.f32.mrb[0].mxu0
    %v2734 = vadd.f32 %v2686, %v2733
    %v2735 = vpop.f32.mrb[0].mxu0
    %2736 = vmatprep.mubr.bf16.mxu0 %v2003
    %2737 = vmatmul.mubr.bf16.gmra.mrb[0].mxu0 %v1998
    %v2738 = vpop.f32.mrb[0].mxu0
    %v2739 = vadd.f32 %v2691, %v2738
    %v2740 = vpop.f32.mrb[0].mxu0
    %v2741 = vpop.f32.mrb[0].mxu0
    %v2742 = vpop.f32.mrb[0].mxu0
    %2743 = vdwg.mxu0
    %2744 = vmatprep.subr.bf16.mxu0 0
    %2745 = vmatpush1.bf16.msra.mxu0 %v2552
    %2746 = vmatprep.subr.bf16.mxu0 0
    %2747 = vmatpush1.bf16.msra.mxu0 %v2553
    %2748 = vmatprep.subr.bf16.mxu0 0
    %2749 = vmatpush1.bf16.msra.mxu0 %v2554
    %2750 = vmatprep.subr.bf16.mxu0 0
    %2751 = vmatpush1.bf16.msra.mxu0 %v2555
    %2752 = vmatprep.subr.bf16.mxu0 0
    %2753 = vmatpush1.bf16.msra.mxu0 %v2556
    %2754 = vmatprep.subr.bf16.mxu0 0
    %2755 = vmatpush1.bf16.msra.mxu0 %v2557
    %2756 = vmatprep.subr.bf16.mxu0 0
    %2757 = vmatpush1.bf16.msra.mxu0 %v2558
    %2758 = vmatprep.subr.bf16.mxu0 0
    %2759 = vmatpush1.bf16.msra.mxu0 %v2559
    %2760 = vmatprep.subr.bf16.mxu0 0
    %2761 = vmatpush1.bf16.msra.mxu0 %v2560
    %2762 = vmatprep.subr.bf16.mxu0 0
    %2763 = vmatpush1.bf16.msra.mxu0 %v2561
    %2764 = vmatprep.subr.bf16.mxu0 0
    %2765 = vmatpush1.bf16.msra.mxu0 %v2562
    %2766 = vmatprep.subr.bf16.mxu0 0
    %2767 = vmatpush1.bf16.msra.mxu0 %v2563
    %2768 = vmatprep.subr.bf16.mxu0 0
    %2769 = vmatpush1.bf16.msra.mxu0 %v2564
    %2770 = vmatprep.subr.bf16.mxu0 0
    %2771 = vmatpush1.bf16.msra.mxu0 %v2565
    %2772 = vmatprep.subr.bf16.mxu0 0
    %2773 = vmatpush1.bf16.msra.mxu0 %v2566
    %2774 = vmatprep.subr.bf16.mxu0 0
    %2775 = vmatpush1.bf16.msra.mxu0 %v2567
    %2776 = vmatprep.mubr.bf16.mxu0 %v2012
    %2777 = vmatmul.mubr.bf16.gmra.mrb[0].mxu0 %v2007
    %v2778 = vpop.f32.mrb[0].mxu0
    %v2779 = vadd.f32 %v2731, %v2778
    %v2780 = vpop.f32.mrb[0].mxu0
    %v2781 = vpop.f32.mrb[0].mxu0
    %v2782 = vadd.f32 %v2734, %v2781
    %v2783 = vpop.f32.mrb[0].mxu0
    %2784 = vmatprep.mubr.bf16.mxu0 %v2013
    %2785 = vmatmul.mubr.bf16.gmra.mrb[0].mxu0 %v2008
    %v2786 = vpop.f32.mrb[0].mxu0
    %v2787 = vadd.f32 %v2739, %v2786
    %v2788 = vpop.f32.mrb[0].mxu0
    %v2789 = vpop.f32.mrb[0].mxu0
    %v2790 = vpop.f32.mrb[0].mxu0
    %2791 = vdwg.mxu0
    %2792 = vmatprep.subr.bf16.mxu0 0
    %2793 = vmatpush1.bf16.msra.mxu0 %v2568
    %2794 = vmatprep.subr.bf16.mxu0 0
    %2795 = vmatpush1.bf16.msra.mxu0 %v2569
    %2796 = vmatprep.subr.bf16.mxu0 0
    %2797 = vmatpush1.bf16.msra.mxu0 %v2570
    %2798 = vmatprep.subr.bf16.mxu0 0
    %2799 = vmatpush1.bf16.msra.mxu0 %v2571
    %2800 = vmatprep.subr.bf16.mxu0 0
    %2801 = vmatpush1.bf16.msra.mxu0 %v2572
    %2802 = vmatprep.subr.bf16.mxu0 0
    %2803 = vmatpush1.bf16.msra.mxu0 %v2573
    %2804 = vmatprep.subr.bf16.mxu0 0
    %2805 = vmatpush1.bf16.msra.mxu0 %v2574
    %2806 = vmatprep.subr.bf16.mxu0 0
    %2807 = vmatpush1.bf16.msra.mxu0 %v2575
    %2808 = vmatprep.subr.bf16.mxu0 0
    %2809 = vmatpush1.bf16.msra.mxu0 %v2576
    %2810 = vmatprep.subr.bf16.mxu0 0
    %2811 = vmatpush1.bf16.msra.mxu0 %v2577
    %2812 = vmatprep.subr.bf16.mxu0 0
    %2813 = vmatpush1.bf16.msra.mxu0 %v2578
    %2814 = vmatprep.subr.bf16.mxu0 0
    %2815 = vmatpush1.bf16.msra.mxu0 %v2579
    %2816 = vmatprep.subr.bf16.mxu0 0
    %2817 = vmatpush1.bf16.msra.mxu0 %v2580
    %2818 = vmatprep.subr.bf16.mxu0 0
    %2819 = vmatpush1.bf16.msra.mxu0 %v2581
    %2820 = vmatprep.subr.bf16.mxu0 0
    %2821 = vmatpush1.bf16.msra.mxu0 %v2582
    %2822 = vmatprep.subr.bf16.mxu0 0
    %2823 = vmatpush1.bf16.msra.mxu0 %v2583
    %2824 = vmatprep.mubr.bf16.mxu0 %v2022
    %2825 = vmatmul.mubr.bf16.gmra.mrb[0].mxu0 %v2017
    %v2826 = vpop.f32.mrb[0].mxu0
    %v2827 = vadd.f32 %v2779, %v2826
    %v2828 = vpop.f32.mrb[0].mxu0
    %v2829 = vpop.f32.mrb[0].mxu0
    %v2830 = vadd.f32 %v2782, %v2829
    %v2831 = vpop.f32.mrb[0].mxu0
    %2832 = vmatprep.mubr.bf16.mxu0 %v2023
    %2833 = vmatmul.mubr.bf16.gmra.mrb[0].mxu0 %v2018
    %v2834 = vpop.f32.mrb[0].mxu0
    %v2835 = vadd.f32 %v2787, %v2834
    %v2836 = vpop.f32.mrb[0].mxu0
    %v2837 = vpop.f32.mrb[0].mxu0
    %v2838 = vpop.f32.mrb[0].mxu0
    %2839 = vdwg.mxu0
    %v2840 = vpack.c.bf16 %v2830, %v2827
    %v2841 = vpack.c.bf16 %v2835, %v2835
    %v2843 = vsel %vm738, %v2841, 0
    %2845 = vmatprep.subr.bf16.mxu0 0
    %2846 = vmatpush1.bf16.msra.mxu0 %v2840
    %2847 = vmatprep.subr.bf16.mxu0 0
    %2848 = vmatpush1.bf16.msra.mxu0 %v2843
    %2849 = vmatprep.subr.bf16.mxu0 0
    %2850 = vmatpush1.bf16.msra.mxu0 0
    %2851 = vmatprep.subr.bf16.mxu0 0
    %2852 = vmatpush1.bf16.msra.mxu0 0
    %2853 = vmatprep.subr.bf16.mxu0 0
    %2854 = vmatpush1.bf16.msra.mxu0 0
    %2855 = vmatprep.subr.bf16.mxu0 0
    %2856 = vmatpush1.bf16.msra.mxu0 0
    %2857 = vmatprep.subr.bf16.mxu0 0
    %2858 = vmatpush1.bf16.msra.mxu0 0
    %2859 = vmatprep.subr.bf16.mxu0 0
    %2860 = vmatpush1.bf16.msra.mxu0 0
    %2861 = vmatprep.subr.bf16.mxu0 0
    %2862 = vmatpush1.bf16.msra.mxu0 0
    %2863 = vmatprep.subr.bf16.mxu0 0
    %2864 = vmatpush1.bf16.msra.mxu0 0
    %2865 = vmatprep.subr.bf16.mxu0 0
    %2866 = vmatpush1.bf16.msra.mxu0 0
    %2867 = vmatprep.subr.bf16.mxu0 0
    %2868 = vmatpush1.bf16.msra.mxu0 0
    %2869 = vmatprep.subr.bf16.mxu0 0
    %2870 = vmatpush1.bf16.msra.mxu0 0
    %2871 = vmatprep.subr.bf16.mxu0 0
    %2872 = vmatpush1.bf16.msra.mxu0 0
    %2873 = vmatprep.subr.bf16.mxu0 0
    %2874 = vmatpush1.bf16.msra.mxu0 0
    %2875 = vmatprep.subr.bf16.mxu0 0
    %2876 = vmatpush1.bf16.msra.mxu0 0
    %2877 = vmatprep.mubr.bf16.mxu0 0
    %2878 = vmatmul.mubr.bf16.gmra.mrb[0].mxu0 %v736
    %v2879 = vpop.f32.mrb[0].mxu0
    %v2880 = vadd.f32 0.0, %v2879
    %v2881 = vpop.f32.mrb[0].mxu0
    %v2882 = vpop.f32.mrb[0].mxu0
    %v2883 = vadd.f32 0.0, %v2882
    %v2884 = vpop.f32.mrb[0].mxu0
    %2885 = vdwg.mxu0
    %v2886 = vmul.f32 %v2880, %v786
    %v2887 = vmul.f32 %v2883, %v791
    %v2888 = vld [vmem:[#allocation19] sm:$0xf]
    %v2889 = vld [vmem:[#allocation19 + $0x4] sm:$0xf]
    %v2890 = vld [vmem:[#allocation19 + $0x8] sm:$0xf]
    %v2891 = vld [vmem:[#allocation19 + $0xc] sm:$0xf]
    %v2892 = vld [vmem:[#allocation19 + $0x10] sm:$0xf]
    %v2893 = vld [vmem:[#allocation19 + $0x14] sm:$0xf]
    %v2894 = vld [vmem:[#allocation19 + $0x18] sm:$0xf]
    %v2895 = vld [vmem:[#allocation19 + $0x1c] sm:$0xf]
    %v2896 = vld [vmem:[#allocation19 + $0x20] sm:$0xf]
    %v2897 = vld [vmem:[#allocation19 + $0x24] sm:$0xf]
    %v2898 = vld [vmem:[#allocation19 + $0x28] sm:$0xf]
    %v2899 = vld [vmem:[#allocation19 + $0x2c] sm:$0xf]
    %v2900 = vld [vmem:[#allocation19 + $0x30] sm:$0xf]
    %v2901 = vld [vmem:[#allocation19 + $0x34] sm:$0xf]
    %v2902 = vld [vmem:[#allocation19 + $0x38] sm:$0xf]
    %v2903 = vld [vmem:[#allocation19 + $0x3c] sm:$0xf]
    %v2920 = vunpack.c.l.b16 %v2888
    %v2921 = vunpack.c.l.b16 %v2889
    %v2922 = vunpack.c.l.b16 %v2890
    %v2923 = vunpack.c.l.b16 %v2891
    %v2924 = vunpack.c.l.b16 %v2892
    %v2925 = vunpack.c.l.b16 %v2893
    %v2926 = vunpack.c.l.b16 %v2894
    %v2927 = vunpack.c.l.b16 %v2895
    %v2928 = vunpack.c.l.b16 %v2896
    %v2929 = vunpack.c.l.b16 %v2897
    %v2930 = vunpack.c.l.b16 %v2898
    %v2931 = vunpack.c.l.b16 %v2899
    %v2932 = vunpack.c.l.b16 %v2900
    %v2933 = vunpack.c.l.b16 %v2901
    %v2934 = vunpack.c.l.b16 %v2902
    %v2935 = vunpack.c.l.b16 %v2903
    %v2936 = vpack.c.b16 %v2921, %v2920
    %v2937 = vpack.c.b16 %v2923, %v2922
    %v2938 = vpack.c.b16 %v2925, %v2924
    %v2939 = vpack.c.b16 %v2927, %v2926
    %v2940 = vpack.c.b16 %v2929, %v2928
    %v2941 = vpack.c.b16 %v2931, %v2930
    %v2942 = vpack.c.b16 %v2933, %v2932
    %v2943 = vpack.c.b16 %v2935, %v2934
    %2952 = vmatprep.subr.bf16.mxu0 0
    %2953 = vmatpush1.bf16.msra.mxu0 %v2936
    %2954 = vmatprep.subr.bf16.mxu0 0
    %2955 = vmatpush1.bf16.msra.mxu0 %v2937
    %2956 = vmatprep.subr.bf16.mxu0 0
    %2957 = vmatpush1.bf16.msra.mxu0 %v2938
    %2958 = vmatprep.subr.bf16.mxu0 0
    %2959 = vmatpush1.bf16.msra.mxu0 %v2939
    %2960 = vmatprep.subr.bf16.mxu0 0
    %2961 = vmatpush1.bf16.msra.mxu0 %v2940
    %2962 = vmatprep.subr.bf16.mxu0 0
    %2963 = vmatpush1.bf16.msra.mxu0 %v2941
    %2964 = vmatprep.subr.bf16.mxu0 0
    %2965 = vmatpush1.bf16.msra.mxu0 %v2942
    %2966 = vmatprep.subr.bf16.mxu0 0
    %2967 = vmatpush1.bf16.msra.mxu0 %v2943
    %2968 = vmatprep.subr.bf16.mxu0 0
    %2969 = vmatpush1.bf16.msra.mxu0 0
    %2970 = vmatprep.subr.bf16.mxu0 0
    %2971 = vmatpush1.bf16.msra.mxu0 0
    %2972 = vmatprep.subr.bf16.mxu0 0
    %2973 = vmatpush1.bf16.msra.mxu0 0
    %2974 = vmatprep.subr.bf16.mxu0 0
    %2975 = vmatpush1.bf16.msra.mxu0 0
    %2976 = vmatprep.subr.bf16.mxu0 0
    %2977 = vmatpush1.bf16.msra.mxu0 0
    %2978 = vmatprep.subr.bf16.mxu0 0
    %2979 = vmatpush1.bf16.msra.mxu0 0
    %2980 = vmatprep.subr.bf16.mxu0 0
    %2981 = vmatpush1.bf16.msra.mxu0 0
    %2982 = vmatprep.subr.bf16.mxu0 0
    %2983 = vmatpush1.bf16.msra.mxu0 0
    %2984 = vmatprep.mubr.bf16.mxu0 0
    %2985 = vmatmul.mubr.bf16.gmra.mrb[0].mxu0 %v1933
    %v2986 = vpop.f32.mrb[0].mxu0
    %v2987 = vadd.f32 0.0, %v2986
    %v2988 = vpop.f32.mrb[0].mxu0
    %v2989 = vpop.f32.mrb[0].mxu0
    %v2990 = vadd.f32 0.0, %v2989
    %v2991 = vpop.f32.mrb[0].mxu0
    %2992 = vdwg.mxu0
    %v2993 = vadd.f32 %v2886, %v2987
    %v2994 = vadd.f32 %v2887, %v2990
    %v2995 = vld [vmem:[#allocation20] sm:$0x1]
    %v2997 = vlaneseq
    %v2998 = vshrl.u32 %v2997, 7
    %v2999 = vsub.s32 0, %v2998
    %v3000 = vrot.slane %v2995, %v2999
    %v3002 = vadd.f32 %v2993, %v3000
    %v3003 = vadd.f32 %v2994, %v3000
    %v3004 = vmax.f32 %v3002, 0.0
    %v3005 = vmax.f32 %v3003, 0.0
    %v3006 = vpack.c.bf16 %v3005, %v3004
    %3007 = vmatprep.subr.bf16.mxu0 0
    %3008 = vmatpush1.bf16.msra.mxu0 %v3006
    %3009 = vmatprep.subr.bf16.mxu0 0
    %3010 = vmatpush1.bf16.msra.mxu0 0
    %3011 = vmatprep.subr.bf16.mxu0 0
    %3012 = vmatpush1.bf16.msra.mxu0 0
    %3013 = vmatprep.subr.bf16.mxu0 0
    %3014 = vmatpush1.bf16.msra.mxu0 0
    %3015 = vmatprep.subr.bf16.mxu0 0
    %3016 = vmatpush1.bf16.msra.mxu0 0
    %3017 = vmatprep.subr.bf16.mxu0 0
    %3018 = vmatpush1.bf16.msra.mxu0 0
    %3019 = vmatprep.subr.bf16.mxu0 0
    %3020 = vmatpush1.bf16.msra.mxu0 0
    %3021 = vmatprep.subr.bf16.mxu0 0
    %3022 = vmatpush1.bf16.msra.mxu0 0
    %3023 = vmatprep.subr.bf16.mxu0 0
    %3024 = vmatpush1.bf16.msra.mxu0 0
    %3025 = vmatprep.subr.bf16.mxu0 0
    %3026 = vmatpush1.bf16.msra.mxu0 0
    %3027 = vmatprep.subr.bf16.mxu0 0
    %3028 = vmatpush1.bf16.msra.mxu0 0
    %3029 = vmatprep.subr.bf16.mxu0 0
    %3030 = vmatpush1.bf16.msra.mxu0 0
    %3031 = vmatprep.subr.bf16.mxu0 0
    %3032 = vmatpush1.bf16.msra.mxu0 0
    %3033 = vmatprep.subr.bf16.mxu0 0
    %3034 = vmatpush1.bf16.msra.mxu0 0
    %3035 = vmatprep.subr.bf16.mxu0 0
    %3036 = vmatpush1.bf16.msra.mxu0 0
    %3037 = vmatprep.subr.bf16.mxu0 0
    %3038 = vmatpush1.bf16.msra.mxu0 0
    %3039 = vmatprep.mubr.bf16.mxu0 0
    %3040 = vmatmul.mubr.bf16.gmra.mrb[0].mxu0 %v279
    %v3041 = vpop.f32.mrb[0].mxu0
    %v3042 = vadd.f32 0.0, %v3041
    %v3043 = vpop.f32.mrb[0].mxu0
    %v3044 = vpop.f32.mrb[0].mxu0
    %v3045 = vadd.f32 0.0, %v3044
    %v3046 = vpop.f32.mrb[0].mxu0
    %3047 = vmatprep.mubr.bf16.mxu0 0
    %3048 = vmatmul.mubr.bf16.gmra.mrb[0].mxu0 %v282
    %v3049 = vpop.f32.mrb[0].mxu0
    %v3050 = vadd.f32 0.0, %v3049
    %v3051 = vpop.f32.mrb[0].mxu0
    %v3052 = vpop.f32.mrb[0].mxu0
    %v3053 = vpop.f32.mrb[0].mxu0
    %3054 = vdwg.mxu0
    %v3055 = vpack.c.bf16 %v3045, %v3042
    %v3056 = vpack.c.bf16 %v3050, %v3050
    %v3057 = vmul.f32 %v3042, %v337
    %v3058 = vmul.f32 %v3045, %v342
    %v3059 = vmul.f32 %v3050, %v347
    %v3060 = vpack.c.bf16 %v3058, %v3057
    %v3061 = vpack.c.bf16 %v3059, %v3059
    %v3062 = vmul.f32 %v3042, %v356
    %v3063 = vmul.f32 %v3045, %v360
    %v3064 = vmul.f32 %v3050, %v364
    %v3065 = vpack.c.bf16 %v3063, %v3062
    %v3066 = vpack.c.bf16 %v3064, %v3064
    %v3067 = vmul.f32 %v3042, %v373
    %v3068 = vmul.f32 %v3045, %v377
    %v3069 = vmul.f32 %v3050, %v381
    %v3070 = vpack.c.bf16 %v3068, %v3067
    %v3071 = vpack.c.bf16 %v3069, %v3069
    %v3072 = vmul.f32 %v3042, %v390
    %v3073 = vmul.f32 %v3045, %v394
    %v3074 = vmul.f32 %v3050, %v398
    %v3075 = vpack.c.bf16 %v3073, %v3072
    %v3076 = vpack.c.bf16 %v3074, %v3074
    %v3077 = vmul.f32 %v3042, %v407
    %v3078 = vmul.f32 %v3045, %v411
    %v3079 = vmul.f32 %v3050, %v415
    %v3080 = vpack.c.bf16 %v3078, %v3077
    %v3081 = vpack.c.bf16 %v3079, %v3079
    %v3082 = vmul.f32 %v3042, %v424
    %v3083 = vmul.f32 %v3045, %v428
    %v3084 = vmul.f32 %v3050, %v432
    %v3085 = vpack.c.bf16 %v3083, %v3082
    %v3086 = vpack.c.bf16 %v3084, %v3084
    %v3087 = vmul.f32 %v3042, %v441
    %v3088 = vmul.f32 %v3045, %v445
    %v3089 = vmul.f32 %v3050, %v449
    %v3090 = vpack.c.bf16 %v3088, %v3087
    %v3091 = vpack.c.bf16 %v3089, %v3089
    %v3092 = vmul.f32 %v3042, %v458
    %v3093 = vmul.f32 %v3045, %v462
    %v3094 = vmul.f32 %v3050, %v466
    %v3095 = vpack.c.bf16 %v3093, %v3092
    %v3096 = vpack.c.bf16 %v3094, %v3094
    %v3097 = vld [vmem:[#allocation22] sm:$0xf]
    %v3098 = vld [vmem:[#allocation22 + $0x4] sm:$0xf]
    %v3099 = vld [vmem:[#allocation22 + $0x8] sm:$0xf]
    %v3100 = vld [vmem:[#allocation22 + $0xc] sm:$0xf]
    %v3101 = vld [vmem:[#allocation22 + $0x10] sm:$0xf]
    %v3102 = vld [vmem:[#allocation22 + $0x14] sm:$0xf]
    %v3103 = vld [vmem:[#allocation22 + $0x18] sm:$0xf]
    %v3104 = vld [vmem:[#allocation22 + $0x1c] sm:$0xf]
    %v3105 = vld [vmem:[#allocation22 + $0x20] sm:$0xf]
    %v3106 = vld [vmem:[#allocation22 + $0x24] sm:$0xf]
    %v3107 = vld [vmem:[#allocation22 + $0x28] sm:$0xf]
    %v3108 = vld [vmem:[#allocation22 + $0x2c] sm:$0xf]
    %v3109 = vld [vmem:[#allocation22 + $0x30] sm:$0xf]
    %v3110 = vld [vmem:[#allocation22 + $0x34] sm:$0xf]
    %v3111 = vld [vmem:[#allocation22 + $0x38] sm:$0xf]
    %v3112 = vld [vmem:[#allocation22 + $0x3c] sm:$0xf]
    %v3113 = vld [vmem:[#allocation22 + $0x40] sm:$0xf]
    %v3114 = vld [vmem:[#allocation22 + $0x44] sm:$0xf]
    %v3115 = vld [vmem:[#allocation22 + $0x48] sm:$0xf]
    %v3116 = vld [vmem:[#allocation22 + $0x4c] sm:$0xf]
    %v3117 = vld [vmem:[#allocation22 + $0x50] sm:$0xf]
    %v3118 = vld [vmem:[#allocation22 + $0x54] sm:$0xf]
    %v3119 = vld [vmem:[#allocation22 + $0x58] sm:$0xf]
    %v3120 = vld [vmem:[#allocation22 + $0x5c] sm:$0xf]
    %v3121 = vld [vmem:[#allocation22 + $0x60] sm:$0xf]
    %v3122 = vld [vmem:[#allocation22 + $0x64] sm:$0xf]
    %v3123 = vld [vmem:[#allocation22 + $0x68] sm:$0xf]
    %v3124 = vld [vmem:[#allocation22 + $0x6c] sm:$0xf]
    %v3125 = vld [vmem:[#allocation22 + $0x70] sm:$0xf]
    %v3126 = vld [vmem:[#allocation22 + $0x74] sm:$0xf]
    %v3127 = vld [vmem:[#allocation22 + $0x78] sm:$0xf]
    %v3128 = vld [vmem:[#allocation22 + $0x7c] sm:$0xf]
    %v3129 = vld [vmem:[#allocation22 + $0x80] sm:$0xf]
    %v3130 = vld [vmem:[#allocation22 + $0x84] sm:$0xf]
    %v3131 = vld [vmem:[#allocation22 + $0x88] sm:$0xf]
    %v3132 = vld [vmem:[#allocation22 + $0x8c] sm:$0xf]
    %v3133 = vld [vmem:[#allocation22 + $0x90] sm:$0xf]
    %v3134 = vld [vmem:[#allocation22 + $0x94] sm:$0xf]
    %v3135 = vld [vmem:[#allocation22 + $0x98] sm:$0xf]
    %v3136 = vld [vmem:[#allocation22 + $0x9c] sm:$0xf]
    %v3137 = vld [vmem:[#allocation22 + $0xa0] sm:$0xf]
    %v3138 = vld [vmem:[#allocation22 + $0xa4] sm:$0xf]
    %v3139 = vld [vmem:[#allocation22 + $0xa8] sm:$0xf]
    %v3140 = vld [vmem:[#allocation22 + $0xac] sm:$0xf]
    %v3141 = vld [vmem:[#allocation22 + $0xb0] sm:$0xf]
    %v3142 = vld [vmem:[#allocation22 + $0xb4] sm:$0xf]
    %v3143 = vld [vmem:[#allocation22 + $0xb8] sm:$0xf]
    %v3144 = vld [vmem:[#allocation22 + $0xbc] sm:$0xf]
    %v3145 = vld [vmem:[#allocation22 + $0xc0] sm:$0xf]
    %v3146 = vld [vmem:[#allocation22 + $0xc4] sm:$0xf]
    %v3147 = vld [vmem:[#allocation22 + $0xc8] sm:$0xf]
    %v3148 = vld [vmem:[#allocation22 + $0xcc] sm:$0xf]
    %v3149 = vld [vmem:[#allocation22 + $0xd0] sm:$0xf]
    %v3150 = vld [vmem:[#allocation22 + $0xd4] sm:$0xf]
    %v3151 = vld [vmem:[#allocation22 + $0xd8] sm:$0xf]
    %v3152 = vld [vmem:[#allocation22 + $0xdc] sm:$0xf]
    %v3153 = vld [vmem:[#allocation22 + $0xe0] sm:$0xf]
    %v3154 = vld [vmem:[#allocation22 + $0xe4] sm:$0xf]
    %v3155 = vld [vmem:[#allocation22 + $0xe8] sm:$0xf]
    %v3156 = vld [vmem:[#allocation22 + $0xec] sm:$0xf]
    %v3157 = vld [vmem:[#allocation22 + $0xf0] sm:$0xf]
    %v3158 = vld [vmem:[#allocation22 + $0xf4] sm:$0xf]
    %v3159 = vld [vmem:[#allocation22 + $0xf8] sm:$0xf]
    %v3160 = vld [vmem:[#allocation22 + $0xfc] sm:$0xf]
    %v3161 = vld [vmem:[#allocation22 + $0x100] sm:$0xf]
    %v3162 = vld [vmem:[#allocation22 + $0x104] sm:$0xf]
    %v3163 = vld [vmem:[#allocation22 + $0x108] sm:$0xf]
    %v3164 = vld [vmem:[#allocation22 + $0x10c] sm:$0xf]
    %v3165 = vld [vmem:[#allocation22 + $0x110] sm:$0xf]
    %v3166 = vld [vmem:[#allocation22 + $0x114] sm:$0xf]
    %v3167 = vld [vmem:[#allocation22 + $0x118] sm:$0xf]
    %v3168 = vld [vmem:[#allocation22 + $0x11c] sm:$0xf]
    %v3169 = vld [vmem:[#allocation22 + $0x120] sm:$0xf]
    %v3170 = vld [vmem:[#allocation22 + $0x124] sm:$0xf]
    %v3171 = vld [vmem:[#allocation22 + $0x128] sm:$0xf]
    %v3172 = vld [vmem:[#allocation22 + $0x12c] sm:$0xf]
    %v3173 = vld [vmem:[#allocation22 + $0x130] sm:$0xf]
    %v3174 = vld [vmem:[#allocation22 + $0x134] sm:$0xf]
    %v3175 = vld [vmem:[#allocation22 + $0x138] sm:$0xf]
    %v3176 = vld [vmem:[#allocation22 + $0x13c] sm:$0xf]
    %v3177 = vld [vmem:[#allocation22 + $0x140] sm:$0xf]
    %v3178 = vld [vmem:[#allocation22 + $0x144] sm:$0xf]
    %v3179 = vld [vmem:[#allocation22 + $0x148] sm:$0xf]
    %v3180 = vld [vmem:[#allocation22 + $0x14c] sm:$0xf]
    %v3181 = vld [vmem:[#allocation22 + $0x150] sm:$0xf]
    %v3182 = vld [vmem:[#allocation22 + $0x154] sm:$0xf]
    %v3183 = vld [vmem:[#allocation22 + $0x158] sm:$0xf]
    %v3184 = vld [vmem:[#allocation22 + $0x15c] sm:$0xf]
    %v3185 = vld [vmem:[#allocation22 + $0x160] sm:$0xf]
    %v3186 = vld [vmem:[#allocation22 + $0x164] sm:$0xf]
    %v3187 = vld [vmem:[#allocation22 + $0x168] sm:$0xf]
    %v3188 = vld [vmem:[#allocation22 + $0x16c] sm:$0xf]
    %v3189 = vld [vmem:[#allocation22 + $0x170] sm:$0xf]
    %v3190 = vld [vmem:[#allocation22 + $0x174] sm:$0xf]
    %v3191 = vld [vmem:[#allocation22 + $0x178] sm:$0xf]
    %v3192 = vld [vmem:[#allocation22 + $0x17c] sm:$0xf]
    %v3193 = vld [vmem:[#allocation22 + $0x180] sm:$0xf]
    %v3194 = vld [vmem:[#allocation22 + $0x184] sm:$0xf]
    %v3195 = vld [vmem:[#allocation22 + $0x188] sm:$0xf]
    %v3196 = vld [vmem:[#allocation22 + $0x18c] sm:$0xf]
    %v3197 = vld [vmem:[#allocation22 + $0x190] sm:$0xf]
    %v3198 = vld [vmem:[#allocation22 + $0x194] sm:$0xf]
    %v3199 = vld [vmem:[#allocation22 + $0x198] sm:$0xf]
    %v3200 = vld [vmem:[#allocation22 + $0x19c] sm:$0xf]
    %v3201 = vld [vmem:[#allocation22 + $0x1a0] sm:$0xf]
    %v3202 = vld [vmem:[#allocation22 + $0x1a4] sm:$0xf]
    %v3203 = vld [vmem:[#allocation22 + $0x1a8] sm:$0xf]
    %v3204 = vld [vmem:[#allocation22 + $0x1ac] sm:$0xf]
    %v3205 = vld [vmem:[#allocation22 + $0x1b0] sm:$0xf]
    %v3206 = vld [vmem:[#allocation22 + $0x1b4] sm:$0xf]
    %v3207 = vld [vmem:[#allocation22 + $0x1b8] sm:$0xf]
    %v3208 = vld [vmem:[#allocation22 + $0x1bc] sm:$0xf]
    %v3209 = vld [vmem:[#allocation22 + $0x1c0] sm:$0xf]
    %v3210 = vld [vmem:[#allocation22 + $0x1c4] sm:$0xf]
    %v3211 = vld [vmem:[#allocation22 + $0x1c8] sm:$0xf]
    %v3212 = vld [vmem:[#allocation22 + $0x1cc] sm:$0xf]
    %v3213 = vld [vmem:[#allocation22 + $0x1d0] sm:$0xf]
    %v3214 = vld [vmem:[#allocation22 + $0x1d4] sm:$0xf]
    %v3215 = vld [vmem:[#allocation22 + $0x1d8] sm:$0xf]
    %v3216 = vld [vmem:[#allocation22 + $0x1dc] sm:$0xf]
    %v3217 = vld [vmem:[#allocation22 + $0x1e0] sm:$0xf]
    %v3218 = vld [vmem:[#allocation22 + $0x1e4] sm:$0xf]
    %v3219 = vld [vmem:[#allocation22 + $0x1e8] sm:$0xf]
    %v3220 = vld [vmem:[#allocation22 + $0x1ec] sm:$0xf]
    %v3221 = vld [vmem:[#allocation22 + $0x1f0] sm:$0xf]
    %v3222 = vld [vmem:[#allocation22 + $0x1f4] sm:$0xf]
    %v3223 = vld [vmem:[#allocation22 + $0x1f8] sm:$0xf]
    %v3224 = vld [vmem:[#allocation22 + $0x1fc] sm:$0xf]
    %v3225 = vld [vmem:[%s18] sm:$0xf]
    %v3226 = vld [vmem:[%s18 + $0x4] sm:$0xf]
    %v3227 = vld [vmem:[%s18 + $0x8] sm:$0xf]
    %v3228 = vld [vmem:[%s18 + $0xc] sm:$0xf]
    %v3229 = vld [vmem:[%s18 + $0x10] sm:$0xf]
    %v3230 = vld [vmem:[%s18 + $0x14] sm:$0xf]
    %v3231 = vld [vmem:[%s18 + $0x18] sm:$0xf]
    %v3232 = vld [vmem:[%s18 + $0x1c] sm:$0xf]
    %v3233 = vld [vmem:[%s18 + $0x20] sm:$0xf]
    %v3234 = vld [vmem:[%s18 + $0x24] sm:$0xf]
    %v3235 = vld [vmem:[%s18 + $0x28] sm:$0xf]
    %v3236 = vld [vmem:[%s18 + $0x2c] sm:$0xf]
    %v3237 = vld [vmem:[%s18 + $0x30] sm:$0xf]
    %v3238 = vld [vmem:[%s18 + $0x34] sm:$0xf]
    %v3239 = vld [vmem:[%s18 + $0x38] sm:$0xf]
    %v3240 = vld [vmem:[%s18 + $0x3c] sm:$0xf]
    %v3257 = vunpack.c.l.b16 %v3225
    %v3258 = vunpack.c.l.b16 %v3226
    %v3259 = vunpack.c.l.b16 %v3227
    %v3260 = vunpack.c.l.b16 %v3228
    %v3261 = vunpack.c.l.b16 %v3229
    %v3262 = vunpack.c.l.b16 %v3230
    %v3263 = vunpack.c.l.b16 %v3231
    %v3264 = vunpack.c.l.b16 %v3232
    %v3265 = vunpack.c.l.b16 %v3233
    %v3266 = vunpack.c.l.b16 %v3234
    %v3267 = vunpack.c.l.b16 %v3235
    %v3268 = vunpack.c.l.b16 %v3236
    %v3269 = vunpack.c.l.b16 %v3237
    %v3270 = vunpack.c.l.b16 %v3238
    %v3271 = vunpack.c.l.b16 %v3239
    %v3272 = vunpack.c.l.b16 %v3240
    %v3273 = vpack.c.b16 %v3258, %v3257
    %v3274 = vpack.c.b16 %v3260, %v3259
    %v3275 = vpack.c.b16 %v3262, %v3261
    %v3276 = vpack.c.b16 %v3264, %v3263
    %v3277 = vpack.c.b16 %v3266, %v3265
    %v3278 = vpack.c.b16 %v3268, %v3267
    %v3279 = vpack.c.b16 %v3270, %v3269
    %v3280 = vpack.c.b16 %v3272, %v3271
    %3289 = vmatprep.subr.bf16.mxu0 0
    %3290 = vmatpush1.bf16.msra.mxu0 %v3273
    %3291 = vmatprep.subr.bf16.mxu0 0
    %3292 = vmatpush1.bf16.msra.mxu0 %v3274
    %3293 = vmatprep.subr.bf16.mxu0 0
    %3294 = vmatpush1.bf16.msra.mxu0 %v3275
    %3295 = vmatprep.subr.bf16.mxu0 0
    %3296 = vmatpush1.bf16.msra.mxu0 %v3276
    %3297 = vmatprep.subr.bf16.mxu0 0
    %3298 = vmatpush1.bf16.msra.mxu0 %v3277
    %3299 = vmatprep.subr.bf16.mxu0 0
    %3300 = vmatpush1.bf16.msra.mxu0 %v3278
    %3301 = vmatprep.subr.bf16.mxu0 0
    %3302 = vmatpush1.bf16.msra.mxu0 %v3279
    %3303 = vmatprep.subr.bf16.mxu0 0
    %3304 = vmatpush1.bf16.msra.mxu0 %v3280
    %3305 = vmatprep.subr.bf16.mxu0 0
    %3306 = vmatpush1.bf16.msra.mxu0 0
    %3307 = vmatprep.subr.bf16.mxu0 0
    %3308 = vmatpush1.bf16.msra.mxu0 0
    %3309 = vmatprep.subr.bf16.mxu0 0
    %3310 = vmatpush1.bf16.msra.mxu0 0
    %3311 = vmatprep.subr.bf16.mxu0 0
    %3312 = vmatpush1.bf16.msra.mxu0 0
    %3313 = vmatprep.subr.bf16.mxu0 0
    %3314 = vmatpush1.bf16.msra.mxu0 0
    %3315 = vmatprep.subr.bf16.mxu0 0
    %3316 = vmatpush1.bf16.msra.mxu0 0
    %3317 = vmatprep.subr.bf16.mxu0 0
    %3318 = vmatpush1.bf16.msra.mxu0 0
    %3319 = vmatprep.subr.bf16.mxu0 0
    %3320 = vmatpush1.bf16.msra.mxu0 0
    %3321 = vmatprep.mubr.bf16.mxu0 0
    %3322 = vmatmul.mubr.bf16.gmra.mrb[0].mxu0 %v3055
    %v3323 = vpop.f32.mrb[0].mxu0
    %v3324 = vadd.f32 0.0, %v3323
    %v3325 = vpop.f32.mrb[0].mxu0
    %v3326 = vpop.f32.mrb[0].mxu0
    %v3327 = vadd.f32 0.0, %v3326
    %v3328 = vpop.f32.mrb[0].mxu0
    %3329 = vmatprep.mubr.bf16.mxu0 0
    %3330 = vmatmul.mubr.bf16.gmra.mrb[0].mxu0 %v3056
    %v3331 = vpop.f32.mrb[0].mxu0
    %v3332 = vadd.f32 0.0, %v3331
    %v3333 = vpop.f32.mrb[0].mxu0
    %v3334 = vpop.f32.mrb[0].mxu0
    %v3335 = vpop.f32.mrb[0].mxu0
    %3336 = vdwg.mxu0
    %v3465 = vunpack.c.l.b16 %v3097
    %v3466 = vunpack.c.l.b16 %v3098
    %v3467 = vunpack.c.l.b16 %v3099
    %v3468 = vunpack.c.l.b16 %v3100
    %v3469 = vunpack.c.l.b16 %v3101
    %v3470 = vunpack.c.l.b16 %v3102
    %v3471 = vunpack.c.l.b16 %v3103
    %v3472 = vunpack.c.l.b16 %v3104
    %v3473 = vunpack.c.l.b16 %v3105
    %v3474 = vunpack.c.l.b16 %v3106
    %v3475 = vunpack.c.l.b16 %v3107
    %v3476 = vunpack.c.l.b16 %v3108
    %v3477 = vunpack.c.l.b16 %v3109
    %v3478 = vunpack.c.l.b16 %v3110
    %v3479 = vunpack.c.l.b16 %v3111
    %v3480 = vunpack.c.l.b16 %v3112
    %v3481 = vunpack.c.l.b16 %v3113
    %v3482 = vunpack.c.l.b16 %v3114
    %v3483 = vunpack.c.l.b16 %v3115
    %v3484 = vunpack.c.l.b16 %v3116
    %v3485 = vunpack.c.l.b16 %v3117
    %v3486 = vunpack.c.l.b16 %v3118
    %v3487 = vunpack.c.l.b16 %v3119
    %v3488 = vunpack.c.l.b16 %v3120
    %v3489 = vunpack.c.l.b16 %v3121
    %v3490 = vunpack.c.l.b16 %v3122
    %v3491 = vunpack.c.l.b16 %v3123
    %v3492 = vunpack.c.l.b16 %v3124
    %v3493 = vunpack.c.l.b16 %v3125
    %v3494 = vunpack.c.l.b16 %v3126
    %v3495 = vunpack.c.l.b16 %v3127
    %v3496 = vunpack.c.l.b16 %v3128
    %v3497 = vunpack.c.l.b16 %v3129
    %v3498 = vunpack.c.l.b16 %v3130
    %v3499 = vunpack.c.l.b16 %v3131
    %v3500 = vunpack.c.l.b16 %v3132
    %v3501 = vunpack.c.l.b16 %v3133
    %v3502 = vunpack.c.l.b16 %v3134
    %v3503 = vunpack.c.l.b16 %v3135
    %v3504 = vunpack.c.l.b16 %v3136
    %v3505 = vunpack.c.l.b16 %v3137
    %v3506 = vunpack.c.l.b16 %v3138
    %v3507 = vunpack.c.l.b16 %v3139
    %v3508 = vunpack.c.l.b16 %v3140
    %v3509 = vunpack.c.l.b16 %v3141
    %v3510 = vunpack.c.l.b16 %v3142
    %v3511 = vunpack.c.l.b16 %v3143
    %v3512 = vunpack.c.l.b16 %v3144
    %v3513 = vunpack.c.l.b16 %v3145
    %v3514 = vunpack.c.l.b16 %v3146
    %v3515 = vunpack.c.l.b16 %v3147
    %v3516 = vunpack.c.l.b16 %v3148
    %v3517 = vunpack.c.l.b16 %v3149
    %v3518 = vunpack.c.l.b16 %v3150
    %v3519 = vunpack.c.l.b16 %v3151
    %v3520 = vunpack.c.l.b16 %v3152
    %v3521 = vunpack.c.l.b16 %v3153
    %v3522 = vunpack.c.l.b16 %v3154
    %v3523 = vunpack.c.l.b16 %v3155
    %v3524 = vunpack.c.l.b16 %v3156
    %v3525 = vunpack.c.l.b16 %v3157
    %v3526 = vunpack.c.l.b16 %v3158
    %v3527 = vunpack.c.l.b16 %v3159
    %v3528 = vunpack.c.l.b16 %v3160
    %v3529 = vunpack.c.l.b16 %v3161
    %v3530 = vunpack.c.l.b16 %v3162
    %v3531 = vunpack.c.l.b16 %v3163
    %v3532 = vunpack.c.l.b16 %v3164
    %v3533 = vunpack.c.l.b16 %v3165
    %v3534 = vunpack.c.l.b16 %v3166
    %v3535 = vunpack.c.l.b16 %v3167
    %v3536 = vunpack.c.l.b16 %v3168
    %v3537 = vunpack.c.l.b16 %v3169
    %v3538 = vunpack.c.l.b16 %v3170
    %v3539 = vunpack.c.l.b16 %v3171
    %v3540 = vunpack.c.l.b16 %v3172
    %v3541 = vunpack.c.l.b16 %v3173
    %v3542 = vunpack.c.l.b16 %v3174
    %v3543 = vunpack.c.l.b16 %v3175
    %v3544 = vunpack.c.l.b16 %v3176
    %v3545 = vunpack.c.l.b16 %v3177
    %v3546 = vunpack.c.l.b16 %v3178
    %v3547 = vunpack.c.l.b16 %v3179
    %v3548 = vunpack.c.l.b16 %v3180
    %v3549 = vunpack.c.l.b16 %v3181
    %v3550 = vunpack.c.l.b16 %v3182
    %v3551 = vunpack.c.l.b16 %v3183
    %v3552 = vunpack.c.l.b16 %v3184
    %v3553 = vunpack.c.l.b16 %v3185
    %v3554 = vunpack.c.l.b16 %v3186
    %v3555 = vunpack.c.l.b16 %v3187
    %v3556 = vunpack.c.l.b16 %v3188
    %v3557 = vunpack.c.l.b16 %v3189
    %v3558 = vunpack.c.l.b16 %v3190
    %v3559 = vunpack.c.l.b16 %v3191
    %v3560 = vunpack.c.l.b16 %v3192
    %v3561 = vunpack.c.l.b16 %v3193
    %v3562 = vunpack.c.l.b16 %v3194
    %v3563 = vunpack.c.l.b16 %v3195
    %v3564 = vunpack.c.l.b16 %v3196
    %v3565 = vunpack.c.l.b16 %v3197
    %v3566 = vunpack.c.l.b16 %v3198
    %v3567 = vunpack.c.l.b16 %v3199
    %v3568 = vunpack.c.l.b16 %v3200
    %v3569 = vunpack.c.l.b16 %v3201
    %v3570 = vunpack.c.l.b16 %v3202
    %v3571 = vunpack.c.l.b16 %v3203
    %v3572 = vunpack.c.l.b16 %v3204
    %v3573 = vunpack.c.l.b16 %v3205
    %v3574 = vunpack.c.l.b16 %v3206
    %v3575 = vunpack.c.l.b16 %v3207
    %v3576 = vunpack.c.l.b16 %v3208
    %v3577 = vunpack.c.l.b16 %v3209
    %v3578 = vunpack.c.l.b16 %v3210
    %v3579 = vunpack.c.l.b16 %v3211
    %v3580 = vunpack.c.l.b16 %v3212
    %v3581 = vunpack.c.l.b16 %v3213
    %v3582 = vunpack.c.l.b16 %v3214
    %v3583 = vunpack.c.l.b16 %v3215
    %v3584 = vunpack.c.l.b16 %v3216
    %v3585 = vunpack.c.l.b16 %v3217
    %v3586 = vunpack.c.l.b16 %v3218
    %v3587 = vunpack.c.l.b16 %v3219
    %v3588 = vunpack.c.l.b16 %v3220
    %v3589 = vunpack.c.l.b16 %v3221
    %v3590 = vunpack.c.l.b16 %v3222
    %v3591 = vunpack.c.l.b16 %v3223
    %v3592 = vunpack.c.l.b16 %v3224
    %v3593 = vpack.c.b16 %v3466, %v3465
    %v3594 = vpack.c.b16 %v3468, %v3467
    %v3595 = vpack.c.b16 %v3470, %v3469
    %v3596 = vpack.c.b16 %v3472, %v3471
    %v3597 = vpack.c.b16 %v3474, %v3473
    %v3598 = vpack.c.b16 %v3476, %v3475
    %v3599 = vpack.c.b16 %v3478, %v3477
    %v3600 = vpack.c.b16 %v3480, %v3479
    %v3601 = vpack.c.b16 %v3482, %v3481
    %v3602 = vpack.c.b16 %v3484, %v3483
    %v3603 = vpack.c.b16 %v3486, %v3485
    %v3604 = vpack.c.b16 %v3488, %v3487
    %v3605 = vpack.c.b16 %v3490, %v3489
    %v3606 = vpack.c.b16 %v3492, %v3491
    %v3607 = vpack.c.b16 %v3494, %v3493
    %v3608 = vpack.c.b16 %v3496, %v3495
    %v3609 = vpack.c.b16 %v3498, %v3497
    %v3610 = vpack.c.b16 %v3500, %v3499
    %v3611 = vpack.c.b16 %v3502, %v3501
    %v3612 = vpack.c.b16 %v3504, %v3503
    %v3613 = vpack.c.b16 %v3506, %v3505
    %v3614 = vpack.c.b16 %v3508, %v3507
    %v3615 = vpack.c.b16 %v3510, %v3509
    %v3616 = vpack.c.b16 %v3512, %v3511
    %v3617 = vpack.c.b16 %v3514, %v3513
    %v3618 = vpack.c.b16 %v3516, %v3515
    %v3619 = vpack.c.b16 %v3518, %v3517
    %v3620 = vpack.c.b16 %v3520, %v3519
    %v3621 = vpack.c.b16 %v3522, %v3521
    %v3622 = vpack.c.b16 %v3524, %v3523
    %v3623 = vpack.c.b16 %v3526, %v3525
    %v3624 = vpack.c.b16 %v3528, %v3527
    %v3625 = vpack.c.b16 %v3530, %v3529
    %v3626 = vpack.c.b16 %v3532, %v3531
    %v3627 = vpack.c.b16 %v3534, %v3533
    %v3628 = vpack.c.b16 %v3536, %v3535
    %v3629 = vpack.c.b16 %v3538, %v3537
    %v3630 = vpack.c.b16 %v3540, %v3539
    %v3631 = vpack.c.b16 %v3542, %v3541
    %v3632 = vpack.c.b16 %v3544, %v3543
    %v3633 = vpack.c.b16 %v3546, %v3545
    %v3634 = vpack.c.b16 %v3548, %v3547
    %v3635 = vpack.c.b16 %v3550, %v3549
    %v3636 = vpack.c.b16 %v3552, %v3551
    %v3637 = vpack.c.b16 %v3554, %v3553
    %v3638 = vpack.c.b16 %v3556, %v3555
    %v3639 = vpack.c.b16 %v3558, %v3557
    %v3640 = vpack.c.b16 %v3560, %v3559
    %v3641 = vpack.c.b16 %v3562, %v3561
    %v3642 = vpack.c.b16 %v3564, %v3563
    %v3643 = vpack.c.b16 %v3566, %v3565
    %v3644 = vpack.c.b16 %v3568, %v3567
    %v3645 = vpack.c.b16 %v3570, %v3569
    %v3646 = vpack.c.b16 %v3572, %v3571
    %v3647 = vpack.c.b16 %v3574, %v3573
    %v3648 = vpack.c.b16 %v3576, %v3575
    %v3649 = vpack.c.b16 %v3578, %v3577
    %v3650 = vpack.c.b16 %v3580, %v3579
    %v3651 = vpack.c.b16 %v3582, %v3581
    %v3652 = vpack.c.b16 %v3584, %v3583
    %v3653 = vpack.c.b16 %v3586, %v3585
    %v3654 = vpack.c.b16 %v3588, %v3587
    %v3655 = vpack.c.b16 %v3590, %v3589
    %v3656 = vpack.c.b16 %v3592, %v3591
    %3721 = vmatprep.subr.bf16.mxu0 0
    %3722 = vmatpush1.bf16.msra.mxu0 %v3593
    %3723 = vmatprep.subr.bf16.mxu0 0
    %3724 = vmatpush1.bf16.msra.mxu0 %v3594
    %3725 = vmatprep.subr.bf16.mxu0 0
    %3726 = vmatpush1.bf16.msra.mxu0 %v3595
    %3727 = vmatprep.subr.bf16.mxu0 0
    %3728 = vmatpush1.bf16.msra.mxu0 %v3596
    %3729 = vmatprep.subr.bf16.mxu0 0
    %3730 = vmatpush1.bf16.msra.mxu0 %v3597
    %3731 = vmatprep.subr.bf16.mxu0 0
    %3732 = vmatpush1.bf16.msra.mxu0 %v3598
    %3733 = vmatprep.subr.bf16.mxu0 0
    %3734 = vmatpush1.bf16.msra.mxu0 %v3599
    %3735 = vmatprep.subr.bf16.mxu0 0
    %3736 = vmatpush1.bf16.msra.mxu0 %v3600
    %3737 = vmatprep.subr.bf16.mxu0 0
    %3738 = vmatpush1.bf16.msra.mxu0 %v3601
    %3739 = vmatprep.subr.bf16.mxu0 0
    %3740 = vmatpush1.bf16.msra.mxu0 %v3602
    %3741 = vmatprep.subr.bf16.mxu0 0
    %3742 = vmatpush1.bf16.msra.mxu0 %v3603
    %3743 = vmatprep.subr.bf16.mxu0 0
    %3744 = vmatpush1.bf16.msra.mxu0 %v3604
    %3745 = vmatprep.subr.bf16.mxu0 0
    %3746 = vmatpush1.bf16.msra.mxu0 %v3605
    %3747 = vmatprep.subr.bf16.mxu0 0
    %3748 = vmatpush1.bf16.msra.mxu0 %v3606
    %3749 = vmatprep.subr.bf16.mxu0 0
    %3750 = vmatpush1.bf16.msra.mxu0 %v3607
    %3751 = vmatprep.subr.bf16.mxu0 0
    %3752 = vmatpush1.bf16.msra.mxu0 %v3608
    %3753 = vmatprep.mubr.bf16.mxu0 %v3065
    %3754 = vmatmul.mubr.bf16.gmra.mrb[0].mxu0 %v3060
    %v3755 = vpop.f32.mrb[0].mxu0
    %v3756 = vadd.f32 %v3324, %v3755
    %v3757 = vpop.f32.mrb[0].mxu0
    %v3758 = vpop.f32.mrb[0].mxu0
    %v3759 = vadd.f32 %v3327, %v3758
    %v3760 = vpop.f32.mrb[0].mxu0
    %3761 = vmatprep.mubr.bf16.mxu0 %v3066
    %3762 = vmatmul.mubr.bf16.gmra.mrb[0].mxu0 %v3061
    %v3763 = vpop.f32.mrb[0].mxu0
    %v3764 = vadd.f32 %v3332, %v3763
    %v3765 = vpop.f32.mrb[0].mxu0
    %v3766 = vpop.f32.mrb[0].mxu0
    %v3767 = vpop.f32.mrb[0].mxu0
    %3768 = vdwg.mxu0
    %3769 = vmatprep.subr.bf16.mxu0 0
    %3770 = vmatpush1.bf16.msra.mxu0 %v3609
    %3771 = vmatprep.subr.bf16.mxu0 0
    %3772 = vmatpush1.bf16.msra.mxu0 %v3610
    %3773 = vmatprep.subr.bf16.mxu0 0
    %3774 = vmatpush1.bf16.msra.mxu0 %v3611
    %3775 = vmatprep.subr.bf16.mxu0 0
    %3776 = vmatpush1.bf16.msra.mxu0 %v3612
    %3777 = vmatprep.subr.bf16.mxu0 0
    %3778 = vmatpush1.bf16.msra.mxu0 %v3613
    %3779 = vmatprep.subr.bf16.mxu0 0
    %3780 = vmatpush1.bf16.msra.mxu0 %v3614
    %3781 = vmatprep.subr.bf16.mxu0 0
    %3782 = vmatpush1.bf16.msra.mxu0 %v3615
    %3783 = vmatprep.subr.bf16.mxu0 0
    %3784 = vmatpush1.bf16.msra.mxu0 %v3616
    %3785 = vmatprep.subr.bf16.mxu0 0
    %3786 = vmatpush1.bf16.msra.mxu0 %v3617
    %3787 = vmatprep.subr.bf16.mxu0 0
    %3788 = vmatpush1.bf16.msra.mxu0 %v3618
    %3789 = vmatprep.subr.bf16.mxu0 0
    %3790 = vmatpush1.bf16.msra.mxu0 %v3619
    %3791 = vmatprep.subr.bf16.mxu0 0
    %3792 = vmatpush1.bf16.msra.mxu0 %v3620
    %3793 = vmatprep.subr.bf16.mxu0 0
    %3794 = vmatpush1.bf16.msra.mxu0 %v3621
    %3795 = vmatprep.subr.bf16.mxu0 0
    %3796 = vmatpush1.bf16.msra.mxu0 %v3622
    %3797 = vmatprep.subr.bf16.mxu0 0
    %3798 = vmatpush1.bf16.msra.mxu0 %v3623
    %3799 = vmatprep.subr.bf16.mxu0 0
    %3800 = vmatpush1.bf16.msra.mxu0 %v3624
    %3801 = vmatprep.mubr.bf16.mxu0 %v3075
    %3802 = vmatmul.mubr.bf16.gmra.mrb[0].mxu0 %v3070
    %v3803 = vpop.f32.mrb[0].mxu0
    %v3804 = vadd.f32 %v3756, %v3803
    %v3805 = vpop.f32.mrb[0].mxu0
    %v3806 = vpop.f32.mrb[0].mxu0
    %v3807 = vadd.f32 %v3759, %v3806
    %v3808 = vpop.f32.mrb[0].mxu0
    %3809 = vmatprep.mubr.bf16.mxu0 %v3076
    %3810 = vmatmul.mubr.bf16.gmra.mrb[0].mxu0 %v3071
    %v3811 = vpop.f32.mrb[0].mxu0
    %v3812 = vadd.f32 %v3764, %v3811
    %v3813 = vpop.f32.mrb[0].mxu0
    %v3814 = vpop.f32.mrb[0].mxu0
    %v3815 = vpop.f32.mrb[0].mxu0
    %3816 = vdwg.mxu0
    %3817 = vmatprep.subr.bf16.mxu0 0
    %3818 = vmatpush1.bf16.msra.mxu0 %v3625
    %3819 = vmatprep.subr.bf16.mxu0 0
    %3820 = vmatpush1.bf16.msra.mxu0 %v3626
    %3821 = vmatprep.subr.bf16.mxu0 0
    %3822 = vmatpush1.bf16.msra.mxu0 %v3627
    %3823 = vmatprep.subr.bf16.mxu0 0
    %3824 = vmatpush1.bf16.msra.mxu0 %v3628
    %3825 = vmatprep.subr.bf16.mxu0 0
    %3826 = vmatpush1.bf16.msra.mxu0 %v3629
    %3827 = vmatprep.subr.bf16.mxu0 0
    %3828 = vmatpush1.bf16.msra.mxu0 %v3630
    %3829 = vmatprep.subr.bf16.mxu0 0
    %3830 = vmatpush1.bf16.msra.mxu0 %v3631
    %3831 = vmatprep.subr.bf16.mxu0 0
    %3832 = vmatpush1.bf16.msra.mxu0 %v3632
    %3833 = vmatprep.subr.bf16.mxu0 0
    %3834 = vmatpush1.bf16.msra.mxu0 %v3633
    %3835 = vmatprep.subr.bf16.mxu0 0
    %3836 = vmatpush1.bf16.msra.mxu0 %v3634
    %3837 = vmatprep.subr.bf16.mxu0 0
    %3838 = vmatpush1.bf16.msra.mxu0 %v3635
    %3839 = vmatprep.subr.bf16.mxu0 0
    %3840 = vmatpush1.bf16.msra.mxu0 %v3636
    %3841 = vmatprep.subr.bf16.mxu0 0
    %3842 = vmatpush1.bf16.msra.mxu0 %v3637
    %3843 = vmatprep.subr.bf16.mxu0 0
    %3844 = vmatpush1.bf16.msra.mxu0 %v3638
    %3845 = vmatprep.subr.bf16.mxu0 0
    %3846 = vmatpush1.bf16.msra.mxu0 %v3639
    %3847 = vmatprep.subr.bf16.mxu0 0
    %3848 = vmatpush1.bf16.msra.mxu0 %v3640
    %3849 = vmatprep.mubr.bf16.mxu0 %v3085
    %3850 = vmatmul.mubr.bf16.gmra.mrb[0].mxu0 %v3080
    %v3851 = vpop.f32.mrb[0].mxu0
    %v3852 = vadd.f32 %v3804, %v3851
    %v3853 = vpop.f32.mrb[0].mxu0
    %v3854 = vpop.f32.mrb[0].mxu0
    %v3855 = vadd.f32 %v3807, %v3854
    %v3856 = vpop.f32.mrb[0].mxu0
    %3857 = vmatprep.mubr.bf16.mxu0 %v3086
    %3858 = vmatmul.mubr.bf16.gmra.mrb[0].mxu0 %v3081
    %v3859 = vpop.f32.mrb[0].mxu0
    %v3860 = vadd.f32 %v3812, %v3859
    %v3861 = vpop.f32.mrb[0].mxu0
    %v3862 = vpop.f32.mrb[0].mxu0
    %v3863 = vpop.f32.mrb[0].mxu0
    %3864 = vdwg.mxu0
    %3865 = vmatprep.subr.bf16.mxu0 0
    %3866 = vmatpush1.bf16.msra.mxu0 %v3641
    %3867 = vmatprep.subr.bf16.mxu0 0
    %3868 = vmatpush1.bf16.msra.mxu0 %v3642
    %3869 = vmatprep.subr.bf16.mxu0 0
    %3870 = vmatpush1.bf16.msra.mxu0 %v3643
    %3871 = vmatprep.subr.bf16.mxu0 0
    %3872 = vmatpush1.bf16.msra.mxu0 %v3644
    %3873 = vmatprep.subr.bf16.mxu0 0
    %3874 = vmatpush1.bf16.msra.mxu0 %v3645
    %3875 = vmatprep.subr.bf16.mxu0 0
    %3876 = vmatpush1.bf16.msra.mxu0 %v3646
    %3877 = vmatprep.subr.bf16.mxu0 0
    %3878 = vmatpush1.bf16.msra.mxu0 %v3647
    %3879 = vmatprep.subr.bf16.mxu0 0
    %3880 = vmatpush1.bf16.msra.mxu0 %v3648
    %3881 = vmatprep.subr.bf16.mxu0 0
    %3882 = vmatpush1.bf16.msra.mxu0 %v3649
    %3883 = vmatprep.subr.bf16.mxu0 0
    %3884 = vmatpush1.bf16.msra.mxu0 %v3650
    %3885 = vmatprep.subr.bf16.mxu0 0
    %3886 = vmatpush1.bf16.msra.mxu0 %v3651
    %3887 = vmatprep.subr.bf16.mxu0 0
    %3888 = vmatpush1.bf16.msra.mxu0 %v3652
    %3889 = vmatprep.subr.bf16.mxu0 0
    %3890 = vmatpush1.bf16.msra.mxu0 %v3653
    %3891 = vmatprep.subr.bf16.mxu0 0
    %3892 = vmatpush1.bf16.msra.mxu0 %v3654
    %3893 = vmatprep.subr.bf16.mxu0 0
    %3894 = vmatpush1.bf16.msra.mxu0 %v3655
    %3895 = vmatprep.subr.bf16.mxu0 0
    %3896 = vmatpush1.bf16.msra.mxu0 %v3656
    %3897 = vmatprep.mubr.bf16.mxu0 %v3095
    %3898 = vmatmul.mubr.bf16.gmra.mrb[0].mxu0 %v3090
    %v3899 = vpop.f32.mrb[0].mxu0
    %v3900 = vadd.f32 %v3852, %v3899
    %v3901 = vpop.f32.mrb[0].mxu0
    %v3902 = vpop.f32.mrb[0].mxu0
    %v3903 = vadd.f32 %v3855, %v3902
    %v3904 = vpop.f32.mrb[0].mxu0
    %3905 = vmatprep.mubr.bf16.mxu0 %v3096
    %3906 = vmatmul.mubr.bf16.gmra.mrb[0].mxu0 %v3091
    %v3907 = vpop.f32.mrb[0].mxu0
    %v3908 = vadd.f32 %v3860, %v3907
    %v3909 = vpop.f32.mrb[0].mxu0
    %v3910 = vpop.f32.mrb[0].mxu0
    %v3911 = vpop.f32.mrb[0].mxu0
    %3912 = vdwg.mxu0
    %v3913 = vpack.c.bf16 %v3903, %v3900
    %v3914 = vpack.c.bf16 %v3908, %v3908
    %v3916 = vsel %vm738, %v3914, 0
    %3918 = vmatprep.subr.bf16.mxu0 0
    %3919 = vmatpush1.bf16.msra.mxu0 %v3913
    %3920 = vmatprep.subr.bf16.mxu0 0
    %3921 = vmatpush1.bf16.msra.mxu0 %v3916
    %3922 = vmatprep.subr.bf16.mxu0 0
    %3923 = vmatpush1.bf16.msra.mxu0 0
    %3924 = vmatprep.subr.bf16.mxu0 0
    %3925 = vmatpush1.bf16.msra.mxu0 0
    %3926 = vmatprep.subr.bf16.mxu0 0
    %3927 = vmatpush1.bf16.msra.mxu0 0
    %3928 = vmatprep.subr.bf16.mxu0 0
    %3929 = vmatpush1.bf16.msra.mxu0 0
    %3930 = vmatprep.subr.bf16.mxu0 0
    %3931 = vmatpush1.bf16.msra.mxu0 0
    %3932 = vmatprep.subr.bf16.mxu0 0
    %3933 = vmatpush1.bf16.msra.mxu0 0
    %3934 = vmatprep.subr.bf16.mxu0 0
    %3935 = vmatpush1.bf16.msra.mxu0 0
    %3936 = vmatprep.subr.bf16.mxu0 0
    %3937 = vmatpush1.bf16.msra.mxu0 0
    %3938 = vmatprep.subr.bf16.mxu0 0
    %3939 = vmatpush1.bf16.msra.mxu0 0
    %3940 = vmatprep.subr.bf16.mxu0 0
    %3941 = vmatpush1.bf16.msra.mxu0 0
    %3942 = vmatprep.subr.bf16.mxu0 0
    %3943 = vmatpush1.bf16.msra.mxu0 0
    %3944 = vmatprep.subr.bf16.mxu0 0
    %3945 = vmatpush1.bf16.msra.mxu0 0
    %3946 = vmatprep.subr.bf16.mxu0 0
    %3947 = vmatpush1.bf16.msra.mxu0 0
    %3948 = vmatprep.subr.bf16.mxu0 0
    %3949 = vmatpush1.bf16.msra.mxu0 0
    %3950 = vmatprep.mubr.bf16.mxu0 0
    %3951 = vmatmul.mubr.bf16.gmra.mrb[0].mxu0 %v736
    %v3952 = vpop.f32.mrb[0].mxu0
    %v3953 = vadd.f32 0.0, %v3952
    %v3954 = vpop.f32.mrb[0].mxu0
    %v3955 = vpop.f32.mrb[0].mxu0
    %v3956 = vadd.f32 0.0, %v3955
    %v3957 = vpop.f32.mrb[0].mxu0
    %3958 = vdwg.mxu0
    %v3959 = vmul.f32 %v3953, %v786
    %v3960 = vmul.f32 %v3956, %v791
    %v3961 = vld [vmem:[#allocation23] sm:$0xf]
    %v3962 = vld [vmem:[#allocation23 + $0x4] sm:$0xf]
    %v3963 = vld [vmem:[#allocation23 + $0x8] sm:$0xf]
    %v3964 = vld [vmem:[#allocation23 + $0xc] sm:$0xf]
    %v3965 = vld [vmem:[#allocation23 + $0x10] sm:$0xf]
    %v3966 = vld [vmem:[#allocation23 + $0x14] sm:$0xf]
    %v3967 = vld [vmem:[#allocation23 + $0x18] sm:$0xf]
    %v3968 = vld [vmem:[#allocation23 + $0x1c] sm:$0xf]
    %v3969 = vld [vmem:[#allocation23 + $0x20] sm:$0xf]
    %v3970 = vld [vmem:[#allocation23 + $0x24] sm:$0xf]
    %v3971 = vld [vmem:[#allocation23 + $0x28] sm:$0xf]
    %v3972 = vld [vmem:[#allocation23 + $0x2c] sm:$0xf]
    %v3973 = vld [vmem:[#allocation23 + $0x30] sm:$0xf]
    %v3974 = vld [vmem:[#allocation23 + $0x34] sm:$0xf]
    %v3975 = vld [vmem:[#allocation23 + $0x38] sm:$0xf]
    %v3976 = vld [vmem:[#allocation23 + $0x3c] sm:$0xf]
    %v3993 = vunpack.c.l.b16 %v3961
    %v3994 = vunpack.c.l.b16 %v3962
    %v3995 = vunpack.c.l.b16 %v3963
    %v3996 = vunpack.c.l.b16 %v3964
    %v3997 = vunpack.c.l.b16 %v3965
    %v3998 = vunpack.c.l.b16 %v3966
    %v3999 = vunpack.c.l.b16 %v3967
    %v4000 = vunpack.c.l.b16 %v3968
    %v4001 = vunpack.c.l.b16 %v3969
    %v4002 = vunpack.c.l.b16 %v3970
    %v4003 = vunpack.c.l.b16 %v3971
    %v4004 = vunpack.c.l.b16 %v3972
    %v4005 = vunpack.c.l.b16 %v3973
    %v4006 = vunpack.c.l.b16 %v3974
    %v4007 = vunpack.c.l.b16 %v3975
    %v4008 = vunpack.c.l.b16 %v3976
    %v4009 = vpack.c.b16 %v3994, %v3993
    %v4010 = vpack.c.b16 %v3996, %v3995
    %v4011 = vpack.c.b16 %v3998, %v3997
    %v4012 = vpack.c.b16 %v4000, %v3999
    %v4013 = vpack.c.b16 %v4002, %v4001
    %v4014 = vpack.c.b16 %v4004, %v4003
    %v4015 = vpack.c.b16 %v4006, %v4005
    %v4016 = vpack.c.b16 %v4008, %v4007
    %4025 = vmatprep.subr.bf16.mxu0 0
    %4026 = vmatpush1.bf16.msra.mxu0 %v4009
    %4027 = vmatprep.subr.bf16.mxu0 0
    %4028 = vmatpush1.bf16.msra.mxu0 %v4010
    %4029 = vmatprep.subr.bf16.mxu0 0
    %4030 = vmatpush1.bf16.msra.mxu0 %v4011
    %4031 = vmatprep.subr.bf16.mxu0 0
    %4032 = vmatpush1.bf16.msra.mxu0 %v4012
    %4033 = vmatprep.subr.bf16.mxu0 0
    %4034 = vmatpush1.bf16.msra.mxu0 %v4013
    %4035 = vmatprep.subr.bf16.mxu0 0
    %4036 = vmatpush1.bf16.msra.mxu0 %v4014
    %4037 = vmatprep.subr.bf16.mxu0 0
    %4038 = vmatpush1.bf16.msra.mxu0 %v4015
    %4039 = vmatprep.subr.bf16.mxu0 0
    %4040 = vmatpush1.bf16.msra.mxu0 %v4016
    %4041 = vmatprep.subr.bf16.mxu0 0
    %4042 = vmatpush1.bf16.msra.mxu0 0
    %4043 = vmatprep.subr.bf16.mxu0 0
    %4044 = vmatpush1.bf16.msra.mxu0 0
    %4045 = vmatprep.subr.bf16.mxu0 0
    %4046 = vmatpush1.bf16.msra.mxu0 0
    %4047 = vmatprep.subr.bf16.mxu0 0
    %4048 = vmatpush1.bf16.msra.mxu0 0
    %4049 = vmatprep.subr.bf16.mxu0 0
    %4050 = vmatpush1.bf16.msra.mxu0 0
    %4051 = vmatprep.subr.bf16.mxu0 0
    %4052 = vmatpush1.bf16.msra.mxu0 0
    %4053 = vmatprep.subr.bf16.mxu0 0
    %4054 = vmatpush1.bf16.msra.mxu0 0
    %4055 = vmatprep.subr.bf16.mxu0 0
    %4056 = vmatpush1.bf16.msra.mxu0 0
    %4057 = vmatprep.mubr.bf16.mxu0 0
    %4058 = vmatmul.mubr.bf16.gmra.mrb[0].mxu0 %v3006
    %v4059 = vpop.f32.mrb[0].mxu0
    %v4060 = vadd.f32 0.0, %v4059
    %v4061 = vpop.f32.mrb[0].mxu0
    %v4062 = vpop.f32.mrb[0].mxu0
    %v4063 = vadd.f32 0.0, %v4062
    %v4064 = vpop.f32.mrb[0].mxu0
    %4065 = vdwg.mxu0
    %v4066 = vadd.f32 %v3959, %v4060
    %v4067 = vadd.f32 %v3960, %v4063
    %v4068 = vld [vmem:[%s20] sm:$0x1]
    %v4070 = vlaneseq
    %v4071 = vshrl.u32 %v4070, 7
    %v4072 = vsub.s32 0, %v4071
    %v4073 = vrot.slane %v4068, %v4072
    %v4075 = vadd.f32 %v4066, %v4073
    %v4076 = vadd.f32 %v4067, %v4073
    %4077 = vst [vmem:[#allocation25] sm:$0xff] %v4075
    %4078 = vst [vmem:[#allocation25 + $0x8] sm:$0xff] %v4076
    // Predicated region
    $region142: #{tpu_custom_call.1} parent=1 // pred_check
      _
    $region143: #{tpu_custom_call.1} parent=1 // pred_check_branch
      %4080 = sbr.rel (0) target = $region145
    $region144: #{tpu_custom_call.1} parent=1 // pred_region
      %s4082 = ssub.s32 256, 256
      %4083 = vsyncadd [#allocation4], %s4082
      %s4084 = sshll.u32 [#allocation25], 4
      %s4085 = int_to_ptr.vmem [resolvable:$true] %s4084
      %4090 = dma.vmem_to_hbm [thread:$0]  %s4085, 256, %s21, [#allocation4], 128, 128, 8
    $region145: #{tpu_custom_call.1} parent=1 // pred_fallthru
      _
    // Predicated region
    $region146: #{tpu_custom_call.1} parent=1 // pred_check
      _
    $region147: #{tpu_custom_call.1} parent=1 // pred_check_branch
      %4092 = sbr.rel (0) target = $region149
    $region148: #{tpu_custom_call.1} parent=1 // pred_region
      %4093 = dma.done [#allocation4], 256
    $region149: #{tpu_custom_call.1} parent=1 // pred_fallthru
      _
    %4094 = vsyncpa [#allocation3], 1
    %4095 = vsyncpa [#allocation6], 1
    %4096 = vsyncpa [#allocation9], 1
    %4097 = vsyncpa [#allocation12], 1
    %4098 = vsyncpa [#allocation15], 1
    %4099 = vsyncpa [#allocation18], 1
    %4100 = vsyncpa [#allocation21], 1
    %4101 = vsyncpa [#allocation24], 1
    %4102 = vsyncpa [#allocation4], 1

</llo_original>
